<compile_context>
chip_gen: v6e
topology: v6e:2x2x1
jax: 0.10.0
libtpu: 0.0.40
codegen_flags: <defaults>
</compile_context>

<pallas_src>
import functools

import numpy as np
import jax
import jax.numpy as jnp
from jax import lax
from jax.experimental import pallas as pl
from jax.experimental.pallas import tpu as pltpu


# ----------------------------------------------------------------------------
# Host-side glue: 1-D bicubic interpolation matrix (PyTorch semantics).
# Cached so repeated calls at the same size do not rebuild / re-upload it.
# ----------------------------------------------------------------------------
# TODO(synk): for very large inputs (H or W >= ~512) switch from the dense
# (out, in) matrix to the 4-tap banded form (gather 4 rows/cols + weighted add)
# to avoid O(out*in) MACs that are >99% zeros; the dense-matmul paths below are
# the right choice for the small/medium planes this module is used on.
@functools.lru_cache(maxsize=None)
def _interp_matrix(in_size: int, out_size: int) -> np.ndarray:
    """Dense (out_size, in_size) matrix for PyTorch bicubic interpolation with
    align_corners=True and cubic coefficient A = -0.75."""
    A = -0.75

    def cc1(t):  # |t| <= 1 branch
        return ((A + 2.0) * t - (A + 3.0)) * t * t + 1.0

    def cc2(t):  # 1 < |t| < 2 branch
        return ((A * t - 5.0 * A) * t + 8.0 * A) * t - 4.0 * A

    M = np.zeros((out_size, in_size), dtype=np.float32)
    for i in range(out_size):
        s = i * (in_size - 1) / (out_size - 1) if out_size > 1 else 0.0
        x0 = int(np.floor(s))
        t = s - x0
        w = (cc2(t + 1.0), cc1(t), cc1(1.0 - t), cc2(2.0 - t))
        for k in range(4):
            idx = min(max(x0 - 1 + k, 0), in_size - 1)  # clamp at borders
            M[i, idx] += w[k]
    return M


@functools.lru_cache(maxsize=None)
def _kron_matrix(h: int, w: int, h_out: int, w_out: int) -> np.ndarray:
    """Combined operator K = (A_h (x) A_w)^T, shape (h*w, h_out*w_out), so that
    for a row-major flattened plane x:  y_flat = x_flat @ K."""
    ah = _interp_matrix(h, h_out)
    aw = _interp_matrix(w, w_out)
    return np.ascontiguousarray(np.kron(ah, aw).T.astype(np.float32))


# Use the fused single-matmul path only while the combined operator stays small
# (it must live comfortably in VMEM next to the data blocks).
_FUSED_MAX_OPERATOR_BYTES = 2 << 20  # 2 MiB of f32 operator


# ----------------------------------------------------------------------------
# Batch-tile selection (conservative VMEM budget sized for v7x's 64 MiB/TC).
# ----------------------------------------------------------------------------
def _pick_batch_tile_separable(bc, h, w, h_out, w_out, itemsize,
                               vmem_budget=24 << 20, max_unroll=32):
    per_plane = (2 * itemsize * (h * w + h_out * w_out)   # double-buffered blocks
                 + 4 * (h * w_out + h_out * w_out))       # f32 temporaries
    cap = max(1, int(vmem_budget) // max(per_plane, 1))
    cap = min(cap, max_unroll, bc)
    if bc >= 2:
        cap = max(1, min(cap, bc // 2))                   # keep grid >= 2 (megacore)

    best = None
    for d in range(1, cap + 1):
        # exact divisor of bc, and (d*h) % 8 == 0 so the 2-D block shape is
        # sublane-aligned (BlockSpec last-two-dims rule).
        if bc % d == 0 and (d * h) % 8 == 0:
            best = d
    if best is None:
        best = bc  # full-array block is always legal (block == full dims)
    return best


def _pick_batch_tile_fused(bc, hw_in, hw_out, itemsize, vmem_budget=24 << 20):
    per_plane = 2 * itemsize * (hw_in + hw_out) + 4 * hw_out  # blocks + f32 acc
    cap = max(1, int(vmem_budget) // max(per_plane, 1))
    cap = min(cap, bc)
    if bc >= 16:
        cap = min(cap, bc // 2)                           # keep grid >= 2 if roomy

    best = None
    for d in range(8, cap + 1, 8):                        # 8-aligned sublane blocks
        if bc % d == 0:
            best = d
    if best is None:
        best = bc  # full-array block is always legal (block == full dims)
    return best


# ----------------------------------------------------------------------------
# Kernels.
# ----------------------------------------------------------------------------
def _make_fused_kernel(compute_dtype):
    prec = (lax.Precision.HIGHEST
            if compute_dtype == jnp.float32 else lax.Precision.DEFAULT)

    def kernel(k_ref, x_ref, o_ref):
        x = x_ref[...].astype(compute_dtype)               # (bt, h*w)
        y = jnp.dot(x, k_ref[...], preferred_element_type=jnp.float32,
                    precision=prec)                        # (bt, h_out*w_out) f32
        o_ref[...] = y.astype(o_ref.dtype)

    return kernel


def _make_separable_kernel(bt, h, w, h_out, w_out, compute_dtype):
    prec = (lax.Precision.HIGHEST
            if compute_dtype == jnp.float32 else lax.Precision.DEFAULT)

    def kernel(ah_ref, awt_ref, x_ref, o_ref):
        ah = ah_ref[...]                                   # (h_out, h)
        awt = awt_ref[...]                                 # (w, w_out)
        x2d = x_ref[...].astype(compute_dtype)             # (bt*h, w)

        # Stage 1 — width interpolation: one MXU matmul with M = bt*h.
        t = jnp.dot(x2d, awt, preferred_element_type=jnp.float32,
                    precision=prec)                        # (bt*h, w_out) f32
        t = t.astype(compute_dtype)

        # Stage 2 — height interpolation, per plane: short unrolled loop of
        # 2-D MXU dots; static sublane slices only (no in-kernel relayouts).
        for b in range(bt):
            tb = t[b * h:(b + 1) * h, :]                   # (h, w_out)
            yb = jnp.dot(ah, tb, preferred_element_type=jnp.float32,
                         precision=prec)                   # (h_out, w_out) f32
            o_ref[b * h_out:(b + 1) * h_out, :] = yb.astype(o_ref.dtype)

    return kernel


# ----------------------------------------------------------------------------
# Public wrapper.
# ----------------------------------------------------------------------------
@functools.partial(jax.jit, static_argnums=(1, 2))
def _bicubic_upsample_impl(x, scale, compute_dtype):
    n, c, h, w = x.shape
    h_out, w_out = h * scale, w * scale
    bc = n * c
    itemsize = jnp.dtype(x.dtype).itemsize

    compiler_params = pltpu.CompilerParams(
        dimension_semantics=("parallel",),
        vmem_limit_bytes=48 * 1024 * 1024,
    )

    use_fused = (h * w) * (h_out * w_out) * 4 <= _FUSED_MAX_OPERATOR_BYTES

    if use_fused:
        # -------- fused single-matmul path (lane-dense input and output) -----
        k = jnp.asarray(_kron_matrix(h, w, h_out, w_out), dtype=compute_dtype)
        bt = _pick_batch_tile_fused(bc, h * w, h_out * w_out, itemsize)
        grid = bc // bt

        x2d = x.reshape(bc, h * w)          # free row-major reshape
        out2d = pl.pallas_call(
            _make_fused_kernel(compute_dtype),
            out_shape=jax.ShapeDtypeStruct((bc, h_out * w_out), x.dtype),
            grid_spec=pltpu.PrefetchScalarGridSpec(
                num_scalar_prefetch=0,
                grid=(grid,),
                in_specs=[
                    # Combined operator: constant index_map -> DMA'd once.
                    pl.BlockSpec((h * w, h_out * w_out), lambda i: (0, 0)),
                    # bt flattened planes per grid step.
                    pl.BlockSpec((bt, h * w), lambda i: (i, 0)),
                ],
                out_specs=pl.BlockSpec((bt, h_out * w_out), lambda i: (i, 0)),
            ),
            compiler_params=compiler_params,
        )(k, x2d)
        return out2d.reshape(n, c, h_out, w_out)

    # ------------- separable two-stage path (larger planes) ------------------
    ah = jnp.asarray(_interp_matrix(h, h_out), dtype=compute_dtype)      # (h_out, h)
    awt = jnp.asarray(_interp_matrix(w, w_out).T, dtype=compute_dtype)   # (w, w_out)

    bt = _pick_batch_tile_separable(bc, h, w, h_out, w_out, itemsize)
    grid = bc // bt

    x2d = x.reshape(bc * h, w)              # free row-major reshape
    kernel = _make_separable_kernel(bt, h, w, h_out, w_out, compute_dtype)

    out2d = pl.pallas_call(
        kernel,
        out_shape=jax.ShapeDtypeStruct((bc * h_out, w_out), x.dtype),
        grid_spec=pltpu.PrefetchScalarGridSpec(
            num_scalar_prefetch=0,
            grid=(grid,),
            in_specs=[
                # Interpolation matrices: constant index_map -> DMA'd once.
                pl.BlockSpec((h_out, h), lambda i: (0, 0)),
                pl.BlockSpec((w, w_out), lambda i: (0, 0)),
                # bt planes of the input per grid step.
                pl.BlockSpec((bt * h, w), lambda i: (i, 0)),
            ],
            out_specs=pl.BlockSpec((bt * h_out, w_out), lambda i: (i, 0)),
        ),
        compiler_params=compiler_params,
    )(ah, awt, x2d)

    return out2d.reshape(n, c, h_out, w_out)


def bicubic_upsample(x: jax.Array, scale: int,
                     compute_dtype=jnp.float32) -> jax.Array:
    """x: (N, C, H, W) -> (N, C, H*scale, W*scale); bicubic, align_corners=True."""
    return _bicubic_upsample_impl(x, int(scale), compute_dtype)


# ----------------------------------------------------------------------------
# Self-test.
# ----------------------------------------------------------------------------
def _numpy_reference(x, scale):
    n, c, h, w = x.shape
    ah = _interp_matrix(h, h * scale)
    aw = _interp_matrix(w, w * scale)
    xn = np.asarray(x, dtype=np.float32).reshape(n * c, h, w)
    y = np.einsum('oh,bhw,vw->bov', ah, xn, aw)
    return y.reshape(n, c, h * scale, w * scale)


if __name__ == "__main__":
    key = jax.random.PRNGKey(0)
    scale = 2

    # 1) Small planes -> fused single-matmul (lane-dense) path.
    x1 = jax.random.normal(key, (2, 4, 16, 16), dtype=jnp.float32)
    y1 = jax.block_until_ready(bicubic_upsample(x1, scale))
    assert y1.shape == (2, 4, 32, 32), y1.shape
    assert y1.dtype == x1.dtype, y1.dtype
    np.testing.assert_allclose(np.asarray(y1), _numpy_reference(x1, scale),
                               rtol=1e-4, atol=1e-4)
    # align_corners=True: output corner pixels equal input corner pixels.
    np.testing.assert_allclose(np.asarray(y1[:, :, 0, 0]),
                               np.asarray(x1[:, :, 0, 0]), rtol=1e-5, atol=1e-5)
    np.testing.assert_allclose(np.asarray(y1[:, :, -1, -1]),
                               np.asarray(x1[:, :, -1, -1]), rtol=1e-5, atol=1e-5)

    # 2) Larger planes -> separable two-stage path.
    x2 = jax.random.normal(jax.random.PRNGKey(1), (1, 2, 40, 40),
                           dtype=jnp.float32)
    y2 = jax.block_until_ready(bicubic_upsample(x2, scale))
    assert y2.shape == (1, 2, 80, 80), y2.shape
    np.testing.assert_allclose(np.asarray(y2), _numpy_reference(x2, scale),
                               rtol=1e-4, atol=1e-4)
    np.testing.assert_allclose(np.asarray(y2[:, :, -1, -1]),
                               np.asarray(x2[:, :, -1, -1]), rtol=1e-5, atol=1e-5)

    print("KERNEL_OK")
</pallas_src>

<mosaic_0001>
module attributes {stable_mosaic.version = 11 : i64} {
  func.func @kernel(%arg0: i32, %arg1: memref<256x1024xf32, #tpu.memory_space<vmem>>, %arg2: memref<8x256xf32, #tpu.memory_space<vmem>>, %arg3: memref<8x1024xf32, #tpu.memory_space<vmem>>) attributes {dimension_semantics = [#tpu.dimension_semantics<parallel>], iteration_bounds = array<i64: 1>, scalar_prefetch = 0 : i64, scratch_operands = 0 : i64, tpu.core_type = #tpu.core_type<tc>, window_params = [{pipeline_mode = #tpu.pipeline_mode<synchronous>, transform_indices = @transform_0, window_bounds = array<i64: 256, 1024>}, {transform_indices = @transform_1, window_bounds = array<i64: 8, 256>}, {transform_indices = @transform_2, window_bounds = array<i64: 8, 1024>}]} {
    %c0 = arith.constant 0 : index
    %c0_0 = arith.constant 0 : index
    %0 = vector.load %arg2[%c0, %c0_0] : memref<8x256xf32, #tpu.memory_space<vmem>>, vector<8x256xf32>
    %c0_1 = arith.constant 0 : index
    %c0_2 = arith.constant 0 : index
    %1 = vector.load %arg1[%c0_1, %c0_2] : memref<256x1024xf32, #tpu.memory_space<vmem>>, vector<256x1024xf32>
    %cst = arith.constant dense<0.000000e+00> : vector<8x1024xf32>
    %2 = tpu.matmul %0, %1, %cst {dimension_numbers = #tpu.dot_dimension_numbers<[1], [0], [0], [1], [0, 0, 1, 1], [], []>, precision = #tpu.contract_precision<fp32>} : vector<8x256xf32>, vector<256x1024xf32>, vector<8x1024xf32> -> vector<8x1024xf32>
    %c0_3 = arith.constant 0 : index
    %c0_4 = arith.constant 0 : index
    %3 = vector.load %arg3[%c0_3, %c0_4] : memref<8x1024xf32, #tpu.memory_space<vmem>>, vector<8x1024xf32>
    tpu.vector_store %arg3[%c0_3, %c0_4], %2 {strides = array<i32>} : memref<8x1024xf32, #tpu.memory_space<vmem>>, vector<8x1024xf32>,
    return
  }
  func.func @transform_0(%arg0: i32) -> (i32, i32) {
    %c0_i32 = arith.constant 0 : i32
    %c0_i32_0 = arith.constant 0 : i32
    %c0_i32_1 = arith.constant 0 : i32
    return %c0_i32, %c0_i32_0 : i32, i32
  }
  func.func @transform_1(%arg0: i32) -> (i32, i32) {
    %c0_i32 = arith.constant 0 : i32
    %c0_i32_0 = arith.constant 0 : i32
    return %arg0, %c0_i32 : i32, i32
  }
  func.func @transform_2(%arg0: i32) -> (i32, i32) {
    %c0_i32 = arith.constant 0 : i32
    %c0_i32_0 = arith.constant 0 : i32
    return %arg0, %c0_i32 : i32, i32
  }
}

</mosaic_0001>

<llo_original>
// kernel: _bicubic_upsample_impl.1
$region0: #{_bicubic_upsample_impl.1}
  #allocation0 [shape = 'u32[]', space=smem, size = 0x4, offset = 0x4, fixed_abs, tag = 'smem constant byte address 0x4 - core index']
  #allocation1 [shape = 'u32[144,128]{1,0:T(1,128)}', space=vmem, size = 0x12000, scoped, tag = 'internal scratch']
  %s0 = inlined_call_operand.hbm [shape: f32[256,1024], index: 0, kind: input, shape index: {}]
  %s1 = inlined_call_operand.vmem [shape: f32[8,256], index: 1, kind: input, shape index: {}]
  %s2 = inlined_call_operand.vmem [shape: f32[8,1024], index: 2, kind: output, shape index: {}]
  %s3 = sld [smem:[#allocation0]]
  $region22: #{_bicubic_upsample_impl.1} parent=0
    _
  %s5 = ssub.s32 1, %s3
  %s6 = scalar_select 0, %s5, %s3
  $region1: #{_bicubic_upsample_impl.1} parent=0
    #allocation2 [shape = 'u8[1048576]{0}', space=vmem, size = 0x100000, scoped, tag = 'input window, operand 0, single buffered']
    #allocation3 [shape = 's32[1]{0}', space=sflag, size = 0x4, scoped, tag = 'scoped memory for _bicubic_upsample_impl.1']
    %7 = vsyncpa [#allocation3], 0
    // Predicated region
    $region2: #{_bicubic_upsample_impl.1} parent=1 // pred_check
      _
    $region3: #{_bicubic_upsample_impl.1} parent=1 // pred_check_branch
      %9 = sbr.rel (0) target = $region5
    $region4: #{_bicubic_upsample_impl.1} parent=1 // pred_region
      %s11 = ssub.s32 32768, 32768
      %12 = vsyncadd [#allocation3], %s11
      %s13 = sshll.u32 [#allocation2], 4
      %s14 = int_to_ptr.vmem [resolvable:$true] %s13
      %19 = dma.hbm_to_vmem [thread:$0]  %s0, 32768, %s14, [#allocation3], 1024, 1024, 64
    $region5: #{_bicubic_upsample_impl.1} parent=1 // pred_fallthru
      _
    // Predicated region
    $region6: #{_bicubic_upsample_impl.1} parent=1 // pred_check
      _
    $region7: #{_bicubic_upsample_impl.1} parent=1 // pred_check_branch
      %21 = sbr.rel (0) target = $region9
    $region8: #{_bicubic_upsample_impl.1} parent=1 // pred_region
      _
    $region9: #{_bicubic_upsample_impl.1} parent=1 // pred_fallthru
      _
    // Predicated region
    $region10: #{_bicubic_upsample_impl.1} parent=1 // pred_check
      _
    $region11: #{_bicubic_upsample_impl.1} parent=1 // pred_check_branch
      %23 = sbr.rel (0) target = $region13
    $region12: #{_bicubic_upsample_impl.1} parent=1 // pred_region
      %24 = dma.done [#allocation3], 32768
    $region13: #{_bicubic_upsample_impl.1} parent=1 // pred_fallthru
      _
    %v25 = vld [vmem:[%s1] sm:$0xff]
    %v26 = vld [vmem:[%s1 + $0x8] sm:$0xff]
    %v27 = vld [vmem:[#allocation2] sm:$0xff]
    %v28 = vld [vmem:[#allocation2 + $0x8] sm:$0xff]
    %v29 = vld [vmem:[#allocation2 + $0x10] sm:$0xff]
    %v30 = vld [vmem:[#allocation2 + $0x18] sm:$0xff]
    %v31 = vld [vmem:[#allocation2 + $0x20] sm:$0xff]
    %v32 = vld [vmem:[#allocation2 + $0x28] sm:$0xff]
    %v33 = vld [vmem:[#allocation2 + $0x30] sm:$0xff]
    %v34 = vld [vmem:[#allocation2 + $0x38] sm:$0xff]
    %v35 = vld [vmem:[#allocation2 + $0x40] sm:$0xff]
    %v36 = vld [vmem:[#allocation2 + $0x48] sm:$0xff]
    %v37 = vld [vmem:[#allocation2 + $0x50] sm:$0xff]
    %v38 = vld [vmem:[#allocation2 + $0x58] sm:$0xff]
    %v39 = vld [vmem:[#allocation2 + $0x60] sm:$0xff]
    %v40 = vld [vmem:[#allocation2 + $0x68] sm:$0xff]
    %v41 = vld [vmem:[#allocation2 + $0x70] sm:$0xff]
    %v42 = vld [vmem:[#allocation2 + $0x78] sm:$0xff]
    %v43 = vld [vmem:[#allocation2 + $0x80] sm:$0xff]
    %v44 = vld [vmem:[#allocation2 + $0x88] sm:$0xff]
    %v45 = vld [vmem:[#allocation2 + $0x90] sm:$0xff]
    %v46 = vld [vmem:[#allocation2 + $0x98] sm:$0xff]
    %v47 = vld [vmem:[#allocation2 + $0xa0] sm:$0xff]
    %v48 = vld [vmem:[#allocation2 + $0xa8] sm:$0xff]
    %v49 = vld [vmem:[#allocation2 + $0xb0] sm:$0xff]
    %v50 = vld [vmem:[#allocation2 + $0xb8] sm:$0xff]
    %v51 = vld [vmem:[#allocation2 + $0xc0] sm:$0xff]
    %v52 = vld [vmem:[#allocation2 + $0xc8] sm:$0xff]
    %v53 = vld [vmem:[#allocation2 + $0xd0] sm:$0xff]
    %v54 = vld [vmem:[#allocation2 + $0xd8] sm:$0xff]
    %v55 = vld [vmem:[#allocation2 + $0xe0] sm:$0xff]
    %v56 = vld [vmem:[#allocation2 + $0xe8] sm:$0xff]
    %v57 = vld [vmem:[#allocation2 + $0xf0] sm:$0xff]
    %v58 = vld [vmem:[#allocation2 + $0xf8] sm:$0xff]
    %v59 = vld [vmem:[#allocation2 + $0x100] sm:$0xff]
    %v60 = vld [vmem:[#allocation2 + $0x108] sm:$0xff]
    %v61 = vld [vmem:[#allocation2 + $0x110] sm:$0xff]
    %v62 = vld [vmem:[#allocation2 + $0x118] sm:$0xff]
    %v63 = vld [vmem:[#allocation2 + $0x120] sm:$0xff]
    %v64 = vld [vmem:[#allocation2 + $0x128] sm:$0xff]
    %v65 = vld [vmem:[#allocation2 + $0x130] sm:$0xff]
    %v66 = vld [vmem:[#allocation2 + $0x138] sm:$0xff]
    %v67 = vld [vmem:[#allocation2 + $0x140] sm:$0xff]
    %v68 = vld [vmem:[#allocation2 + $0x148] sm:$0xff]
    %v69 = vld [vmem:[#allocation2 + $0x150] sm:$0xff]
    %v70 = vld [vmem:[#allocation2 + $0x158] sm:$0xff]
    %v71 = vld [vmem:[#allocation2 + $0x160] sm:$0xff]
    %v72 = vld [vmem:[#allocation2 + $0x168] sm:$0xff]
    %v73 = vld [vmem:[#allocation2 + $0x170] sm:$0xff]
    %v74 = vld [vmem:[#allocation2 + $0x178] sm:$0xff]
    %v75 = vld [vmem:[#allocation2 + $0x180] sm:$0xff]
    %v76 = vld [vmem:[#allocation2 + $0x188] sm:$0xff]
    %v77 = vld [vmem:[#allocation2 + $0x190] sm:$0xff]
    %v78 = vld [vmem:[#allocation2 + $0x198] sm:$0xff]
    %v79 = vld [vmem:[#allocation2 + $0x1a0] sm:$0xff]
    %v80 = vld [vmem:[#allocation2 + $0x1a8] sm:$0xff]
    %v81 = vld [vmem:[#allocation2 + $0x1b0] sm:$0xff]
    %v82 = vld [vmem:[#allocation2 + $0x1b8] sm:$0xff]
    %v83 = vld [vmem:[#allocation2 + $0x1c0] sm:$0xff]
    %v84 = vld [vmem:[#allocation2 + $0x1c8] sm:$0xff]
    %v85 = vld [vmem:[#allocation2 + $0x1d0] sm:$0xff]
    %v86 = vld [vmem:[#allocation2 + $0x1d8] sm:$0xff]
    %v87 = vld [vmem:[#allocation2 + $0x1e0] sm:$0xff]
    %v88 = vld [vmem:[#allocation2 + $0x1e8] sm:$0xff]
    %v89 = vld [vmem:[#allocation2 + $0x1f0] sm:$0xff]
    %v90 = vld [vmem:[#allocation2 + $0x1f8] sm:$0xff]
    %v91 = vld [vmem:[#allocation2 + $0x200] sm:$0xff]
    %v92 = vld [vmem:[#allocation2 + $0x208] sm:$0xff]
    %v93 = vld [vmem:[#allocation2 + $0x210] sm:$0xff]
    %v94 = vld [vmem:[#allocation2 + $0x218] sm:$0xff]
    %v95 = vld [vmem:[#allocation2 + $0x220] sm:$0xff]
    %v96 = vld [vmem:[#allocation2 + $0x228] sm:$0xff]
    %v97 = vld [vmem:[#allocation2 + $0x230] sm:$0xff]
    %v98 = vld [vmem:[#allocation2 + $0x238] sm:$0xff]
    %v99 = vld [vmem:[#allocation2 + $0x240] sm:$0xff]
    %v100 = vld [vmem:[#allocation2 + $0x248] sm:$0xff]
    %v101 = vld [vmem:[#allocation2 + $0x250] sm:$0xff]
    %v102 = vld [vmem:[#allocation2 + $0x258] sm:$0xff]
    %v103 = vld [vmem:[#allocation2 + $0x260] sm:$0xff]
    %v104 = vld [vmem:[#allocation2 + $0x268] sm:$0xff]
    %v105 = vld [vmem:[#allocation2 + $0x270] sm:$0xff]
    %v106 = vld [vmem:[#allocation2 + $0x278] sm:$0xff]
    %v107 = vld [vmem:[#allocation2 + $0x280] sm:$0xff]
    %v108 = vld [vmem:[#allocation2 + $0x288] sm:$0xff]
    %v109 = vld [vmem:[#allocation2 + $0x290] sm:$0xff]
    %v110 = vld [vmem:[#allocation2 + $0x298] sm:$0xff]
    %v111 = vld [vmem:[#allocation2 + $0x2a0] sm:$0xff]
    %v112 = vld [vmem:[#allocation2 + $0x2a8] sm:$0xff]
    %v113 = vld [vmem:[#allocation2 + $0x2b0] sm:$0xff]
    %v114 = vld [vmem:[#allocation2 + $0x2b8] sm:$0xff]
    %v115 = vld [vmem:[#allocation2 + $0x2c0] sm:$0xff]
    %v116 = vld [vmem:[#allocation2 + $0x2c8] sm:$0xff]
    %v117 = vld [vmem:[#allocation2 + $0x2d0] sm:$0xff]
    %v118 = vld [vmem:[#allocation2 + $0x2d8] sm:$0xff]
    %v119 = vld [vmem:[#allocation2 + $0x2e0] sm:$0xff]
    %v120 = vld [vmem:[#allocation2 + $0x2e8] sm:$0xff]
    %v121 = vld [vmem:[#allocation2 + $0x2f0] sm:$0xff]
    %v122 = vld [vmem:[#allocation2 + $0x2f8] sm:$0xff]
    %v123 = vld [vmem:[#allocation2 + $0x300] sm:$0xff]
    %v124 = vld [vmem:[#allocation2 + $0x308] sm:$0xff]
    %v125 = vld [vmem:[#allocation2 + $0x310] sm:$0xff]
    %v126 = vld [vmem:[#allocation2 + $0x318] sm:$0xff]
    %v127 = vld [vmem:[#allocation2 + $0x320] sm:$0xff]
    %v128 = vld [vmem:[#allocation2 + $0x328] sm:$0xff]
    %v129 = vld [vmem:[#allocation2 + $0x330] sm:$0xff]
    %v130 = vld [vmem:[#allocation2 + $0x338] sm:$0xff]
    %v131 = vld [vmem:[#allocation2 + $0x340] sm:$0xff]
    %v132 = vld [vmem:[#allocation2 + $0x348] sm:$0xff]
    %v133 = vld [vmem:[#allocation2 + $0x350] sm:$0xff]
    %v134 = vld [vmem:[#allocation2 + $0x358] sm:$0xff]
    %v135 = vld [vmem:[#allocation2 + $0x360] sm:$0xff]
    %v136 = vld [vmem:[#allocation2 + $0x368] sm:$0xff]
    %v137 = vld [vmem:[#allocation2 + $0x370] sm:$0xff]
    %v138 = vld [vmem:[#allocation2 + $0x378] sm:$0xff]
    %v139 = vld [vmem:[#allocation2 + $0x380] sm:$0xff]
    %v140 = vld [vmem:[#allocation2 + $0x388] sm:$0xff]
    %v141 = vld [vmem:[#allocation2 + $0x390] sm:$0xff]
    %v142 = vld [vmem:[#allocation2 + $0x398] sm:$0xff]
    %v143 = vld [vmem:[#allocation2 + $0x3a0] sm:$0xff]
    %v144 = vld [vmem:[#allocation2 + $0x3a8] sm:$0xff]
    %v145 = vld [vmem:[#allocation2 + $0x3b0] sm:$0xff]
    %v146 = vld [vmem:[#allocation2 + $0x3b8] sm:$0xff]
    %v147 = vld [vmem:[#allocation2 + $0x3c0] sm:$0xff]
    %v148 = vld [vmem:[#allocation2 + $0x3c8] sm:$0xff]
    %v149 = vld [vmem:[#allocation2 + $0x3d0] sm:$0xff]
    %v150 = vld [vmem:[#allocation2 + $0x3d8] sm:$0xff]
    %v151 = vld [vmem:[#allocation2 + $0x3e0] sm:$0xff]
    %v152 = vld [vmem:[#allocation2 + $0x3e8] sm:$0xff]
    %v153 = vld [vmem:[#allocation2 + $0x3f0] sm:$0xff]
    %v154 = vld [vmem:[#allocation2 + $0x3f8] sm:$0xff]
    %v155 = vld [vmem:[#allocation2 + $0x400] sm:$0xff]
    %v156 = vld [vmem:[#allocation2 + $0x408] sm:$0xff]
    %v157 = vld [vmem:[#allocation2 + $0x410] sm:$0xff]
    %v158 = vld [vmem:[#allocation2 + $0x418] sm:$0xff]
    %v159 = vld [vmem:[#allocation2 + $0x420] sm:$0xff]
    %v160 = vld [vmem:[#allocation2 + $0x428] sm:$0xff]
    %v161 = vld [vmem:[#allocation2 + $0x430] sm:$0xff]
    %v162 = vld [vmem:[#allocation2 + $0x438] sm:$0xff]
    %v163 = vld [vmem:[#allocation2 + $0x440] sm:$0xff]
    %v164 = vld [vmem:[#allocation2 + $0x448] sm:$0xff]
    %v165 = vld [vmem:[#allocation2 + $0x450] sm:$0xff]
    %v166 = vld [vmem:[#allocation2 + $0x458] sm:$0xff]
    %v167 = vld [vmem:[#allocation2 + $0x460] sm:$0xff]
    %v168 = vld [vmem:[#allocation2 + $0x468] sm:$0xff]
    %v169 = vld [vmem:[#allocation2 + $0x470] sm:$0xff]
    %v170 = vld [vmem:[#allocation2 + $0x478] sm:$0xff]
    %v171 = vld [vmem:[#allocation2 + $0x480] sm:$0xff]
    %v172 = vld [vmem:[#allocation2 + $0x488] sm:$0xff]
    %v173 = vld [vmem:[#allocation2 + $0x490] sm:$0xff]
    %v174 = vld [vmem:[#allocation2 + $0x498] sm:$0xff]
    %v175 = vld [vmem:[#allocation2 + $0x4a0] sm:$0xff]
    %v176 = vld [vmem:[#allocation2 + $0x4a8] sm:$0xff]
    %v177 = vld [vmem:[#allocation2 + $0x4b0] sm:$0xff]
    %v178 = vld [vmem:[#allocation2 + $0x4b8] sm:$0xff]
    %v179 = vld [vmem:[#allocation2 + $0x4c0] sm:$0xff]
    %v180 = vld [vmem:[#allocation2 + $0x4c8] sm:$0xff]
    %v181 = vld [vmem:[#allocation2 + $0x4d0] sm:$0xff]
    %v182 = vld [vmem:[#allocation2 + $0x4d8] sm:$0xff]
    %v183 = vld [vmem:[#allocation2 + $0x4e0] sm:$0xff]
    %v184 = vld [vmem:[#allocation2 + $0x4e8] sm:$0xff]
    %v185 = vld [vmem:[#allocation2 + $0x4f0] sm:$0xff]
    %v186 = vld [vmem:[#allocation2 + $0x4f8] sm:$0xff]
    %v187 = vld [vmem:[#allocation2 + $0x500] sm:$0xff]
    %v188 = vld [vmem:[#allocation2 + $0x508] sm:$0xff]
    %v189 = vld [vmem:[#allocation2 + $0x510] sm:$0xff]
    %v190 = vld [vmem:[#allocation2 + $0x518] sm:$0xff]
    %v191 = vld [vmem:[#allocation2 + $0x520] sm:$0xff]
    %v192 = vld [vmem:[#allocation2 + $0x528] sm:$0xff]
    %v193 = vld [vmem:[#allocation2 + $0x530] sm:$0xff]
    %v194 = vld [vmem:[#allocation2 + $0x538] sm:$0xff]
    %v195 = vld [vmem:[#allocation2 + $0x540] sm:$0xff]
    %v196 = vld [vmem:[#allocation2 + $0x548] sm:$0xff]
    %v197 = vld [vmem:[#allocation2 + $0x550] sm:$0xff]
    %v198 = vld [vmem:[#allocation2 + $0x558] sm:$0xff]
    %v199 = vld [vmem:[#allocation2 + $0x560] sm:$0xff]
    %v200 = vld [vmem:[#allocation2 + $0x568] sm:$0xff]
    %v201 = vld [vmem:[#allocation2 + $0x570] sm:$0xff]
    %v202 = vld [vmem:[#allocation2 + $0x578] sm:$0xff]
    %v203 = vld [vmem:[#allocation2 + $0x580] sm:$0xff]
    %v204 = vld [vmem:[#allocation2 + $0x588] sm:$0xff]
    %v205 = vld [vmem:[#allocation2 + $0x590] sm:$0xff]
    %v206 = vld [vmem:[#allocation2 + $0x598] sm:$0xff]
    %v207 = vld [vmem:[#allocation2 + $0x5a0] sm:$0xff]
    %v208 = vld [vmem:[#allocation2 + $0x5a8] sm:$0xff]
    %v209 = vld [vmem:[#allocation2 + $0x5b0] sm:$0xff]
    %v210 = vld [vmem:[#allocation2 + $0x5b8] sm:$0xff]
    %v211 = vld [vmem:[#allocation2 + $0x5c0] sm:$0xff]
    %v212 = vld [vmem:[#allocation2 + $0x5c8] sm:$0xff]
    %v213 = vld [vmem:[#allocation2 + $0x5d0] sm:$0xff]
    %v214 = vld [vmem:[#allocation2 + $0x5d8] sm:$0xff]
    %v215 = vld [vmem:[#allocation2 + $0x5e0] sm:$0xff]
    %v216 = vld [vmem:[#allocation2 + $0x5e8] sm:$0xff]
    %v217 = vld [vmem:[#allocation2 + $0x5f0] sm:$0xff]
    %v218 = vld [vmem:[#allocation2 + $0x5f8] sm:$0xff]
    %v219 = vld [vmem:[#allocation2 + $0x600] sm:$0xff]
    %v220 = vld [vmem:[#allocation2 + $0x608] sm:$0xff]
    %v221 = vld [vmem:[#allocation2 + $0x610] sm:$0xff]
    %v222 = vld [vmem:[#allocation2 + $0x618] sm:$0xff]
    %v223 = vld [vmem:[#allocation2 + $0x620] sm:$0xff]
    %v224 = vld [vmem:[#allocation2 + $0x628] sm:$0xff]
    %v225 = vld [vmem:[#allocation2 + $0x630] sm:$0xff]
    %v226 = vld [vmem:[#allocation2 + $0x638] sm:$0xff]
    %v227 = vld [vmem:[#allocation2 + $0x640] sm:$0xff]
    %v228 = vld [vmem:[#allocation2 + $0x648] sm:$0xff]
    %v229 = vld [vmem:[#allocation2 + $0x650] sm:$0xff]
    %v230 = vld [vmem:[#allocation2 + $0x658] sm:$0xff]
    %v231 = vld [vmem:[#allocation2 + $0x660] sm:$0xff]
    %v232 = vld [vmem:[#allocation2 + $0x668] sm:$0xff]
    %v233 = vld [vmem:[#allocation2 + $0x670] sm:$0xff]
    %v234 = vld [vmem:[#allocation2 + $0x678] sm:$0xff]
    %v235 = vld [vmem:[#allocation2 + $0x680] sm:$0xff]
    %v236 = vld [vmem:[#allocation2 + $0x688] sm:$0xff]
    %v237 = vld [vmem:[#allocation2 + $0x690] sm:$0xff]
    %v238 = vld [vmem:[#allocation2 + $0x698] sm:$0xff]
    %v239 = vld [vmem:[#allocation2 + $0x6a0] sm:$0xff]
    %v240 = vld [vmem:[#allocation2 + $0x6a8] sm:$0xff]
    %v241 = vld [vmem:[#allocation2 + $0x6b0] sm:$0xff]
    %v242 = vld [vmem:[#allocation2 + $0x6b8] sm:$0xff]
    %v243 = vld [vmem:[#allocation2 + $0x6c0] sm:$0xff]
    %v244 = vld [vmem:[#allocation2 + $0x6c8] sm:$0xff]
    %v245 = vld [vmem:[#allocation2 + $0x6d0] sm:$0xff]
    %v246 = vld [vmem:[#allocation2 + $0x6d8] sm:$0xff]
    %v247 = vld [vmem:[#allocation2 + $0x6e0] sm:$0xff]
    %v248 = vld [vmem:[#allocation2 + $0x6e8] sm:$0xff]
    %v249 = vld [vmem:[#allocation2 + $0x6f0] sm:$0xff]
    %v250 = vld [vmem:[#allocation2 + $0x6f8] sm:$0xff]
    %v251 = vld [vmem:[#allocation2 + $0x700] sm:$0xff]
    %v252 = vld [vmem:[#allocation2 + $0x708] sm:$0xff]
    %v253 = vld [vmem:[#allocation2 + $0x710] sm:$0xff]
    %v254 = vld [vmem:[#allocation2 + $0x718] sm:$0xff]
    %v255 = vld [vmem:[#allocation2 + $0x720] sm:$0xff]
    %v256 = vld [vmem:[#allocation2 + $0x728] sm:$0xff]
    %v257 = vld [vmem:[#allocation2 + $0x730] sm:$0xff]
    %v258 = vld [vmem:[#allocation2 + $0x738] sm:$0xff]
    %v259 = vld [vmem:[#allocation2 + $0x740] sm:$0xff]
    %v260 = vld [vmem:[#allocation2 + $0x748] sm:$0xff]
    %v261 = vld [vmem:[#allocation2 + $0x750] sm:$0xff]
    %v262 = vld [vmem:[#allocation2 + $0x758] sm:$0xff]
    %v263 = vld [vmem:[#allocation2 + $0x760] sm:$0xff]
    %v264 = vld [vmem:[#allocation2 + $0x768] sm:$0xff]
    %v265 = vld [vmem:[#allocation2 + $0x770] sm:$0xff]
    %v266 = vld [vmem:[#allocation2 + $0x778] sm:$0xff]
    %v267 = vld [vmem:[#allocation2 + $0x780] sm:$0xff]
    %v268 = vld [vmem:[#allocation2 + $0x788] sm:$0xff]
    %v269 = vld [vmem:[#allocation2 + $0x790] sm:$0xff]
    %v270 = vld [vmem:[#allocation2 + $0x798] sm:$0xff]
    %v271 = vld [vmem:[#allocation2 + $0x7a0] sm:$0xff]
    %v272 = vld [vmem:[#allocation2 + $0x7a8] sm:$0xff]
    %v273 = vld [vmem:[#allocation2 + $0x7b0] sm:$0xff]
    %v274 = vld [vmem:[#allocation2 + $0x7b8] sm:$0xff]
    %v275 = vld [vmem:[#allocation2 + $0x7c0] sm:$0xff]
    %v276 = vld [vmem:[#allocation2 + $0x7c8] sm:$0xff]
    %v277 = vld [vmem:[#allocation2 + $0x7d0] sm:$0xff]
    %v278 = vld [vmem:[#allocation2 + $0x7d8] sm:$0xff]
    %v279 = vld [vmem:[#allocation2 + $0x7e0] sm:$0xff]
    %v280 = vld [vmem:[#allocation2 + $0x7e8] sm:$0xff]
    %v281 = vld [vmem:[#allocation2 + $0x7f0] sm:$0xff]
    %v282 = vld [vmem:[#allocation2 + $0x7f8] sm:$0xff]
    %v283 = vand.u32 %v148, 4294901760
    %284 = vmatprep.subr.mxu0 %v283
    %v285 = vand.u32 %v147, 4294901760
    %286 = vmatpush1.msra.mxu0 %v285
    %v287 = vand.u32 %v140, 4294901760
    %288 = vmatprep.subr.mxu0 %v287
    %v289 = vand.u32 %v139, 4294901760
    %290 = vmatpush1.msra.mxu0 %v289
    %v291 = vand.u32 %v132, 4294901760
    %292 = vmatprep.subr.mxu0 %v291
    %v293 = vand.u32 %v131, 4294901760
    %294 = vmatpush1.msra.mxu0 %v293
    %v295 = vand.u32 %v124, 4294901760
    %296 = vmatprep.subr.mxu0 %v295
    %v297 = vand.u32 %v123, 4294901760
    %298 = vmatpush1.msra.mxu0 %v297
    %v299 = vand.u32 %v116, 4294901760
    %300 = vmatprep.subr.mxu0 %v299
    %v301 = vand.u32 %v115, 4294901760
    %302 = vmatpush1.msra.mxu0 %v301
    %v303 = vand.u32 %v108, 4294901760
    %304 = vmatprep.subr.mxu0 %v303
    %v305 = vand.u32 %v107, 4294901760
    %306 = vmatpush1.msra.mxu0 %v305
    %v307 = vand.u32 %v100, 4294901760
    %308 = vmatprep.subr.mxu0 %v307
    %v309 = vand.u32 %v99, 4294901760
    %310 = vmatpush1.msra.mxu0 %v309
    %v311 = vand.u32 %v92, 4294901760
    %312 = vmatprep.subr.mxu0 %v311
    %v313 = vand.u32 %v91, 4294901760
    %314 = vmatpush1.msra.mxu0 %v313
    %v315 = vand.u32 %v84, 4294901760
    %316 = vmatprep.subr.mxu0 %v315
    %v317 = vand.u32 %v83, 4294901760
    %318 = vmatpush1.msra.mxu0 %v317
    %v319 = vand.u32 %v76, 4294901760
    %320 = vmatprep.subr.mxu0 %v319
    %v321 = vand.u32 %v75, 4294901760
    %322 = vmatpush1.msra.mxu0 %v321
    %v323 = vand.u32 %v68, 4294901760
    %324 = vmatprep.subr.mxu0 %v323
    %v325 = vand.u32 %v67, 4294901760
    %326 = vmatpush1.msra.mxu0 %v325
    %v327 = vand.u32 %v60, 4294901760
    %328 = vmatprep.subr.mxu0 %v327
    %v329 = vand.u32 %v59, 4294901760
    %330 = vmatpush1.msra.mxu0 %v329
    %v331 = vand.u32 %v52, 4294901760
    %332 = vmatprep.subr.mxu0 %v331
    %v333 = vand.u32 %v51, 4294901760
    %334 = vmatpush1.msra.mxu0 %v333
    %v335 = vand.u32 %v44, 4294901760
    %336 = vmatprep.subr.mxu0 %v335
    %v337 = vand.u32 %v43, 4294901760
    %338 = vmatpush1.msra.mxu0 %v337
    %v339 = vand.u32 %v36, 4294901760
    %340 = vmatprep.subr.mxu0 %v339
    %v341 = vand.u32 %v35, 4294901760
    %342 = vmatpush1.msra.mxu0 %v341
    %v343 = vand.u32 %v28, 4294901760
    %344 = vmatprep.subr.mxu0 %v343
    %v345 = vand.u32 %v27, 4294901760
    %346 = vmatpush1.msra.mxu0 %v345
    %v347 = vand.u32 %v276, 4294901760
    %348 = vmatprep.subr.mxu0 %v347
    %v349 = vand.u32 %v275, 4294901760
    %350 = vmatpush2.msra.mxu0 %v349
    %v351 = vand.u32 %v268, 4294901760
    %352 = vmatprep.subr.mxu0 %v351
    %v353 = vand.u32 %v267, 4294901760
    %354 = vmatpush2.msra.mxu0 %v353
    %v355 = vand.u32 %v260, 4294901760
    %356 = vmatprep.subr.mxu0 %v355
    %v357 = vand.u32 %v259, 4294901760
    %358 = vmatpush2.msra.mxu0 %v357
    %v359 = vand.u32 %v252, 4294901760
    %360 = vmatprep.subr.mxu0 %v359
    %v361 = vand.u32 %v251, 4294901760
    %362 = vmatpush2.msra.mxu0 %v361
    %v363 = vand.u32 %v244, 4294901760
    %364 = vmatprep.subr.mxu0 %v363
    %v365 = vand.u32 %v243, 4294901760
    %366 = vmatpush2.msra.mxu0 %v365
    %v367 = vand.u32 %v236, 4294901760
    %368 = vmatprep.subr.mxu0 %v367
    %v369 = vand.u32 %v235, 4294901760
    %370 = vmatpush2.msra.mxu0 %v369
    %v371 = vand.u32 %v228, 4294901760
    %372 = vmatprep.subr.mxu0 %v371
    %v373 = vand.u32 %v227, 4294901760
    %374 = vmatpush2.msra.mxu0 %v373
    %v375 = vand.u32 %v220, 4294901760
    %376 = vmatprep.subr.mxu0 %v375
    %v377 = vand.u32 %v219, 4294901760
    %378 = vmatpush2.msra.mxu0 %v377
    %v379 = vand.u32 %v212, 4294901760
    %380 = vmatprep.subr.mxu0 %v379
    %v381 = vand.u32 %v211, 4294901760
    %382 = vmatpush2.msra.mxu0 %v381
    %v383 = vand.u32 %v204, 4294901760
    %384 = vmatprep.subr.mxu0 %v383
    %v385 = vand.u32 %v203, 4294901760
    %386 = vmatpush2.msra.mxu0 %v385
    %v387 = vand.u32 %v196, 4294901760
    %388 = vmatprep.subr.mxu0 %v387
    %v389 = vand.u32 %v195, 4294901760
    %390 = vmatpush2.msra.mxu0 %v389
    %v391 = vand.u32 %v188, 4294901760
    %392 = vmatprep.subr.mxu0 %v391
    %v393 = vand.u32 %v187, 4294901760
    %394 = vmatpush2.msra.mxu0 %v393
    %v395 = vand.u32 %v180, 4294901760
    %396 = vmatprep.subr.mxu0 %v395
    %v397 = vand.u32 %v179, 4294901760
    %398 = vmatpush2.msra.mxu0 %v397
    %v399 = vand.u32 %v172, 4294901760
    %400 = vmatprep.subr.mxu0 %v399
    %v401 = vand.u32 %v171, 4294901760
    %402 = vmatpush2.msra.mxu0 %v401
    %v403 = vand.u32 %v164, 4294901760
    %404 = vmatprep.subr.mxu0 %v403
    %v405 = vand.u32 %v163, 4294901760
    %406 = vmatpush2.msra.mxu0 %v405
    %v407 = vand.u32 %v156, 4294901760
    %408 = vmatprep.subr.mxu0 %v407
    %v409 = vand.u32 %v155, 4294901760
    %410 = vmatpush2.msra.mxu0 %v409
    %v411 = vand.u32 %v26, 4294901760
    %v412 = vsub.f32 %v26, %v411
    %v413 = vand.u32 %v412, 4294901760
    %v414 = vsub.f32 %v412, %v413
    %v415 = vand.u32 %v414, 4294901760
    %416 = vmatprep.mubr.f32.mxu0 %v415
    %v417 = vand.u32 %v25, 4294901760
    %v418 = vsub.f32 %v25, %v417
    %v419 = vand.u32 %v418, 4294901760
    %v420 = vsub.f32 %v418, %v419
    %v421 = vand.u32 %v420, 4294901760
    %422 = vmatmul.mubr.f32.gmra.mxu0 %v421
    %v423 = vpop.f32.mrf.mxu0
    %v424 = vadd.f32 0.0, %v423
    %v425 = vpop.f32.mrf.mxu0
    %v426 = vadd.f32 0.0, %v425
    %427 = vdwg.mxu0
    %v428 = vand.u32 %v148, 4294901760
    %v429 = vsub.f32 %v148, %v428
    %v430 = vand.u32 %v429, 4294901760
    %v431 = vsub.f32 %v429, %v430
    %v432 = vand.u32 %v431, 4294901760
    %433 = vmatprep.subr.mxu0 %v432
    %v434 = vand.u32 %v147, 4294901760
    %v435 = vsub.f32 %v147, %v434
    %v436 = vand.u32 %v435, 4294901760
    %v437 = vsub.f32 %v435, %v436
    %v438 = vand.u32 %v437, 4294901760
    %439 = vmatpush1.msra.mxu0 %v438
    %v440 = vand.u32 %v140, 4294901760
    %v441 = vsub.f32 %v140, %v440
    %v442 = vand.u32 %v441, 4294901760
    %v443 = vsub.f32 %v441, %v442
    %v444 = vand.u32 %v443, 4294901760
    %445 = vmatprep.subr.mxu0 %v444
    %v446 = vand.u32 %v139, 4294901760
    %v447 = vsub.f32 %v139, %v446
    %v448 = vand.u32 %v447, 4294901760
    %v449 = vsub.f32 %v447, %v448
    %v450 = vand.u32 %v449, 4294901760
    %451 = vmatpush1.msra.mxu0 %v450
    %v452 = vand.u32 %v132, 4294901760
    %v453 = vsub.f32 %v132, %v452
    %v454 = vand.u32 %v453, 4294901760
    %v455 = vsub.f32 %v453, %v454
    %v456 = vand.u32 %v455, 4294901760
    %457 = vmatprep.subr.mxu0 %v456
    %v458 = vand.u32 %v131, 4294901760
    %v459 = vsub.f32 %v131, %v458
    %v460 = vand.u32 %v459, 4294901760
    %v461 = vsub.f32 %v459, %v460
    %v462 = vand.u32 %v461, 4294901760
    %463 = vmatpush1.msra.mxu0 %v462
    %v464 = vand.u32 %v124, 4294901760
    %v465 = vsub.f32 %v124, %v464
    %v466 = vand.u32 %v465, 4294901760
    %v467 = vsub.f32 %v465, %v466
    %v468 = vand.u32 %v467, 4294901760
    %469 = vmatprep.subr.mxu0 %v468
    %v470 = vand.u32 %v123, 4294901760
    %v471 = vsub.f32 %v123, %v470
    %v472 = vand.u32 %v471, 4294901760
    %v473 = vsub.f32 %v471, %v472
    %v474 = vand.u32 %v473, 4294901760
    %475 = vmatpush1.msra.mxu0 %v474
    %v476 = vand.u32 %v116, 4294901760
    %v477 = vsub.f32 %v116, %v476
    %v478 = vand.u32 %v477, 4294901760
    %v479 = vsub.f32 %v477, %v478
    %v480 = vand.u32 %v479, 4294901760
    %481 = vmatprep.subr.mxu0 %v480
    %v482 = vand.u32 %v115, 4294901760
    %v483 = vsub.f32 %v115, %v482
    %v484 = vand.u32 %v483, 4294901760
    %v485 = vsub.f32 %v483, %v484
    %v486 = vand.u32 %v485, 4294901760
    %487 = vmatpush1.msra.mxu0 %v486
    %v488 = vand.u32 %v108, 4294901760
    %v489 = vsub.f32 %v108, %v488
    %v490 = vand.u32 %v489, 4294901760
    %v491 = vsub.f32 %v489, %v490
    %v492 = vand.u32 %v491, 4294901760
    %493 = vmatprep.subr.mxu0 %v492
    %v494 = vand.u32 %v107, 4294901760
    %v495 = vsub.f32 %v107, %v494
    %v496 = vand.u32 %v495, 4294901760
    %v497 = vsub.f32 %v495, %v496
    %v498 = vand.u32 %v497, 4294901760
    %499 = vmatpush1.msra.mxu0 %v498
    %v500 = vand.u32 %v100, 4294901760
    %v501 = vsub.f32 %v100, %v500
    %v502 = vand.u32 %v501, 4294901760
    %v503 = vsub.f32 %v501, %v502
    %v504 = vand.u32 %v503, 4294901760
    %505 = vmatprep.subr.mxu0 %v504
    %v506 = vand.u32 %v99, 4294901760
    %v507 = vsub.f32 %v99, %v506
    %v508 = vand.u32 %v507, 4294901760
    %v509 = vsub.f32 %v507, %v508
    %v510 = vand.u32 %v509, 4294901760
    %511 = vmatpush1.msra.mxu0 %v510
    %v512 = vand.u32 %v92, 4294901760
    %v513 = vsub.f32 %v92, %v512
    %v514 = vand.u32 %v513, 4294901760
    %v515 = vsub.f32 %v513, %v514
    %v516 = vand.u32 %v515, 4294901760
    %517 = vmatprep.subr.mxu0 %v516
    %v518 = vand.u32 %v91, 4294901760
    %v519 = vsub.f32 %v91, %v518
    %v520 = vand.u32 %v519, 4294901760
    %v521 = vsub.f32 %v519, %v520
    %v522 = vand.u32 %v521, 4294901760
    %523 = vmatpush1.msra.mxu0 %v522
    %v524 = vand.u32 %v84, 4294901760
    %v525 = vsub.f32 %v84, %v524
    %v526 = vand.u32 %v525, 4294901760
    %v527 = vsub.f32 %v525, %v526
    %v528 = vand.u32 %v527, 4294901760
    %529 = vmatprep.subr.mxu0 %v528
    %v530 = vand.u32 %v83, 4294901760
    %v531 = vsub.f32 %v83, %v530
    %v532 = vand.u32 %v531, 4294901760
    %v533 = vsub.f32 %v531, %v532
    %v534 = vand.u32 %v533, 4294901760
    %535 = vmatpush1.msra.mxu0 %v534
    %v536 = vand.u32 %v76, 4294901760
    %v537 = vsub.f32 %v76, %v536
    %v538 = vand.u32 %v537, 4294901760
    %v539 = vsub.f32 %v537, %v538
    %v540 = vand.u32 %v539, 4294901760
    %541 = vmatprep.subr.mxu0 %v540
    %v542 = vand.u32 %v75, 4294901760
    %v543 = vsub.f32 %v75, %v542
    %v544 = vand.u32 %v543, 4294901760
    %v545 = vsub.f32 %v543, %v544
    %v546 = vand.u32 %v545, 4294901760
    %547 = vmatpush1.msra.mxu0 %v546
    %v548 = vand.u32 %v68, 4294901760
    %v549 = vsub.f32 %v68, %v548
    %v550 = vand.u32 %v549, 4294901760
    %v551 = vsub.f32 %v549, %v550
    %v552 = vand.u32 %v551, 4294901760
    %553 = vmatprep.subr.mxu0 %v552
    %v554 = vand.u32 %v67, 4294901760
    %v555 = vsub.f32 %v67, %v554
    %v556 = vand.u32 %v555, 4294901760
    %v557 = vsub.f32 %v555, %v556
    %v558 = vand.u32 %v557, 4294901760
    %559 = vmatpush1.msra.mxu0 %v558
    %v560 = vand.u32 %v60, 4294901760
    %v561 = vsub.f32 %v60, %v560
    %v562 = vand.u32 %v561, 4294901760
    %v563 = vsub.f32 %v561, %v562
    %v564 = vand.u32 %v563, 4294901760
    %565 = vmatprep.subr.mxu0 %v564
    %v566 = vand.u32 %v59, 4294901760
    %v567 = vsub.f32 %v59, %v566
    %v568 = vand.u32 %v567, 4294901760
    %v569 = vsub.f32 %v567, %v568
    %v570 = vand.u32 %v569, 4294901760
    %571 = vmatpush1.msra.mxu0 %v570
    %v572 = vand.u32 %v52, 4294901760
    %v573 = vsub.f32 %v52, %v572
    %v574 = vand.u32 %v573, 4294901760
    %v575 = vsub.f32 %v573, %v574
    %v576 = vand.u32 %v575, 4294901760
    %577 = vmatprep.subr.mxu0 %v576
    %v578 = vand.u32 %v51, 4294901760
    %v579 = vsub.f32 %v51, %v578
    %v580 = vand.u32 %v579, 4294901760
    %v581 = vsub.f32 %v579, %v580
    %v582 = vand.u32 %v581, 4294901760
    %583 = vmatpush1.msra.mxu0 %v582
    %v584 = vand.u32 %v44, 4294901760
    %v585 = vsub.f32 %v44, %v584
    %v586 = vand.u32 %v585, 4294901760
    %v587 = vsub.f32 %v585, %v586
    %v588 = vand.u32 %v587, 4294901760
    %589 = vmatprep.subr.mxu0 %v588
    %v590 = vand.u32 %v43, 4294901760
    %v591 = vsub.f32 %v43, %v590
    %v592 = vand.u32 %v591, 4294901760
    %v593 = vsub.f32 %v591, %v592
    %v594 = vand.u32 %v593, 4294901760
    %595 = vmatpush1.msra.mxu0 %v594
    %v596 = vand.u32 %v36, 4294901760
    %v597 = vsub.f32 %v36, %v596
    %v598 = vand.u32 %v597, 4294901760
    %v599 = vsub.f32 %v597, %v598
    %v600 = vand.u32 %v599, 4294901760
    %601 = vmatprep.subr.mxu0 %v600
    %v602 = vand.u32 %v35, 4294901760
    %v603 = vsub.f32 %v35, %v602
    %v604 = vand.u32 %v603, 4294901760
    %v605 = vsub.f32 %v603, %v604
    %v606 = vand.u32 %v605, 4294901760
    %607 = vmatpush1.msra.mxu0 %v606
    %v608 = vand.u32 %v28, 4294901760
    %v609 = vsub.f32 %v28, %v608
    %v610 = vand.u32 %v609, 4294901760
    %v611 = vsub.f32 %v609, %v610
    %v612 = vand.u32 %v611, 4294901760
    %613 = vmatprep.subr.mxu0 %v612
    %v614 = vand.u32 %v27, 4294901760
    %v615 = vsub.f32 %v27, %v614
    %v616 = vand.u32 %v615, 4294901760
    %v617 = vsub.f32 %v615, %v616
    %v618 = vand.u32 %v617, 4294901760
    %619 = vmatpush1.msra.mxu0 %v618
    %v620 = vand.u32 %v276, 4294901760
    %v621 = vsub.f32 %v276, %v620
    %v622 = vand.u32 %v621, 4294901760
    %v623 = vsub.f32 %v621, %v622
    %v624 = vand.u32 %v623, 4294901760
    %625 = vmatprep.subr.mxu0 %v624
    %v626 = vand.u32 %v275, 4294901760
    %v627 = vsub.f32 %v275, %v626
    %v628 = vand.u32 %v627, 4294901760
    %v629 = vsub.f32 %v627, %v628
    %v630 = vand.u32 %v629, 4294901760
    %631 = vmatpush2.msra.mxu0 %v630
    %v632 = vand.u32 %v268, 4294901760
    %v633 = vsub.f32 %v268, %v632
    %v634 = vand.u32 %v633, 4294901760
    %v635 = vsub.f32 %v633, %v634
    %v636 = vand.u32 %v635, 4294901760
    %637 = vmatprep.subr.mxu0 %v636
    %v638 = vand.u32 %v267, 4294901760
    %v639 = vsub.f32 %v267, %v638
    %v640 = vand.u32 %v639, 4294901760
    %v641 = vsub.f32 %v639, %v640
    %v642 = vand.u32 %v641, 4294901760
    %643 = vmatpush2.msra.mxu0 %v642
    %v644 = vand.u32 %v260, 4294901760
    %v645 = vsub.f32 %v260, %v644
    %v646 = vand.u32 %v645, 4294901760
    %v647 = vsub.f32 %v645, %v646
    %v648 = vand.u32 %v647, 4294901760
    %649 = vmatprep.subr.mxu0 %v648
    %v650 = vand.u32 %v259, 4294901760
    %v651 = vsub.f32 %v259, %v650
    %v652 = vand.u32 %v651, 4294901760
    %v653 = vsub.f32 %v651, %v652
    %v654 = vand.u32 %v653, 4294901760
    %655 = vmatpush2.msra.mxu0 %v654
    %v656 = vand.u32 %v252, 4294901760
    %v657 = vsub.f32 %v252, %v656
    %v658 = vand.u32 %v657, 4294901760
    %v659 = vsub.f32 %v657, %v658
    %v660 = vand.u32 %v659, 4294901760
    %661 = vmatprep.subr.mxu0 %v660
    %v662 = vand.u32 %v251, 4294901760
    %v663 = vsub.f32 %v251, %v662
    %v664 = vand.u32 %v663, 4294901760
    %v665 = vsub.f32 %v663, %v664
    %v666 = vand.u32 %v665, 4294901760
    %667 = vmatpush2.msra.mxu0 %v666
    %v668 = vand.u32 %v244, 4294901760
    %v669 = vsub.f32 %v244, %v668
    %v670 = vand.u32 %v669, 4294901760
    %v671 = vsub.f32 %v669, %v670
    %v672 = vand.u32 %v671, 4294901760
    %673 = vmatprep.subr.mxu0 %v672
    %v674 = vand.u32 %v243, 4294901760
    %v675 = vsub.f32 %v243, %v674
    %v676 = vand.u32 %v675, 4294901760
    %v677 = vsub.f32 %v675, %v676
    %v678 = vand.u32 %v677, 4294901760
    %679 = vmatpush2.msra.mxu0 %v678
    %v680 = vand.u32 %v236, 4294901760
    %v681 = vsub.f32 %v236, %v680
    %v682 = vand.u32 %v681, 4294901760
    %v683 = vsub.f32 %v681, %v682
    %v684 = vand.u32 %v683, 4294901760
    %685 = vmatprep.subr.mxu0 %v684
    %v686 = vand.u32 %v235, 4294901760
    %v687 = vsub.f32 %v235, %v686
    %v688 = vand.u32 %v687, 4294901760
    %v689 = vsub.f32 %v687, %v688
    %v690 = vand.u32 %v689, 4294901760
    %691 = vmatpush2.msra.mxu0 %v690
    %v692 = vand.u32 %v228, 4294901760
    %v693 = vsub.f32 %v228, %v692
    %v694 = vand.u32 %v693, 4294901760
    %v695 = vsub.f32 %v693, %v694
    %v696 = vand.u32 %v695, 4294901760
    %697 = vmatprep.subr.mxu0 %v696
    %v698 = vand.u32 %v227, 4294901760
    %v699 = vsub.f32 %v227, %v698
    %v700 = vand.u32 %v699, 4294901760
    %v701 = vsub.f32 %v699, %v700
    %v702 = vand.u32 %v701, 4294901760
    %703 = vmatpush2.msra.mxu0 %v702
    %v704 = vand.u32 %v220, 4294901760
    %v705 = vsub.f32 %v220, %v704
    %v706 = vand.u32 %v705, 4294901760
    %v707 = vsub.f32 %v705, %v706
    %v708 = vand.u32 %v707, 4294901760
    %709 = vmatprep.subr.mxu0 %v708
    %v710 = vand.u32 %v219, 4294901760
    %v711 = vsub.f32 %v219, %v710
    %v712 = vand.u32 %v711, 4294901760
    %v713 = vsub.f32 %v711, %v712
    %v714 = vand.u32 %v713, 4294901760
    %715 = vmatpush2.msra.mxu0 %v714
    %v716 = vand.u32 %v212, 4294901760
    %v717 = vsub.f32 %v212, %v716
    %v718 = vand.u32 %v717, 4294901760
    %v719 = vsub.f32 %v717, %v718
    %v720 = vand.u32 %v719, 4294901760
    %721 = vmatprep.subr.mxu0 %v720
    %v722 = vand.u32 %v211, 4294901760
    %v723 = vsub.f32 %v211, %v722
    %v724 = vand.u32 %v723, 4294901760
    %v725 = vsub.f32 %v723, %v724
    %v726 = vand.u32 %v725, 4294901760
    %727 = vmatpush2.msra.mxu0 %v726
    %v728 = vand.u32 %v204, 4294901760
    %v729 = vsub.f32 %v204, %v728
    %v730 = vand.u32 %v729, 4294901760
    %v731 = vsub.f32 %v729, %v730
    %v732 = vand.u32 %v731, 4294901760
    %733 = vmatprep.subr.mxu0 %v732
    %v734 = vand.u32 %v203, 4294901760
    %v735 = vsub.f32 %v203, %v734
    %v736 = vand.u32 %v735, 4294901760
    %v737 = vsub.f32 %v735, %v736
    %v738 = vand.u32 %v737, 4294901760
    %739 = vmatpush2.msra.mxu0 %v738
    %v740 = vand.u32 %v196, 4294901760
    %v741 = vsub.f32 %v196, %v740
    %v742 = vand.u32 %v741, 4294901760
    %v743 = vsub.f32 %v741, %v742
    %v744 = vand.u32 %v743, 4294901760
    %745 = vmatprep.subr.mxu0 %v744
    %v746 = vand.u32 %v195, 4294901760
    %v747 = vsub.f32 %v195, %v746
    %v748 = vand.u32 %v747, 4294901760
    %v749 = vsub.f32 %v747, %v748
    %v750 = vand.u32 %v749, 4294901760
    %751 = vmatpush2.msra.mxu0 %v750
    %v752 = vand.u32 %v188, 4294901760
    %v753 = vsub.f32 %v188, %v752
    %v754 = vand.u32 %v753, 4294901760
    %v755 = vsub.f32 %v753, %v754
    %v756 = vand.u32 %v755, 4294901760
    %757 = vmatprep.subr.mxu0 %v756
    %v758 = vand.u32 %v187, 4294901760
    %v759 = vsub.f32 %v187, %v758
    %v760 = vand.u32 %v759, 4294901760
    %v761 = vsub.f32 %v759, %v760
    %v762 = vand.u32 %v761, 4294901760
    %763 = vmatpush2.msra.mxu0 %v762
    %v764 = vand.u32 %v180, 4294901760
    %v765 = vsub.f32 %v180, %v764
    %v766 = vand.u32 %v765, 4294901760
    %v767 = vsub.f32 %v765, %v766
    %v768 = vand.u32 %v767, 4294901760
    %769 = vmatprep.subr.mxu0 %v768
    %v770 = vand.u32 %v179, 4294901760
    %v771 = vsub.f32 %v179, %v770
    %v772 = vand.u32 %v771, 4294901760
    %v773 = vsub.f32 %v771, %v772
    %v774 = vand.u32 %v773, 4294901760
    %775 = vmatpush2.msra.mxu0 %v774
    %v776 = vand.u32 %v172, 4294901760
    %v777 = vsub.f32 %v172, %v776
    %v778 = vand.u32 %v777, 4294901760
    %v779 = vsub.f32 %v777, %v778
    %v780 = vand.u32 %v779, 4294901760
    %781 = vmatprep.subr.mxu0 %v780
    %v782 = vand.u32 %v171, 4294901760
    %v783 = vsub.f32 %v171, %v782
    %v784 = vand.u32 %v783, 4294901760
    %v785 = vsub.f32 %v783, %v784
    %v786 = vand.u32 %v785, 4294901760
    %787 = vmatpush2.msra.mxu0 %v786
    %v788 = vand.u32 %v164, 4294901760
    %v789 = vsub.f32 %v164, %v788
    %v790 = vand.u32 %v789, 4294901760
    %v791 = vsub.f32 %v789, %v790
    %v792 = vand.u32 %v791, 4294901760
    %793 = vmatprep.subr.mxu0 %v792
    %v794 = vand.u32 %v163, 4294901760
    %v795 = vsub.f32 %v163, %v794
    %v796 = vand.u32 %v795, 4294901760
    %v797 = vsub.f32 %v795, %v796
    %v798 = vand.u32 %v797, 4294901760
    %799 = vmatpush2.msra.mxu0 %v798
    %v800 = vand.u32 %v156, 4294901760
    %v801 = vsub.f32 %v156, %v800
    %v802 = vand.u32 %v801, 4294901760
    %v803 = vsub.f32 %v801, %v802
    %v804 = vand.u32 %v803, 4294901760
    %805 = vmatprep.subr.mxu0 %v804
    %v806 = vand.u32 %v155, 4294901760
    %v807 = vsub.f32 %v155, %v806
    %v808 = vand.u32 %v807, 4294901760
    %v809 = vsub.f32 %v807, %v808
    %v810 = vand.u32 %v809, 4294901760
    %811 = vmatpush2.msra.mxu0 %v810
    %v812 = vand.u32 %v26, 4294901760
    %813 = vmatprep.mubr.f32.mxu0 %v812
    %v814 = vand.u32 %v25, 4294901760
    %815 = vmatmul.mubr.f32.gmra.mxu0 %v814
    %v816 = vpop.f32.mrf.mxu0
    %v817 = vadd.f32 %v424, %v816
    %v818 = vpop.f32.mrf.mxu0
    %v819 = vadd.f32 %v426, %v818
    %820 = vdwg.mxu0
    %v821 = vand.u32 %v148, 4294901760
    %v822 = vsub.f32 %v148, %v821
    %823 = vmatprep.subr.mxu0 %v822
    %v824 = vand.u32 %v147, 4294901760
    %v825 = vsub.f32 %v147, %v824
    %826 = vmatpush1.msra.mxu0 %v825
    %v827 = vand.u32 %v140, 4294901760
    %v828 = vsub.f32 %v140, %v827
    %829 = vmatprep.subr.mxu0 %v828
    %v830 = vand.u32 %v139, 4294901760
    %v831 = vsub.f32 %v139, %v830
    %832 = vmatpush1.msra.mxu0 %v831
    %v833 = vand.u32 %v132, 4294901760
    %v834 = vsub.f32 %v132, %v833
    %835 = vmatprep.subr.mxu0 %v834
    %v836 = vand.u32 %v131, 4294901760
    %v837 = vsub.f32 %v131, %v836
    %838 = vmatpush1.msra.mxu0 %v837
    %v839 = vand.u32 %v124, 4294901760
    %v840 = vsub.f32 %v124, %v839
    %841 = vmatprep.subr.mxu0 %v840
    %v842 = vand.u32 %v123, 4294901760
    %v843 = vsub.f32 %v123, %v842
    %844 = vmatpush1.msra.mxu0 %v843
    %v845 = vand.u32 %v116, 4294901760
    %v846 = vsub.f32 %v116, %v845
    %847 = vmatprep.subr.mxu0 %v846
    %v848 = vand.u32 %v115, 4294901760
    %v849 = vsub.f32 %v115, %v848
    %850 = vmatpush1.msra.mxu0 %v849
    %v851 = vand.u32 %v108, 4294901760
    %v852 = vsub.f32 %v108, %v851
    %853 = vmatprep.subr.mxu0 %v852
    %v854 = vand.u32 %v107, 4294901760
    %v855 = vsub.f32 %v107, %v854
    %856 = vmatpush1.msra.mxu0 %v855
    %v857 = vand.u32 %v100, 4294901760
    %v858 = vsub.f32 %v100, %v857
    %859 = vmatprep.subr.mxu0 %v858
    %v860 = vand.u32 %v99, 4294901760
    %v861 = vsub.f32 %v99, %v860
    %862 = vmatpush1.msra.mxu0 %v861
    %v863 = vand.u32 %v92, 4294901760
    %v864 = vsub.f32 %v92, %v863
    %865 = vmatprep.subr.mxu0 %v864
    %v866 = vand.u32 %v91, 4294901760
    %v867 = vsub.f32 %v91, %v866
    %868 = vmatpush1.msra.mxu0 %v867
    %v869 = vand.u32 %v84, 4294901760
    %v870 = vsub.f32 %v84, %v869
    %871 = vmatprep.subr.mxu0 %v870
    %v872 = vand.u32 %v83, 4294901760
    %v873 = vsub.f32 %v83, %v872
    %874 = vmatpush1.msra.mxu0 %v873
    %v875 = vand.u32 %v76, 4294901760
    %v876 = vsub.f32 %v76, %v875
    %877 = vmatprep.subr.mxu0 %v876
    %v878 = vand.u32 %v75, 4294901760
    %v879 = vsub.f32 %v75, %v878
    %880 = vmatpush1.msra.mxu0 %v879
    %v881 = vand.u32 %v68, 4294901760
    %v882 = vsub.f32 %v68, %v881
    %883 = vmatprep.subr.mxu0 %v882
    %v884 = vand.u32 %v67, 4294901760
    %v885 = vsub.f32 %v67, %v884
    %886 = vmatpush1.msra.mxu0 %v885
    %v887 = vand.u32 %v60, 4294901760
    %v888 = vsub.f32 %v60, %v887
    %889 = vmatprep.subr.mxu0 %v888
    %v890 = vand.u32 %v59, 4294901760
    %v891 = vsub.f32 %v59, %v890
    %892 = vmatpush1.msra.mxu0 %v891
    %v893 = vand.u32 %v52, 4294901760
    %v894 = vsub.f32 %v52, %v893
    %895 = vmatprep.subr.mxu0 %v894
    %v896 = vand.u32 %v51, 4294901760
    %v897 = vsub.f32 %v51, %v896
    %898 = vmatpush1.msra.mxu0 %v897
    %v899 = vand.u32 %v44, 4294901760
    %v900 = vsub.f32 %v44, %v899
    %901 = vmatprep.subr.mxu0 %v900
    %v902 = vand.u32 %v43, 4294901760
    %v903 = vsub.f32 %v43, %v902
    %904 = vmatpush1.msra.mxu0 %v903
    %v905 = vand.u32 %v36, 4294901760
    %v906 = vsub.f32 %v36, %v905
    %907 = vmatprep.subr.mxu0 %v906
    %v908 = vand.u32 %v35, 4294901760
    %v909 = vsub.f32 %v35, %v908
    %910 = vmatpush1.msra.mxu0 %v909
    %v911 = vand.u32 %v28, 4294901760
    %v912 = vsub.f32 %v28, %v911
    %913 = vmatprep.subr.mxu0 %v912
    %v914 = vand.u32 %v27, 4294901760
    %v915 = vsub.f32 %v27, %v914
    %916 = vmatpush1.msra.mxu0 %v915
    %v917 = vand.u32 %v276, 4294901760
    %v918 = vsub.f32 %v276, %v917
    %919 = vmatprep.subr.mxu0 %v918
    %v920 = vand.u32 %v275, 4294901760
    %v921 = vsub.f32 %v275, %v920
    %922 = vmatpush2.msra.mxu0 %v921
    %v923 = vand.u32 %v268, 4294901760
    %v924 = vsub.f32 %v268, %v923
    %925 = vmatprep.subr.mxu0 %v924
    %v926 = vand.u32 %v267, 4294901760
    %v927 = vsub.f32 %v267, %v926
    %928 = vmatpush2.msra.mxu0 %v927
    %v929 = vand.u32 %v260, 4294901760
    %v930 = vsub.f32 %v260, %v929
    %931 = vmatprep.subr.mxu0 %v930
    %v932 = vand.u32 %v259, 4294901760
    %v933 = vsub.f32 %v259, %v932
    %934 = vmatpush2.msra.mxu0 %v933
    %v935 = vand.u32 %v252, 4294901760
    %v936 = vsub.f32 %v252, %v935
    %937 = vmatprep.subr.mxu0 %v936
    %v938 = vand.u32 %v251, 4294901760
    %v939 = vsub.f32 %v251, %v938
    %940 = vmatpush2.msra.mxu0 %v939
    %v941 = vand.u32 %v244, 4294901760
    %v942 = vsub.f32 %v244, %v941
    %943 = vmatprep.subr.mxu0 %v942
    %v944 = vand.u32 %v243, 4294901760
    %v945 = vsub.f32 %v243, %v944
    %946 = vmatpush2.msra.mxu0 %v945
    %v947 = vand.u32 %v236, 4294901760
    %v948 = vsub.f32 %v236, %v947
    %949 = vmatprep.subr.mxu0 %v948
    %v950 = vand.u32 %v235, 4294901760
    %v951 = vsub.f32 %v235, %v950
    %952 = vmatpush2.msra.mxu0 %v951
    %v953 = vand.u32 %v228, 4294901760
    %v954 = vsub.f32 %v228, %v953
    %955 = vmatprep.subr.mxu0 %v954
    %v956 = vand.u32 %v227, 4294901760
    %v957 = vsub.f32 %v227, %v956
    %958 = vmatpush2.msra.mxu0 %v957
    %v959 = vand.u32 %v220, 4294901760
    %v960 = vsub.f32 %v220, %v959
    %961 = vmatprep.subr.mxu0 %v960
    %v962 = vand.u32 %v219, 4294901760
    %v963 = vsub.f32 %v219, %v962
    %964 = vmatpush2.msra.mxu0 %v963
    %v965 = vand.u32 %v212, 4294901760
    %v966 = vsub.f32 %v212, %v965
    %967 = vmatprep.subr.mxu0 %v966
    %v968 = vand.u32 %v211, 4294901760
    %v969 = vsub.f32 %v211, %v968
    %970 = vmatpush2.msra.mxu0 %v969
    %v971 = vand.u32 %v204, 4294901760
    %v972 = vsub.f32 %v204, %v971
    %973 = vmatprep.subr.mxu0 %v972
    %v974 = vand.u32 %v203, 4294901760
    %v975 = vsub.f32 %v203, %v974
    %976 = vmatpush2.msra.mxu0 %v975
    %v977 = vand.u32 %v196, 4294901760
    %v978 = vsub.f32 %v196, %v977
    %979 = vmatprep.subr.mxu0 %v978
    %v980 = vand.u32 %v195, 4294901760
    %v981 = vsub.f32 %v195, %v980
    %982 = vmatpush2.msra.mxu0 %v981
    %v983 = vand.u32 %v188, 4294901760
    %v984 = vsub.f32 %v188, %v983
    %985 = vmatprep.subr.mxu0 %v984
    %v986 = vand.u32 %v187, 4294901760
    %v987 = vsub.f32 %v187, %v986
    %988 = vmatpush2.msra.mxu0 %v987
    %v989 = vand.u32 %v180, 4294901760
    %v990 = vsub.f32 %v180, %v989
    %991 = vmatprep.subr.mxu0 %v990
    %v992 = vand.u32 %v179, 4294901760
    %v993 = vsub.f32 %v179, %v992
    %994 = vmatpush2.msra.mxu0 %v993
    %v995 = vand.u32 %v172, 4294901760
    %v996 = vsub.f32 %v172, %v995
    %997 = vmatprep.subr.mxu0 %v996
    %v998 = vand.u32 %v171, 4294901760
    %v999 = vsub.f32 %v171, %v998
    %1000 = vmatpush2.msra.mxu0 %v999
    %v1001 = vand.u32 %v164, 4294901760
    %v1002 = vsub.f32 %v164, %v1001
    %1003 = vmatprep.subr.mxu0 %v1002
    %v1004 = vand.u32 %v163, 4294901760
    %v1005 = vsub.f32 %v163, %v1004
    %1006 = vmatpush2.msra.mxu0 %v1005
    %v1007 = vand.u32 %v156, 4294901760
    %v1008 = vsub.f32 %v156, %v1007
    %1009 = vmatprep.subr.mxu0 %v1008
    %v1010 = vand.u32 %v155, 4294901760
    %v1011 = vsub.f32 %v155, %v1010
    %1012 = vmatpush2.msra.mxu0 %v1011
    %v1013 = vand.u32 %v26, 4294901760
    %v1014 = vsub.f32 %v26, %v1013
    %1015 = vmatprep.mubr.f32.mxu0 %v1014
    %v1016 = vand.u32 %v25, 4294901760
    %v1017 = vsub.f32 %v25, %v1016
    %1018 = vmatmul.mubr.f32.gmra.mxu0 %v1017
    %v1019 = vpop.f32.mrf.mxu0
    %v1020 = vadd.f32 %v817, %v1019
    %v1021 = vpop.f32.mrf.mxu0
    %v1022 = vadd.f32 %v819, %v1021
    %1023 = vdwg.mxu0
    %v1024 = vand.u32 %v148, 4294901760
    %1025 = vmatprep.subr.mxu0 %v1024
    %v1026 = vand.u32 %v147, 4294901760
    %1027 = vmatpush1.msra.mxu0 %v1026
    %v1028 = vand.u32 %v140, 4294901760
    %1029 = vmatprep.subr.mxu0 %v1028
    %v1030 = vand.u32 %v139, 4294901760
    %1031 = vmatpush1.msra.mxu0 %v1030
    %v1032 = vand.u32 %v132, 4294901760
    %1033 = vmatprep.subr.mxu0 %v1032
    %v1034 = vand.u32 %v131, 4294901760
    %1035 = vmatpush1.msra.mxu0 %v1034
    %v1036 = vand.u32 %v124, 4294901760
    %1037 = vmatprep.subr.mxu0 %v1036
    %v1038 = vand.u32 %v123, 4294901760
    %1039 = vmatpush1.msra.mxu0 %v1038
    %v1040 = vand.u32 %v116, 4294901760
    %1041 = vmatprep.subr.mxu0 %v1040
    %v1042 = vand.u32 %v115, 4294901760
    %1043 = vmatpush1.msra.mxu0 %v1042
    %v1044 = vand.u32 %v108, 4294901760
    %1045 = vmatprep.subr.mxu0 %v1044
    %v1046 = vand.u32 %v107, 4294901760
    %1047 = vmatpush1.msra.mxu0 %v1046
    %v1048 = vand.u32 %v100, 4294901760
    %1049 = vmatprep.subr.mxu0 %v1048
    %v1050 = vand.u32 %v99, 4294901760
    %1051 = vmatpush1.msra.mxu0 %v1050
    %v1052 = vand.u32 %v92, 4294901760
    %1053 = vmatprep.subr.mxu0 %v1052
    %v1054 = vand.u32 %v91, 4294901760
    %1055 = vmatpush1.msra.mxu0 %v1054
    %v1056 = vand.u32 %v84, 4294901760
    %1057 = vmatprep.subr.mxu0 %v1056
    %v1058 = vand.u32 %v83, 4294901760
    %1059 = vmatpush1.msra.mxu0 %v1058
    %v1060 = vand.u32 %v76, 4294901760
    %1061 = vmatprep.subr.mxu0 %v1060
    %v1062 = vand.u32 %v75, 4294901760
    %1063 = vmatpush1.msra.mxu0 %v1062
    %v1064 = vand.u32 %v68, 4294901760
    %1065 = vmatprep.subr.mxu0 %v1064
    %v1066 = vand.u32 %v67, 4294901760
    %1067 = vmatpush1.msra.mxu0 %v1066
    %v1068 = vand.u32 %v60, 4294901760
    %1069 = vmatprep.subr.mxu0 %v1068
    %v1070 = vand.u32 %v59, 4294901760
    %1071 = vmatpush1.msra.mxu0 %v1070
    %v1072 = vand.u32 %v52, 4294901760
    %1073 = vmatprep.subr.mxu0 %v1072
    %v1074 = vand.u32 %v51, 4294901760
    %1075 = vmatpush1.msra.mxu0 %v1074
    %v1076 = vand.u32 %v44, 4294901760
    %1077 = vmatprep.subr.mxu0 %v1076
    %v1078 = vand.u32 %v43, 4294901760
    %1079 = vmatpush1.msra.mxu0 %v1078
    %v1080 = vand.u32 %v36, 4294901760
    %1081 = vmatprep.subr.mxu0 %v1080
    %v1082 = vand.u32 %v35, 4294901760
    %1083 = vmatpush1.msra.mxu0 %v1082
    %v1084 = vand.u32 %v28, 4294901760
    %1085 = vmatprep.subr.mxu0 %v1084
    %v1086 = vand.u32 %v27, 4294901760
    %1087 = vmatpush1.msra.mxu0 %v1086
    %v1088 = vand.u32 %v276, 4294901760
    %1089 = vmatprep.subr.mxu0 %v1088
    %v1090 = vand.u32 %v275, 4294901760
    %1091 = vmatpush2.msra.mxu0 %v1090
    %v1092 = vand.u32 %v268, 4294901760
    %1093 = vmatprep.subr.mxu0 %v1092
    %v1094 = vand.u32 %v267, 4294901760
    %1095 = vmatpush2.msra.mxu0 %v1094
    %v1096 = vand.u32 %v260, 4294901760
    %1097 = vmatprep.subr.mxu0 %v1096
    %v1098 = vand.u32 %v259, 4294901760
    %1099 = vmatpush2.msra.mxu0 %v1098
    %v1100 = vand.u32 %v252, 4294901760
    %1101 = vmatprep.subr.mxu0 %v1100
    %v1102 = vand.u32 %v251, 4294901760
    %1103 = vmatpush2.msra.mxu0 %v1102
    %v1104 = vand.u32 %v244, 4294901760
    %1105 = vmatprep.subr.mxu0 %v1104
    %v1106 = vand.u32 %v243, 4294901760
    %1107 = vmatpush2.msra.mxu0 %v1106
    %v1108 = vand.u32 %v236, 4294901760
    %1109 = vmatprep.subr.mxu0 %v1108
    %v1110 = vand.u32 %v235, 4294901760
    %1111 = vmatpush2.msra.mxu0 %v1110
    %v1112 = vand.u32 %v228, 4294901760
    %1113 = vmatprep.subr.mxu0 %v1112
    %v1114 = vand.u32 %v227, 4294901760
    %1115 = vmatpush2.msra.mxu0 %v1114
    %v1116 = vand.u32 %v220, 4294901760
    %1117 = vmatprep.subr.mxu0 %v1116
    %v1118 = vand.u32 %v219, 4294901760
    %1119 = vmatpush2.msra.mxu0 %v1118
    %v1120 = vand.u32 %v212, 4294901760
    %1121 = vmatprep.subr.mxu0 %v1120
    %v1122 = vand.u32 %v211, 4294901760
    %1123 = vmatpush2.msra.mxu0 %v1122
    %v1124 = vand.u32 %v204, 4294901760
    %1125 = vmatprep.subr.mxu0 %v1124
    %v1126 = vand.u32 %v203, 4294901760
    %1127 = vmatpush2.msra.mxu0 %v1126
    %v1128 = vand.u32 %v196, 4294901760
    %1129 = vmatprep.subr.mxu0 %v1128
    %v1130 = vand.u32 %v195, 4294901760
    %1131 = vmatpush2.msra.mxu0 %v1130
    %v1132 = vand.u32 %v188, 4294901760
    %1133 = vmatprep.subr.mxu0 %v1132
    %v1134 = vand.u32 %v187, 4294901760
    %1135 = vmatpush2.msra.mxu0 %v1134
    %v1136 = vand.u32 %v180, 4294901760
    %1137 = vmatprep.subr.mxu0 %v1136
    %v1138 = vand.u32 %v179, 4294901760
    %1139 = vmatpush2.msra.mxu0 %v1138
    %v1140 = vand.u32 %v172, 4294901760
    %1141 = vmatprep.subr.mxu0 %v1140
    %v1142 = vand.u32 %v171, 4294901760
    %1143 = vmatpush2.msra.mxu0 %v1142
    %v1144 = vand.u32 %v164, 4294901760
    %1145 = vmatprep.subr.mxu0 %v1144
    %v1146 = vand.u32 %v163, 4294901760
    %1147 = vmatpush2.msra.mxu0 %v1146
    %v1148 = vand.u32 %v156, 4294901760
    %1149 = vmatprep.subr.mxu0 %v1148
    %v1150 = vand.u32 %v155, 4294901760
    %1151 = vmatpush2.msra.mxu0 %v1150
    %v1152 = vand.u32 %v26, 4294901760
    %v1153 = vsub.f32 %v26, %v1152
    %v1154 = vand.u32 %v1153, 4294901760
    %1155 = vmatprep.mubr.f32.mxu0 %v1154
    %v1156 = vand.u32 %v25, 4294901760
    %v1157 = vsub.f32 %v25, %v1156
    %v1158 = vand.u32 %v1157, 4294901760
    %1159 = vmatmul.mubr.f32.gmra.mxu0 %v1158
    %v1160 = vpop.f32.mrf.mxu0
    %v1161 = vadd.f32 %v1020, %v1160
    %v1162 = vpop.f32.mrf.mxu0
    %v1163 = vadd.f32 %v1022, %v1162
    %1164 = vdwg.mxu0
    %v1165 = vand.u32 %v148, 4294901760
    %v1166 = vsub.f32 %v148, %v1165
    %v1167 = vand.u32 %v1166, 4294901760
    %1168 = vmatprep.subr.mxu0 %v1167
    %v1169 = vand.u32 %v147, 4294901760
    %v1170 = vsub.f32 %v147, %v1169
    %v1171 = vand.u32 %v1170, 4294901760
    %1172 = vmatpush1.msra.mxu0 %v1171
    %v1173 = vand.u32 %v140, 4294901760
    %v1174 = vsub.f32 %v140, %v1173
    %v1175 = vand.u32 %v1174, 4294901760
    %1176 = vmatprep.subr.mxu0 %v1175
    %v1177 = vand.u32 %v139, 4294901760
    %v1178 = vsub.f32 %v139, %v1177
    %v1179 = vand.u32 %v1178, 4294901760
    %1180 = vmatpush1.msra.mxu0 %v1179
    %v1181 = vand.u32 %v132, 4294901760
    %v1182 = vsub.f32 %v132, %v1181
    %v1183 = vand.u32 %v1182, 4294901760
    %1184 = vmatprep.subr.mxu0 %v1183
    %v1185 = vand.u32 %v131, 4294901760
    %v1186 = vsub.f32 %v131, %v1185
    %v1187 = vand.u32 %v1186, 4294901760
    %1188 = vmatpush1.msra.mxu0 %v1187
    %v1189 = vand.u32 %v124, 4294901760
    %v1190 = vsub.f32 %v124, %v1189
    %v1191 = vand.u32 %v1190, 4294901760
    %1192 = vmatprep.subr.mxu0 %v1191
    %v1193 = vand.u32 %v123, 4294901760
    %v1194 = vsub.f32 %v123, %v1193
    %v1195 = vand.u32 %v1194, 4294901760
    %1196 = vmatpush1.msra.mxu0 %v1195
    %v1197 = vand.u32 %v116, 4294901760
    %v1198 = vsub.f32 %v116, %v1197
    %v1199 = vand.u32 %v1198, 4294901760
    %1200 = vmatprep.subr.mxu0 %v1199
    %v1201 = vand.u32 %v115, 4294901760
    %v1202 = vsub.f32 %v115, %v1201
    %v1203 = vand.u32 %v1202, 4294901760
    %1204 = vmatpush1.msra.mxu0 %v1203
    %v1205 = vand.u32 %v108, 4294901760
    %v1206 = vsub.f32 %v108, %v1205
    %v1207 = vand.u32 %v1206, 4294901760
    %1208 = vmatprep.subr.mxu0 %v1207
    %v1209 = vand.u32 %v107, 4294901760
    %v1210 = vsub.f32 %v107, %v1209
    %v1211 = vand.u32 %v1210, 4294901760
    %1212 = vmatpush1.msra.mxu0 %v1211
    %v1213 = vand.u32 %v100, 4294901760
    %v1214 = vsub.f32 %v100, %v1213
    %v1215 = vand.u32 %v1214, 4294901760
    %1216 = vmatprep.subr.mxu0 %v1215
    %v1217 = vand.u32 %v99, 4294901760
    %v1218 = vsub.f32 %v99, %v1217
    %v1219 = vand.u32 %v1218, 4294901760
    %1220 = vmatpush1.msra.mxu0 %v1219
    %v1221 = vand.u32 %v92, 4294901760
    %v1222 = vsub.f32 %v92, %v1221
    %v1223 = vand.u32 %v1222, 4294901760
    %1224 = vmatprep.subr.mxu0 %v1223
    %v1225 = vand.u32 %v91, 4294901760
    %v1226 = vsub.f32 %v91, %v1225
    %v1227 = vand.u32 %v1226, 4294901760
    %1228 = vmatpush1.msra.mxu0 %v1227
    %v1229 = vand.u32 %v84, 4294901760
    %v1230 = vsub.f32 %v84, %v1229
    %v1231 = vand.u32 %v1230, 4294901760
    %1232 = vmatprep.subr.mxu0 %v1231
    %v1233 = vand.u32 %v83, 4294901760
    %v1234 = vsub.f32 %v83, %v1233
    %v1235 = vand.u32 %v1234, 4294901760
    %1236 = vmatpush1.msra.mxu0 %v1235
    %v1237 = vand.u32 %v76, 4294901760
    %v1238 = vsub.f32 %v76, %v1237
    %v1239 = vand.u32 %v1238, 4294901760
    %1240 = vmatprep.subr.mxu0 %v1239
    %v1241 = vand.u32 %v75, 4294901760
    %v1242 = vsub.f32 %v75, %v1241
    %v1243 = vand.u32 %v1242, 4294901760
    %1244 = vmatpush1.msra.mxu0 %v1243
    %v1245 = vand.u32 %v68, 4294901760
    %v1246 = vsub.f32 %v68, %v1245
    %v1247 = vand.u32 %v1246, 4294901760
    %1248 = vmatprep.subr.mxu0 %v1247
    %v1249 = vand.u32 %v67, 4294901760
    %v1250 = vsub.f32 %v67, %v1249
    %v1251 = vand.u32 %v1250, 4294901760
    %1252 = vmatpush1.msra.mxu0 %v1251
    %v1253 = vand.u32 %v60, 4294901760
    %v1254 = vsub.f32 %v60, %v1253
    %v1255 = vand.u32 %v1254, 4294901760
    %1256 = vmatprep.subr.mxu0 %v1255
    %v1257 = vand.u32 %v59, 4294901760
    %v1258 = vsub.f32 %v59, %v1257
    %v1259 = vand.u32 %v1258, 4294901760
    %1260 = vmatpush1.msra.mxu0 %v1259
    %v1261 = vand.u32 %v52, 4294901760
    %v1262 = vsub.f32 %v52, %v1261
    %v1263 = vand.u32 %v1262, 4294901760
    %1264 = vmatprep.subr.mxu0 %v1263
    %v1265 = vand.u32 %v51, 4294901760
    %v1266 = vsub.f32 %v51, %v1265
    %v1267 = vand.u32 %v1266, 4294901760
    %1268 = vmatpush1.msra.mxu0 %v1267
    %v1269 = vand.u32 %v44, 4294901760
    %v1270 = vsub.f32 %v44, %v1269
    %v1271 = vand.u32 %v1270, 4294901760
    %1272 = vmatprep.subr.mxu0 %v1271
    %v1273 = vand.u32 %v43, 4294901760
    %v1274 = vsub.f32 %v43, %v1273
    %v1275 = vand.u32 %v1274, 4294901760
    %1276 = vmatpush1.msra.mxu0 %v1275
    %v1277 = vand.u32 %v36, 4294901760
    %v1278 = vsub.f32 %v36, %v1277
    %v1279 = vand.u32 %v1278, 4294901760
    %1280 = vmatprep.subr.mxu0 %v1279
    %v1281 = vand.u32 %v35, 4294901760
    %v1282 = vsub.f32 %v35, %v1281
    %v1283 = vand.u32 %v1282, 4294901760
    %1284 = vmatpush1.msra.mxu0 %v1283
    %v1285 = vand.u32 %v28, 4294901760
    %v1286 = vsub.f32 %v28, %v1285
    %v1287 = vand.u32 %v1286, 4294901760
    %1288 = vmatprep.subr.mxu0 %v1287
    %v1289 = vand.u32 %v27, 4294901760
    %v1290 = vsub.f32 %v27, %v1289
    %v1291 = vand.u32 %v1290, 4294901760
    %1292 = vmatpush1.msra.mxu0 %v1291
    %v1293 = vand.u32 %v276, 4294901760
    %v1294 = vsub.f32 %v276, %v1293
    %v1295 = vand.u32 %v1294, 4294901760
    %1296 = vmatprep.subr.mxu0 %v1295
    %v1297 = vand.u32 %v275, 4294901760
    %v1298 = vsub.f32 %v275, %v1297
    %v1299 = vand.u32 %v1298, 4294901760
    %1300 = vmatpush2.msra.mxu0 %v1299
    %v1301 = vand.u32 %v268, 4294901760
    %v1302 = vsub.f32 %v268, %v1301
    %v1303 = vand.u32 %v1302, 4294901760
    %1304 = vmatprep.subr.mxu0 %v1303
    %v1305 = vand.u32 %v267, 4294901760
    %v1306 = vsub.f32 %v267, %v1305
    %v1307 = vand.u32 %v1306, 4294901760
    %1308 = vmatpush2.msra.mxu0 %v1307
    %v1309 = vand.u32 %v260, 4294901760
    %v1310 = vsub.f32 %v260, %v1309
    %v1311 = vand.u32 %v1310, 4294901760
    %1312 = vmatprep.subr.mxu0 %v1311
    %v1313 = vand.u32 %v259, 4294901760
    %v1314 = vsub.f32 %v259, %v1313
    %v1315 = vand.u32 %v1314, 4294901760
    %1316 = vmatpush2.msra.mxu0 %v1315
    %v1317 = vand.u32 %v252, 4294901760
    %v1318 = vsub.f32 %v252, %v1317
    %v1319 = vand.u32 %v1318, 4294901760
    %1320 = vmatprep.subr.mxu0 %v1319
    %v1321 = vand.u32 %v251, 4294901760
    %v1322 = vsub.f32 %v251, %v1321
    %v1323 = vand.u32 %v1322, 4294901760
    %1324 = vmatpush2.msra.mxu0 %v1323
    %v1325 = vand.u32 %v244, 4294901760
    %v1326 = vsub.f32 %v244, %v1325
    %v1327 = vand.u32 %v1326, 4294901760
    %1328 = vmatprep.subr.mxu0 %v1327
    %v1329 = vand.u32 %v243, 4294901760
    %v1330 = vsub.f32 %v243, %v1329
    %v1331 = vand.u32 %v1330, 4294901760
    %1332 = vmatpush2.msra.mxu0 %v1331
    %v1333 = vand.u32 %v236, 4294901760
    %v1334 = vsub.f32 %v236, %v1333
    %v1335 = vand.u32 %v1334, 4294901760
    %1336 = vmatprep.subr.mxu0 %v1335
    %v1337 = vand.u32 %v235, 4294901760
    %v1338 = vsub.f32 %v235, %v1337
    %v1339 = vand.u32 %v1338, 4294901760
    %1340 = vmatpush2.msra.mxu0 %v1339
    %v1341 = vand.u32 %v228, 4294901760
    %v1342 = vsub.f32 %v228, %v1341
    %v1343 = vand.u32 %v1342, 4294901760
    %1344 = vmatprep.subr.mxu0 %v1343
    %v1345 = vand.u32 %v227, 4294901760
    %v1346 = vsub.f32 %v227, %v1345
    %v1347 = vand.u32 %v1346, 4294901760
    %1348 = vmatpush2.msra.mxu0 %v1347
    %v1349 = vand.u32 %v220, 4294901760
    %v1350 = vsub.f32 %v220, %v1349
    %v1351 = vand.u32 %v1350, 4294901760
    %1352 = vmatprep.subr.mxu0 %v1351
    %v1353 = vand.u32 %v219, 4294901760
    %v1354 = vsub.f32 %v219, %v1353
    %v1355 = vand.u32 %v1354, 4294901760
    %1356 = vmatpush2.msra.mxu0 %v1355
    %v1357 = vand.u32 %v212, 4294901760
    %v1358 = vsub.f32 %v212, %v1357
    %v1359 = vand.u32 %v1358, 4294901760
    %1360 = vmatprep.subr.mxu0 %v1359
    %v1361 = vand.u32 %v211, 4294901760
    %v1362 = vsub.f32 %v211, %v1361
    %v1363 = vand.u32 %v1362, 4294901760
    %1364 = vmatpush2.msra.mxu0 %v1363
    %v1365 = vand.u32 %v204, 4294901760
    %v1366 = vsub.f32 %v204, %v1365
    %v1367 = vand.u32 %v1366, 4294901760
    %1368 = vmatprep.subr.mxu0 %v1367
    %v1369 = vand.u32 %v203, 4294901760
    %v1370 = vsub.f32 %v203, %v1369
    %v1371 = vand.u32 %v1370, 4294901760
    %1372 = vmatpush2.msra.mxu0 %v1371
    %v1373 = vand.u32 %v196, 4294901760
    %v1374 = vsub.f32 %v196, %v1373
    %v1375 = vand.u32 %v1374, 4294901760
    %1376 = vmatprep.subr.mxu0 %v1375
    %v1377 = vand.u32 %v195, 4294901760
    %v1378 = vsub.f32 %v195, %v1377
    %v1379 = vand.u32 %v1378, 4294901760
    %1380 = vmatpush2.msra.mxu0 %v1379
    %v1381 = vand.u32 %v188, 4294901760
    %v1382 = vsub.f32 %v188, %v1381
    %v1383 = vand.u32 %v1382, 4294901760
    %1384 = vmatprep.subr.mxu0 %v1383
    %v1385 = vand.u32 %v187, 4294901760
    %v1386 = vsub.f32 %v187, %v1385
    %v1387 = vand.u32 %v1386, 4294901760
    %1388 = vmatpush2.msra.mxu0 %v1387
    %v1389 = vand.u32 %v180, 4294901760
    %v1390 = vsub.f32 %v180, %v1389
    %v1391 = vand.u32 %v1390, 4294901760
    %1392 = vmatprep.subr.mxu0 %v1391
    %v1393 = vand.u32 %v179, 4294901760
    %v1394 = vsub.f32 %v179, %v1393
    %v1395 = vand.u32 %v1394, 4294901760
    %1396 = vmatpush2.msra.mxu0 %v1395
    %v1397 = vand.u32 %v172, 4294901760
    %v1398 = vsub.f32 %v172, %v1397
    %v1399 = vand.u32 %v1398, 4294901760
    %1400 = vmatprep.subr.mxu0 %v1399
    %v1401 = vand.u32 %v171, 4294901760
    %v1402 = vsub.f32 %v171, %v1401
    %v1403 = vand.u32 %v1402, 4294901760
    %1404 = vmatpush2.msra.mxu0 %v1403
    %v1405 = vand.u32 %v164, 4294901760
    %v1406 = vsub.f32 %v164, %v1405
    %v1407 = vand.u32 %v1406, 4294901760
    %1408 = vmatprep.subr.mxu0 %v1407
    %v1409 = vand.u32 %v163, 4294901760
    %v1410 = vsub.f32 %v163, %v1409
    %v1411 = vand.u32 %v1410, 4294901760
    %1412 = vmatpush2.msra.mxu0 %v1411
    %v1413 = vand.u32 %v156, 4294901760
    %v1414 = vsub.f32 %v156, %v1413
    %v1415 = vand.u32 %v1414, 4294901760
    %1416 = vmatprep.subr.mxu0 %v1415
    %v1417 = vand.u32 %v155, 4294901760
    %v1418 = vsub.f32 %v155, %v1417
    %v1419 = vand.u32 %v1418, 4294901760
    %1420 = vmatpush2.msra.mxu0 %v1419
    %v1421 = vand.u32 %v26, 4294901760
    %1422 = vmatprep.mubr.f32.mxu0 %v1421
    %v1423 = vand.u32 %v25, 4294901760
    %1424 = vmatmul.mubr.f32.gmra.mxu0 %v1423
    %v1425 = vpop.f32.mrf.mxu0
    %v1426 = vadd.f32 %v1161, %v1425
    %v1427 = vpop.f32.mrf.mxu0
    %v1428 = vadd.f32 %v1163, %v1427
    %1429 = vdwg.mxu0
    %v1430 = vand.u32 %v148, 4294901760
    %1431 = vmatprep.subr.mxu0 %v1430
    %v1432 = vand.u32 %v147, 4294901760
    %1433 = vmatpush1.msra.mxu0 %v1432
    %v1434 = vand.u32 %v140, 4294901760
    %1435 = vmatprep.subr.mxu0 %v1434
    %v1436 = vand.u32 %v139, 4294901760
    %1437 = vmatpush1.msra.mxu0 %v1436
    %v1438 = vand.u32 %v132, 4294901760
    %1439 = vmatprep.subr.mxu0 %v1438
    %v1440 = vand.u32 %v131, 4294901760
    %1441 = vmatpush1.msra.mxu0 %v1440
    %v1442 = vand.u32 %v124, 4294901760
    %1443 = vmatprep.subr.mxu0 %v1442
    %v1444 = vand.u32 %v123, 4294901760
    %1445 = vmatpush1.msra.mxu0 %v1444
    %v1446 = vand.u32 %v116, 4294901760
    %1447 = vmatprep.subr.mxu0 %v1446
    %v1448 = vand.u32 %v115, 4294901760
    %1449 = vmatpush1.msra.mxu0 %v1448
    %v1450 = vand.u32 %v108, 4294901760
    %1451 = vmatprep.subr.mxu0 %v1450
    %v1452 = vand.u32 %v107, 4294901760
    %1453 = vmatpush1.msra.mxu0 %v1452
    %v1454 = vand.u32 %v100, 4294901760
    %1455 = vmatprep.subr.mxu0 %v1454
    %v1456 = vand.u32 %v99, 4294901760
    %1457 = vmatpush1.msra.mxu0 %v1456
    %v1458 = vand.u32 %v92, 4294901760
    %1459 = vmatprep.subr.mxu0 %v1458
    %v1460 = vand.u32 %v91, 4294901760
    %1461 = vmatpush1.msra.mxu0 %v1460
    %v1462 = vand.u32 %v84, 4294901760
    %1463 = vmatprep.subr.mxu0 %v1462
    %v1464 = vand.u32 %v83, 4294901760
    %1465 = vmatpush1.msra.mxu0 %v1464
    %v1466 = vand.u32 %v76, 4294901760
    %1467 = vmatprep.subr.mxu0 %v1466
    %v1468 = vand.u32 %v75, 4294901760
    %1469 = vmatpush1.msra.mxu0 %v1468
    %v1470 = vand.u32 %v68, 4294901760
    %1471 = vmatprep.subr.mxu0 %v1470
    %v1472 = vand.u32 %v67, 4294901760
    %1473 = vmatpush1.msra.mxu0 %v1472
    %v1474 = vand.u32 %v60, 4294901760
    %1475 = vmatprep.subr.mxu0 %v1474
    %v1476 = vand.u32 %v59, 4294901760
    %1477 = vmatpush1.msra.mxu0 %v1476
    %v1478 = vand.u32 %v52, 4294901760
    %1479 = vmatprep.subr.mxu0 %v1478
    %v1480 = vand.u32 %v51, 4294901760
    %1481 = vmatpush1.msra.mxu0 %v1480
    %v1482 = vand.u32 %v44, 4294901760
    %1483 = vmatprep.subr.mxu0 %v1482
    %v1484 = vand.u32 %v43, 4294901760
    %1485 = vmatpush1.msra.mxu0 %v1484
    %v1486 = vand.u32 %v36, 4294901760
    %1487 = vmatprep.subr.mxu0 %v1486
    %v1488 = vand.u32 %v35, 4294901760
    %1489 = vmatpush1.msra.mxu0 %v1488
    %v1490 = vand.u32 %v28, 4294901760
    %1491 = vmatprep.subr.mxu0 %v1490
    %v1492 = vand.u32 %v27, 4294901760
    %1493 = vmatpush1.msra.mxu0 %v1492
    %v1494 = vand.u32 %v276, 4294901760
    %1495 = vmatprep.subr.mxu0 %v1494
    %v1496 = vand.u32 %v275, 4294901760
    %1497 = vmatpush2.msra.mxu0 %v1496
    %v1498 = vand.u32 %v268, 4294901760
    %1499 = vmatprep.subr.mxu0 %v1498
    %v1500 = vand.u32 %v267, 4294901760
    %1501 = vmatpush2.msra.mxu0 %v1500
    %v1502 = vand.u32 %v260, 4294901760
    %1503 = vmatprep.subr.mxu0 %v1502
    %v1504 = vand.u32 %v259, 4294901760
    %1505 = vmatpush2.msra.mxu0 %v1504
    %v1506 = vand.u32 %v252, 4294901760
    %1507 = vmatprep.subr.mxu0 %v1506
    %v1508 = vand.u32 %v251, 4294901760
    %1509 = vmatpush2.msra.mxu0 %v1508
    %v1510 = vand.u32 %v244, 4294901760
    %1511 = vmatprep.subr.mxu0 %v1510
    %v1512 = vand.u32 %v243, 4294901760
    %1513 = vmatpush2.msra.mxu0 %v1512
    %v1514 = vand.u32 %v236, 4294901760
    %1515 = vmatprep.subr.mxu0 %v1514
    %v1516 = vand.u32 %v235, 4294901760
    %1517 = vmatpush2.msra.mxu0 %v1516
    %v1518 = vand.u32 %v228, 4294901760
    %1519 = vmatprep.subr.mxu0 %v1518
    %v1520 = vand.u32 %v227, 4294901760
    %1521 = vmatpush2.msra.mxu0 %v1520
    %v1522 = vand.u32 %v220, 4294901760
    %1523 = vmatprep.subr.mxu0 %v1522
    %v1524 = vand.u32 %v219, 4294901760
    %1525 = vmatpush2.msra.mxu0 %v1524
    %v1526 = vand.u32 %v212, 4294901760
    %1527 = vmatprep.subr.mxu0 %v1526
    %v1528 = vand.u32 %v211, 4294901760
    %1529 = vmatpush2.msra.mxu0 %v1528
    %v1530 = vand.u32 %v204, 4294901760
    %1531 = vmatprep.subr.mxu0 %v1530
    %v1532 = vand.u32 %v203, 4294901760
    %1533 = vmatpush2.msra.mxu0 %v1532
    %v1534 = vand.u32 %v196, 4294901760
    %1535 = vmatprep.subr.mxu0 %v1534
    %v1536 = vand.u32 %v195, 4294901760
    %1537 = vmatpush2.msra.mxu0 %v1536
    %v1538 = vand.u32 %v188, 4294901760
    %1539 = vmatprep.subr.mxu0 %v1538
    %v1540 = vand.u32 %v187, 4294901760
    %1541 = vmatpush2.msra.mxu0 %v1540
    %v1542 = vand.u32 %v180, 4294901760
    %1543 = vmatprep.subr.mxu0 %v1542
    %v1544 = vand.u32 %v179, 4294901760
    %1545 = vmatpush2.msra.mxu0 %v1544
    %v1546 = vand.u32 %v172, 4294901760
    %1547 = vmatprep.subr.mxu0 %v1546
    %v1548 = vand.u32 %v171, 4294901760
    %1549 = vmatpush2.msra.mxu0 %v1548
    %v1550 = vand.u32 %v164, 4294901760
    %1551 = vmatprep.subr.mxu0 %v1550
    %v1552 = vand.u32 %v163, 4294901760
    %1553 = vmatpush2.msra.mxu0 %v1552
    %v1554 = vand.u32 %v156, 4294901760
    %1555 = vmatprep.subr.mxu0 %v1554
    %v1556 = vand.u32 %v155, 4294901760
    %1557 = vmatpush2.msra.mxu0 %v1556
    %v1558 = vand.u32 %v26, 4294901760
    %1559 = vmatprep.mubr.f32.mxu0 %v1558
    %v1560 = vand.u32 %v25, 4294901760
    %1561 = vmatmul.mubr.f32.gmra.mxu0 %v1560
    %v1562 = vpop.f32.mrf.mxu0
    %v1563 = vadd.f32 %v1426, %v1562
    %v1564 = vpop.f32.mrf.mxu0
    %v1565 = vadd.f32 %v1428, %v1564
    %1566 = vdwg.mxu0
    %v1567 = vand.u32 %v150, 4294901760
    %1568 = vmatprep.subr.mxu0 %v1567
    %v1569 = vand.u32 %v149, 4294901760
    %1570 = vmatpush1.msra.mxu0 %v1569
    %v1571 = vand.u32 %v142, 4294901760
    %1572 = vmatprep.subr.mxu0 %v1571
    %v1573 = vand.u32 %v141, 4294901760
    %1574 = vmatpush1.msra.mxu0 %v1573
    %v1575 = vand.u32 %v134, 4294901760
    %1576 = vmatprep.subr.mxu0 %v1575
    %v1577 = vand.u32 %v133, 4294901760
    %1578 = vmatpush1.msra.mxu0 %v1577
    %v1579 = vand.u32 %v126, 4294901760
    %1580 = vmatprep.subr.mxu0 %v1579
    %v1581 = vand.u32 %v125, 4294901760
    %1582 = vmatpush1.msra.mxu0 %v1581
    %v1583 = vand.u32 %v118, 4294901760
    %1584 = vmatprep.subr.mxu0 %v1583
    %v1585 = vand.u32 %v117, 4294901760
    %1586 = vmatpush1.msra.mxu0 %v1585
    %v1587 = vand.u32 %v110, 4294901760
    %1588 = vmatprep.subr.mxu0 %v1587
    %v1589 = vand.u32 %v109, 4294901760
    %1590 = vmatpush1.msra.mxu0 %v1589
    %v1591 = vand.u32 %v102, 4294901760
    %1592 = vmatprep.subr.mxu0 %v1591
    %v1593 = vand.u32 %v101, 4294901760
    %1594 = vmatpush1.msra.mxu0 %v1593
    %v1595 = vand.u32 %v94, 4294901760
    %1596 = vmatprep.subr.mxu0 %v1595
    %v1597 = vand.u32 %v93, 4294901760
    %1598 = vmatpush1.msra.mxu0 %v1597
    %v1599 = vand.u32 %v86, 4294901760
    %1600 = vmatprep.subr.mxu0 %v1599
    %v1601 = vand.u32 %v85, 4294901760
    %1602 = vmatpush1.msra.mxu0 %v1601
    %v1603 = vand.u32 %v78, 4294901760
    %1604 = vmatprep.subr.mxu0 %v1603
    %v1605 = vand.u32 %v77, 4294901760
    %1606 = vmatpush1.msra.mxu0 %v1605
    %v1607 = vand.u32 %v70, 4294901760
    %1608 = vmatprep.subr.mxu0 %v1607
    %v1609 = vand.u32 %v69, 4294901760
    %1610 = vmatpush1.msra.mxu0 %v1609
    %v1611 = vand.u32 %v62, 4294901760
    %1612 = vmatprep.subr.mxu0 %v1611
    %v1613 = vand.u32 %v61, 4294901760
    %1614 = vmatpush1.msra.mxu0 %v1613
    %v1615 = vand.u32 %v54, 4294901760
    %1616 = vmatprep.subr.mxu0 %v1615
    %v1617 = vand.u32 %v53, 4294901760
    %1618 = vmatpush1.msra.mxu0 %v1617
    %v1619 = vand.u32 %v46, 4294901760
    %1620 = vmatprep.subr.mxu0 %v1619
    %v1621 = vand.u32 %v45, 4294901760
    %1622 = vmatpush1.msra.mxu0 %v1621
    %v1623 = vand.u32 %v38, 4294901760
    %1624 = vmatprep.subr.mxu0 %v1623
    %v1625 = vand.u32 %v37, 4294901760
    %1626 = vmatpush1.msra.mxu0 %v1625
    %v1627 = vand.u32 %v30, 4294901760
    %1628 = vmatprep.subr.mxu0 %v1627
    %v1629 = vand.u32 %v29, 4294901760
    %1630 = vmatpush1.msra.mxu0 %v1629
    %v1631 = vand.u32 %v278, 4294901760
    %1632 = vmatprep.subr.mxu0 %v1631
    %v1633 = vand.u32 %v277, 4294901760
    %1634 = vmatpush2.msra.mxu0 %v1633
    %v1635 = vand.u32 %v270, 4294901760
    %1636 = vmatprep.subr.mxu0 %v1635
    %v1637 = vand.u32 %v269, 4294901760
    %1638 = vmatpush2.msra.mxu0 %v1637
    %v1639 = vand.u32 %v262, 4294901760
    %1640 = vmatprep.subr.mxu0 %v1639
    %v1641 = vand.u32 %v261, 4294901760
    %1642 = vmatpush2.msra.mxu0 %v1641
    %v1643 = vand.u32 %v254, 4294901760
    %1644 = vmatprep.subr.mxu0 %v1643
    %v1645 = vand.u32 %v253, 4294901760
    %1646 = vmatpush2.msra.mxu0 %v1645
    %v1647 = vand.u32 %v246, 4294901760
    %1648 = vmatprep.subr.mxu0 %v1647
    %v1649 = vand.u32 %v245, 4294901760
    %1650 = vmatpush2.msra.mxu0 %v1649
    %v1651 = vand.u32 %v238, 4294901760
    %1652 = vmatprep.subr.mxu0 %v1651
    %v1653 = vand.u32 %v237, 4294901760
    %1654 = vmatpush2.msra.mxu0 %v1653
    %v1655 = vand.u32 %v230, 4294901760
    %1656 = vmatprep.subr.mxu0 %v1655
    %v1657 = vand.u32 %v229, 4294901760
    %1658 = vmatpush2.msra.mxu0 %v1657
    %v1659 = vand.u32 %v222, 4294901760
    %1660 = vmatprep.subr.mxu0 %v1659
    %v1661 = vand.u32 %v221, 4294901760
    %1662 = vmatpush2.msra.mxu0 %v1661
    %v1663 = vand.u32 %v214, 4294901760
    %1664 = vmatprep.subr.mxu0 %v1663
    %v1665 = vand.u32 %v213, 4294901760
    %1666 = vmatpush2.msra.mxu0 %v1665
    %v1667 = vand.u32 %v206, 4294901760
    %1668 = vmatprep.subr.mxu0 %v1667
    %v1669 = vand.u32 %v205, 4294901760
    %1670 = vmatpush2.msra.mxu0 %v1669
    %v1671 = vand.u32 %v198, 4294901760
    %1672 = vmatprep.subr.mxu0 %v1671
    %v1673 = vand.u32 %v197, 4294901760
    %1674 = vmatpush2.msra.mxu0 %v1673
    %v1675 = vand.u32 %v190, 4294901760
    %1676 = vmatprep.subr.mxu0 %v1675
    %v1677 = vand.u32 %v189, 4294901760
    %1678 = vmatpush2.msra.mxu0 %v1677
    %v1679 = vand.u32 %v182, 4294901760
    %1680 = vmatprep.subr.mxu0 %v1679
    %v1681 = vand.u32 %v181, 4294901760
    %1682 = vmatpush2.msra.mxu0 %v1681
    %v1683 = vand.u32 %v174, 4294901760
    %1684 = vmatprep.subr.mxu0 %v1683
    %v1685 = vand.u32 %v173, 4294901760
    %1686 = vmatpush2.msra.mxu0 %v1685
    %v1687 = vand.u32 %v166, 4294901760
    %1688 = vmatprep.subr.mxu0 %v1687
    %v1689 = vand.u32 %v165, 4294901760
    %1690 = vmatpush2.msra.mxu0 %v1689
    %v1691 = vand.u32 %v158, 4294901760
    %1692 = vmatprep.subr.mxu0 %v1691
    %v1693 = vand.u32 %v157, 4294901760
    %1694 = vmatpush2.msra.mxu0 %v1693
    %v1695 = vand.u32 %v26, 4294901760
    %v1696 = vsub.f32 %v26, %v1695
    %v1697 = vand.u32 %v1696, 4294901760
    %v1698 = vsub.f32 %v1696, %v1697
    %v1699 = vand.u32 %v1698, 4294901760
    %1700 = vmatprep.mubr.f32.mxu0 %v1699
    %v1701 = vand.u32 %v25, 4294901760
    %v1702 = vsub.f32 %v25, %v1701
    %v1703 = vand.u32 %v1702, 4294901760
    %v1704 = vsub.f32 %v1702, %v1703
    %v1705 = vand.u32 %v1704, 4294901760
    %1706 = vmatmul.mubr.f32.gmra.mxu0 %v1705
    %v1707 = vpop.f32.mrf.mxu0
    %v1708 = vadd.f32 0.0, %v1707
    %v1709 = vpop.f32.mrf.mxu0
    %v1710 = vadd.f32 0.0, %v1709
    %1711 = vdwg.mxu0
    %v1712 = vand.u32 %v150, 4294901760
    %v1713 = vsub.f32 %v150, %v1712
    %v1714 = vand.u32 %v1713, 4294901760
    %v1715 = vsub.f32 %v1713, %v1714
    %v1716 = vand.u32 %v1715, 4294901760
    %1717 = vmatprep.subr.mxu0 %v1716
    %v1718 = vand.u32 %v149, 4294901760
    %v1719 = vsub.f32 %v149, %v1718
    %v1720 = vand.u32 %v1719, 4294901760
    %v1721 = vsub.f32 %v1719, %v1720
    %v1722 = vand.u32 %v1721, 4294901760
    %1723 = vmatpush1.msra.mxu0 %v1722
    %v1724 = vand.u32 %v142, 4294901760
    %v1725 = vsub.f32 %v142, %v1724
    %v1726 = vand.u32 %v1725, 4294901760
    %v1727 = vsub.f32 %v1725, %v1726
    %v1728 = vand.u32 %v1727, 4294901760
    %1729 = vmatprep.subr.mxu0 %v1728
    %v1730 = vand.u32 %v141, 4294901760
    %v1731 = vsub.f32 %v141, %v1730
    %v1732 = vand.u32 %v1731, 4294901760
    %v1733 = vsub.f32 %v1731, %v1732
    %v1734 = vand.u32 %v1733, 4294901760
    %1735 = vmatpush1.msra.mxu0 %v1734
    %v1736 = vand.u32 %v134, 4294901760
    %v1737 = vsub.f32 %v134, %v1736
    %v1738 = vand.u32 %v1737, 4294901760
    %v1739 = vsub.f32 %v1737, %v1738
    %v1740 = vand.u32 %v1739, 4294901760
    %1741 = vmatprep.subr.mxu0 %v1740
    %v1742 = vand.u32 %v133, 4294901760
    %v1743 = vsub.f32 %v133, %v1742
    %v1744 = vand.u32 %v1743, 4294901760
    %v1745 = vsub.f32 %v1743, %v1744
    %v1746 = vand.u32 %v1745, 4294901760
    %1747 = vmatpush1.msra.mxu0 %v1746
    %v1748 = vand.u32 %v126, 4294901760
    %v1749 = vsub.f32 %v126, %v1748
    %v1750 = vand.u32 %v1749, 4294901760
    %v1751 = vsub.f32 %v1749, %v1750
    %v1752 = vand.u32 %v1751, 4294901760
    %1753 = vmatprep.subr.mxu0 %v1752
    %v1754 = vand.u32 %v125, 4294901760
    %v1755 = vsub.f32 %v125, %v1754
    %v1756 = vand.u32 %v1755, 4294901760
    %v1757 = vsub.f32 %v1755, %v1756
    %v1758 = vand.u32 %v1757, 4294901760
    %1759 = vmatpush1.msra.mxu0 %v1758
    %v1760 = vand.u32 %v118, 4294901760
    %v1761 = vsub.f32 %v118, %v1760
    %v1762 = vand.u32 %v1761, 4294901760
    %v1763 = vsub.f32 %v1761, %v1762
    %v1764 = vand.u32 %v1763, 4294901760
    %1765 = vmatprep.subr.mxu0 %v1764
    %v1766 = vand.u32 %v117, 4294901760
    %v1767 = vsub.f32 %v117, %v1766
    %v1768 = vand.u32 %v1767, 4294901760
    %v1769 = vsub.f32 %v1767, %v1768
    %v1770 = vand.u32 %v1769, 4294901760
    %1771 = vmatpush1.msra.mxu0 %v1770
    %v1772 = vand.u32 %v110, 4294901760
    %v1773 = vsub.f32 %v110, %v1772
    %v1774 = vand.u32 %v1773, 4294901760
    %v1775 = vsub.f32 %v1773, %v1774
    %v1776 = vand.u32 %v1775, 4294901760
    %1777 = vmatprep.subr.mxu0 %v1776
    %v1778 = vand.u32 %v109, 4294901760
    %v1779 = vsub.f32 %v109, %v1778
    %v1780 = vand.u32 %v1779, 4294901760
    %v1781 = vsub.f32 %v1779, %v1780
    %v1782 = vand.u32 %v1781, 4294901760
    %1783 = vmatpush1.msra.mxu0 %v1782
    %v1784 = vand.u32 %v102, 4294901760
    %v1785 = vsub.f32 %v102, %v1784
    %v1786 = vand.u32 %v1785, 4294901760
    %v1787 = vsub.f32 %v1785, %v1786
    %v1788 = vand.u32 %v1787, 4294901760
    %1789 = vmatprep.subr.mxu0 %v1788
    %v1790 = vand.u32 %v101, 4294901760
    %v1791 = vsub.f32 %v101, %v1790
    %v1792 = vand.u32 %v1791, 4294901760
    %v1793 = vsub.f32 %v1791, %v1792
    %v1794 = vand.u32 %v1793, 4294901760
    %1795 = vmatpush1.msra.mxu0 %v1794
    %v1796 = vand.u32 %v94, 4294901760
    %v1797 = vsub.f32 %v94, %v1796
    %v1798 = vand.u32 %v1797, 4294901760
    %v1799 = vsub.f32 %v1797, %v1798
    %v1800 = vand.u32 %v1799, 4294901760
    %1801 = vmatprep.subr.mxu0 %v1800
    %v1802 = vand.u32 %v93, 4294901760
    %v1803 = vsub.f32 %v93, %v1802
    %v1804 = vand.u32 %v1803, 4294901760
    %v1805 = vsub.f32 %v1803, %v1804
    %v1806 = vand.u32 %v1805, 4294901760
    %1807 = vmatpush1.msra.mxu0 %v1806
    %v1808 = vand.u32 %v86, 4294901760
    %v1809 = vsub.f32 %v86, %v1808
    %v1810 = vand.u32 %v1809, 4294901760
    %v1811 = vsub.f32 %v1809, %v1810
    %v1812 = vand.u32 %v1811, 4294901760
    %1813 = vmatprep.subr.mxu0 %v1812
    %v1814 = vand.u32 %v85, 4294901760
    %v1815 = vsub.f32 %v85, %v1814
    %v1816 = vand.u32 %v1815, 4294901760
    %v1817 = vsub.f32 %v1815, %v1816
    %v1818 = vand.u32 %v1817, 4294901760
    %1819 = vmatpush1.msra.mxu0 %v1818
    %v1820 = vand.u32 %v78, 4294901760
    %v1821 = vsub.f32 %v78, %v1820
    %v1822 = vand.u32 %v1821, 4294901760
    %v1823 = vsub.f32 %v1821, %v1822
    %v1824 = vand.u32 %v1823, 4294901760
    %1825 = vmatprep.subr.mxu0 %v1824
    %v1826 = vand.u32 %v77, 4294901760
    %v1827 = vsub.f32 %v77, %v1826
    %v1828 = vand.u32 %v1827, 4294901760
    %v1829 = vsub.f32 %v1827, %v1828
    %v1830 = vand.u32 %v1829, 4294901760
    %1831 = vmatpush1.msra.mxu0 %v1830
    %v1832 = vand.u32 %v70, 4294901760
    %v1833 = vsub.f32 %v70, %v1832
    %v1834 = vand.u32 %v1833, 4294901760
    %v1835 = vsub.f32 %v1833, %v1834
    %v1836 = vand.u32 %v1835, 4294901760
    %1837 = vmatprep.subr.mxu0 %v1836
    %v1838 = vand.u32 %v69, 4294901760
    %v1839 = vsub.f32 %v69, %v1838
    %v1840 = vand.u32 %v1839, 4294901760
    %v1841 = vsub.f32 %v1839, %v1840
    %v1842 = vand.u32 %v1841, 4294901760
    %1843 = vmatpush1.msra.mxu0 %v1842
    %v1844 = vand.u32 %v62, 4294901760
    %v1845 = vsub.f32 %v62, %v1844
    %v1846 = vand.u32 %v1845, 4294901760
    %v1847 = vsub.f32 %v1845, %v1846
    %v1848 = vand.u32 %v1847, 4294901760
    %1849 = vmatprep.subr.mxu0 %v1848
    %v1850 = vand.u32 %v61, 4294901760
    %v1851 = vsub.f32 %v61, %v1850
    %v1852 = vand.u32 %v1851, 4294901760
    %v1853 = vsub.f32 %v1851, %v1852
    %v1854 = vand.u32 %v1853, 4294901760
    %1855 = vmatpush1.msra.mxu0 %v1854
    %v1856 = vand.u32 %v54, 4294901760
    %v1857 = vsub.f32 %v54, %v1856
    %v1858 = vand.u32 %v1857, 4294901760
    %v1859 = vsub.f32 %v1857, %v1858
    %v1860 = vand.u32 %v1859, 4294901760
    %1861 = vmatprep.subr.mxu0 %v1860
    %v1862 = vand.u32 %v53, 4294901760
    %v1863 = vsub.f32 %v53, %v1862
    %v1864 = vand.u32 %v1863, 4294901760
    %v1865 = vsub.f32 %v1863, %v1864
    %v1866 = vand.u32 %v1865, 4294901760
    %1867 = vmatpush1.msra.mxu0 %v1866
    %v1868 = vand.u32 %v46, 4294901760
    %v1869 = vsub.f32 %v46, %v1868
    %v1870 = vand.u32 %v1869, 4294901760
    %v1871 = vsub.f32 %v1869, %v1870
    %v1872 = vand.u32 %v1871, 4294901760
    %1873 = vmatprep.subr.mxu0 %v1872
    %v1874 = vand.u32 %v45, 4294901760
    %v1875 = vsub.f32 %v45, %v1874
    %v1876 = vand.u32 %v1875, 4294901760
    %v1877 = vsub.f32 %v1875, %v1876
    %v1878 = vand.u32 %v1877, 4294901760
    %1879 = vmatpush1.msra.mxu0 %v1878
    %v1880 = vand.u32 %v38, 4294901760
    %v1881 = vsub.f32 %v38, %v1880
    %v1882 = vand.u32 %v1881, 4294901760
    %v1883 = vsub.f32 %v1881, %v1882
    %v1884 = vand.u32 %v1883, 4294901760
    %1885 = vmatprep.subr.mxu0 %v1884
    %v1886 = vand.u32 %v37, 4294901760
    %v1887 = vsub.f32 %v37, %v1886
    %v1888 = vand.u32 %v1887, 4294901760
    %v1889 = vsub.f32 %v1887, %v1888
    %v1890 = vand.u32 %v1889, 4294901760
    %1891 = vmatpush1.msra.mxu0 %v1890
    %v1892 = vand.u32 %v30, 4294901760
    %v1893 = vsub.f32 %v30, %v1892
    %v1894 = vand.u32 %v1893, 4294901760
    %v1895 = vsub.f32 %v1893, %v1894
    %v1896 = vand.u32 %v1895, 4294901760
    %1897 = vmatprep.subr.mxu0 %v1896
    %v1898 = vand.u32 %v29, 4294901760
    %v1899 = vsub.f32 %v29, %v1898
    %v1900 = vand.u32 %v1899, 4294901760
    %v1901 = vsub.f32 %v1899, %v1900
    %v1902 = vand.u32 %v1901, 4294901760
    %1903 = vmatpush1.msra.mxu0 %v1902
    %v1904 = vand.u32 %v278, 4294901760
    %v1905 = vsub.f32 %v278, %v1904
    %v1906 = vand.u32 %v1905, 4294901760
    %v1907 = vsub.f32 %v1905, %v1906
    %v1908 = vand.u32 %v1907, 4294901760
    %1909 = vmatprep.subr.mxu0 %v1908
    %v1910 = vand.u32 %v277, 4294901760
    %v1911 = vsub.f32 %v277, %v1910
    %v1912 = vand.u32 %v1911, 4294901760
    %v1913 = vsub.f32 %v1911, %v1912
    %v1914 = vand.u32 %v1913, 4294901760
    %1915 = vmatpush2.msra.mxu0 %v1914
    %v1916 = vand.u32 %v270, 4294901760
    %v1917 = vsub.f32 %v270, %v1916
    %v1918 = vand.u32 %v1917, 4294901760
    %v1919 = vsub.f32 %v1917, %v1918
    %v1920 = vand.u32 %v1919, 4294901760
    %1921 = vmatprep.subr.mxu0 %v1920
    %v1922 = vand.u32 %v269, 4294901760
    %v1923 = vsub.f32 %v269, %v1922
    %v1924 = vand.u32 %v1923, 4294901760
    %v1925 = vsub.f32 %v1923, %v1924
    %v1926 = vand.u32 %v1925, 4294901760
    %1927 = vmatpush2.msra.mxu0 %v1926
    %v1928 = vand.u32 %v262, 4294901760
    %v1929 = vsub.f32 %v262, %v1928
    %v1930 = vand.u32 %v1929, 4294901760
    %v1931 = vsub.f32 %v1929, %v1930
    %v1932 = vand.u32 %v1931, 4294901760
    %1933 = vmatprep.subr.mxu0 %v1932
    %v1934 = vand.u32 %v261, 4294901760
    %v1935 = vsub.f32 %v261, %v1934
    %v1936 = vand.u32 %v1935, 4294901760
    %v1937 = vsub.f32 %v1935, %v1936
    %v1938 = vand.u32 %v1937, 4294901760
    %1939 = vmatpush2.msra.mxu0 %v1938
    %v1940 = vand.u32 %v254, 4294901760
    %v1941 = vsub.f32 %v254, %v1940
    %v1942 = vand.u32 %v1941, 4294901760
    %v1943 = vsub.f32 %v1941, %v1942
    %v1944 = vand.u32 %v1943, 4294901760
    %1945 = vmatprep.subr.mxu0 %v1944
    %v1946 = vand.u32 %v253, 4294901760
    %v1947 = vsub.f32 %v253, %v1946
    %v1948 = vand.u32 %v1947, 4294901760
    %v1949 = vsub.f32 %v1947, %v1948
    %v1950 = vand.u32 %v1949, 4294901760
    %1951 = vmatpush2.msra.mxu0 %v1950
    %v1952 = vand.u32 %v246, 4294901760
    %v1953 = vsub.f32 %v246, %v1952
    %v1954 = vand.u32 %v1953, 4294901760
    %v1955 = vsub.f32 %v1953, %v1954
    %v1956 = vand.u32 %v1955, 4294901760
    %1957 = vmatprep.subr.mxu0 %v1956
    %v1958 = vand.u32 %v245, 4294901760
    %v1959 = vsub.f32 %v245, %v1958
    %v1960 = vand.u32 %v1959, 4294901760
    %v1961 = vsub.f32 %v1959, %v1960
    %v1962 = vand.u32 %v1961, 4294901760
    %1963 = vmatpush2.msra.mxu0 %v1962
    %v1964 = vand.u32 %v238, 4294901760
    %v1965 = vsub.f32 %v238, %v1964
    %v1966 = vand.u32 %v1965, 4294901760
    %v1967 = vsub.f32 %v1965, %v1966
    %v1968 = vand.u32 %v1967, 4294901760
    %1969 = vmatprep.subr.mxu0 %v1968
    %v1970 = vand.u32 %v237, 4294901760
    %v1971 = vsub.f32 %v237, %v1970
    %v1972 = vand.u32 %v1971, 4294901760
    %v1973 = vsub.f32 %v1971, %v1972
    %v1974 = vand.u32 %v1973, 4294901760
    %1975 = vmatpush2.msra.mxu0 %v1974
    %v1976 = vand.u32 %v230, 4294901760
    %v1977 = vsub.f32 %v230, %v1976
    %v1978 = vand.u32 %v1977, 4294901760
    %v1979 = vsub.f32 %v1977, %v1978
    %v1980 = vand.u32 %v1979, 4294901760
    %1981 = vmatprep.subr.mxu0 %v1980
    %v1982 = vand.u32 %v229, 4294901760
    %v1983 = vsub.f32 %v229, %v1982
    %v1984 = vand.u32 %v1983, 4294901760
    %v1985 = vsub.f32 %v1983, %v1984
    %v1986 = vand.u32 %v1985, 4294901760
    %1987 = vmatpush2.msra.mxu0 %v1986
    %v1988 = vand.u32 %v222, 4294901760
    %v1989 = vsub.f32 %v222, %v1988
    %v1990 = vand.u32 %v1989, 4294901760
    %v1991 = vsub.f32 %v1989, %v1990
    %v1992 = vand.u32 %v1991, 4294901760
    %1993 = vmatprep.subr.mxu0 %v1992
    %v1994 = vand.u32 %v221, 4294901760
    %v1995 = vsub.f32 %v221, %v1994
    %v1996 = vand.u32 %v1995, 4294901760
    %v1997 = vsub.f32 %v1995, %v1996
    %v1998 = vand.u32 %v1997, 4294901760
    %1999 = vmatpush2.msra.mxu0 %v1998
    %v2000 = vand.u32 %v214, 4294901760
    %v2001 = vsub.f32 %v214, %v2000
    %v2002 = vand.u32 %v2001, 4294901760
    %v2003 = vsub.f32 %v2001, %v2002
    %v2004 = vand.u32 %v2003, 4294901760
    %2005 = vmatprep.subr.mxu0 %v2004
    %v2006 = vand.u32 %v213, 4294901760
    %v2007 = vsub.f32 %v213, %v2006
    %v2008 = vand.u32 %v2007, 4294901760
    %v2009 = vsub.f32 %v2007, %v2008
    %v2010 = vand.u32 %v2009, 4294901760
    %2011 = vmatpush2.msra.mxu0 %v2010
    %v2012 = vand.u32 %v206, 4294901760
    %v2013 = vsub.f32 %v206, %v2012
    %v2014 = vand.u32 %v2013, 4294901760
    %v2015 = vsub.f32 %v2013, %v2014
    %v2016 = vand.u32 %v2015, 4294901760
    %2017 = vmatprep.subr.mxu0 %v2016
    %v2018 = vand.u32 %v205, 4294901760
    %v2019 = vsub.f32 %v205, %v2018
    %v2020 = vand.u32 %v2019, 4294901760
    %v2021 = vsub.f32 %v2019, %v2020
    %v2022 = vand.u32 %v2021, 4294901760
    %2023 = vmatpush2.msra.mxu0 %v2022
    %v2024 = vand.u32 %v198, 4294901760
    %v2025 = vsub.f32 %v198, %v2024
    %v2026 = vand.u32 %v2025, 4294901760
    %v2027 = vsub.f32 %v2025, %v2026
    %v2028 = vand.u32 %v2027, 4294901760
    %2029 = vmatprep.subr.mxu0 %v2028
    %v2030 = vand.u32 %v197, 4294901760
    %v2031 = vsub.f32 %v197, %v2030
    %v2032 = vand.u32 %v2031, 4294901760
    %v2033 = vsub.f32 %v2031, %v2032
    %v2034 = vand.u32 %v2033, 4294901760
    %2035 = vmatpush2.msra.mxu0 %v2034
    %v2036 = vand.u32 %v190, 4294901760
    %v2037 = vsub.f32 %v190, %v2036
    %v2038 = vand.u32 %v2037, 4294901760
    %v2039 = vsub.f32 %v2037, %v2038
    %v2040 = vand.u32 %v2039, 4294901760
    %2041 = vmatprep.subr.mxu0 %v2040
    %v2042 = vand.u32 %v189, 4294901760
    %v2043 = vsub.f32 %v189, %v2042
    %v2044 = vand.u32 %v2043, 4294901760
    %v2045 = vsub.f32 %v2043, %v2044
    %v2046 = vand.u32 %v2045, 4294901760
    %2047 = vmatpush2.msra.mxu0 %v2046
    %v2048 = vand.u32 %v182, 4294901760
    %v2049 = vsub.f32 %v182, %v2048
    %v2050 = vand.u32 %v2049, 4294901760
    %v2051 = vsub.f32 %v2049, %v2050
    %v2052 = vand.u32 %v2051, 4294901760
    %2053 = vmatprep.subr.mxu0 %v2052
    %v2054 = vand.u32 %v181, 4294901760
    %v2055 = vsub.f32 %v181, %v2054
    %v2056 = vand.u32 %v2055, 4294901760
    %v2057 = vsub.f32 %v2055, %v2056
    %v2058 = vand.u32 %v2057, 4294901760
    %2059 = vmatpush2.msra.mxu0 %v2058
    %v2060 = vand.u32 %v174, 4294901760
    %v2061 = vsub.f32 %v174, %v2060
    %v2062 = vand.u32 %v2061, 4294901760
    %v2063 = vsub.f32 %v2061, %v2062
    %v2064 = vand.u32 %v2063, 4294901760
    %2065 = vmatprep.subr.mxu0 %v2064
    %v2066 = vand.u32 %v173, 4294901760
    %v2067 = vsub.f32 %v173, %v2066
    %v2068 = vand.u32 %v2067, 4294901760
    %v2069 = vsub.f32 %v2067, %v2068
    %v2070 = vand.u32 %v2069, 4294901760
    %2071 = vmatpush2.msra.mxu0 %v2070
    %v2072 = vand.u32 %v166, 4294901760
    %v2073 = vsub.f32 %v166, %v2072
    %v2074 = vand.u32 %v2073, 4294901760
    %v2075 = vsub.f32 %v2073, %v2074
    %v2076 = vand.u32 %v2075, 4294901760
    %2077 = vmatprep.subr.mxu0 %v2076
    %v2078 = vand.u32 %v165, 4294901760
    %v2079 = vsub.f32 %v165, %v2078
    %v2080 = vand.u32 %v2079, 4294901760
    %v2081 = vsub.f32 %v2079, %v2080
    %v2082 = vand.u32 %v2081, 4294901760
    %2083 = vmatpush2.msra.mxu0 %v2082
    %v2084 = vand.u32 %v158, 4294901760
    %v2085 = vsub.f32 %v158, %v2084
    %v2086 = vand.u32 %v2085, 4294901760
    %v2087 = vsub.f32 %v2085, %v2086
    %v2088 = vand.u32 %v2087, 4294901760
    %2089 = vmatprep.subr.mxu0 %v2088
    %v2090 = vand.u32 %v157, 4294901760
    %v2091 = vsub.f32 %v157, %v2090
    %v2092 = vand.u32 %v2091, 4294901760
    %v2093 = vsub.f32 %v2091, %v2092
    %v2094 = vand.u32 %v2093, 4294901760
    %2095 = vmatpush2.msra.mxu0 %v2094
    %v2096 = vand.u32 %v26, 4294901760
    %2097 = vmatprep.mubr.f32.mxu0 %v2096
    %v2098 = vand.u32 %v25, 4294901760
    %2099 = vmatmul.mubr.f32.gmra.mxu0 %v2098
    %v2100 = vpop.f32.mrf.mxu0
    %v2101 = vadd.f32 %v1708, %v2100
    %v2102 = vpop.f32.mrf.mxu0
    %v2103 = vadd.f32 %v1710, %v2102
    %2104 = vdwg.mxu0
    %v2105 = vand.u32 %v150, 4294901760
    %v2106 = vsub.f32 %v150, %v2105
    %2107 = vmatprep.subr.mxu0 %v2106
    %v2108 = vand.u32 %v149, 4294901760
    %v2109 = vsub.f32 %v149, %v2108
    %2110 = vmatpush1.msra.mxu0 %v2109
    %v2111 = vand.u32 %v142, 4294901760
    %v2112 = vsub.f32 %v142, %v2111
    %2113 = vmatprep.subr.mxu0 %v2112
    %v2114 = vand.u32 %v141, 4294901760
    %v2115 = vsub.f32 %v141, %v2114
    %2116 = vmatpush1.msra.mxu0 %v2115
    %v2117 = vand.u32 %v134, 4294901760
    %v2118 = vsub.f32 %v134, %v2117
    %2119 = vmatprep.subr.mxu0 %v2118
    %v2120 = vand.u32 %v133, 4294901760
    %v2121 = vsub.f32 %v133, %v2120
    %2122 = vmatpush1.msra.mxu0 %v2121
    %v2123 = vand.u32 %v126, 4294901760
    %v2124 = vsub.f32 %v126, %v2123
    %2125 = vmatprep.subr.mxu0 %v2124
    %v2126 = vand.u32 %v125, 4294901760
    %v2127 = vsub.f32 %v125, %v2126
    %2128 = vmatpush1.msra.mxu0 %v2127
    %v2129 = vand.u32 %v118, 4294901760
    %v2130 = vsub.f32 %v118, %v2129
    %2131 = vmatprep.subr.mxu0 %v2130
    %v2132 = vand.u32 %v117, 4294901760
    %v2133 = vsub.f32 %v117, %v2132
    %2134 = vmatpush1.msra.mxu0 %v2133
    %v2135 = vand.u32 %v110, 4294901760
    %v2136 = vsub.f32 %v110, %v2135
    %2137 = vmatprep.subr.mxu0 %v2136
    %v2138 = vand.u32 %v109, 4294901760
    %v2139 = vsub.f32 %v109, %v2138
    %2140 = vmatpush1.msra.mxu0 %v2139
    %v2141 = vand.u32 %v102, 4294901760
    %v2142 = vsub.f32 %v102, %v2141
    %2143 = vmatprep.subr.mxu0 %v2142
    %v2144 = vand.u32 %v101, 4294901760
    %v2145 = vsub.f32 %v101, %v2144
    %2146 = vmatpush1.msra.mxu0 %v2145
    %v2147 = vand.u32 %v94, 4294901760
    %v2148 = vsub.f32 %v94, %v2147
    %2149 = vmatprep.subr.mxu0 %v2148
    %v2150 = vand.u32 %v93, 4294901760
    %v2151 = vsub.f32 %v93, %v2150
    %2152 = vmatpush1.msra.mxu0 %v2151
    %v2153 = vand.u32 %v86, 4294901760
    %v2154 = vsub.f32 %v86, %v2153
    %2155 = vmatprep.subr.mxu0 %v2154
    %v2156 = vand.u32 %v85, 4294901760
    %v2157 = vsub.f32 %v85, %v2156
    %2158 = vmatpush1.msra.mxu0 %v2157
    %v2159 = vand.u32 %v78, 4294901760
    %v2160 = vsub.f32 %v78, %v2159
    %2161 = vmatprep.subr.mxu0 %v2160
    %v2162 = vand.u32 %v77, 4294901760
    %v2163 = vsub.f32 %v77, %v2162
    %2164 = vmatpush1.msra.mxu0 %v2163
    %v2165 = vand.u32 %v70, 4294901760
    %v2166 = vsub.f32 %v70, %v2165
    %2167 = vmatprep.subr.mxu0 %v2166
    %v2168 = vand.u32 %v69, 4294901760
    %v2169 = vsub.f32 %v69, %v2168
    %2170 = vmatpush1.msra.mxu0 %v2169
    %v2171 = vand.u32 %v62, 4294901760
    %v2172 = vsub.f32 %v62, %v2171
    %2173 = vmatprep.subr.mxu0 %v2172
    %v2174 = vand.u32 %v61, 4294901760
    %v2175 = vsub.f32 %v61, %v2174
    %2176 = vmatpush1.msra.mxu0 %v2175
    %v2177 = vand.u32 %v54, 4294901760
    %v2178 = vsub.f32 %v54, %v2177
    %2179 = vmatprep.subr.mxu0 %v2178
    %v2180 = vand.u32 %v53, 4294901760
    %v2181 = vsub.f32 %v53, %v2180
    %2182 = vmatpush1.msra.mxu0 %v2181
    %v2183 = vand.u32 %v46, 4294901760
    %v2184 = vsub.f32 %v46, %v2183
    %2185 = vmatprep.subr.mxu0 %v2184
    %v2186 = vand.u32 %v45, 4294901760
    %v2187 = vsub.f32 %v45, %v2186
    %2188 = vmatpush1.msra.mxu0 %v2187
    %v2189 = vand.u32 %v38, 4294901760
    %v2190 = vsub.f32 %v38, %v2189
    %2191 = vmatprep.subr.mxu0 %v2190
    %v2192 = vand.u32 %v37, 4294901760
    %v2193 = vsub.f32 %v37, %v2192
    %2194 = vmatpush1.msra.mxu0 %v2193
    %v2195 = vand.u32 %v30, 4294901760
    %v2196 = vsub.f32 %v30, %v2195
    %2197 = vmatprep.subr.mxu0 %v2196
    %v2198 = vand.u32 %v29, 4294901760
    %v2199 = vsub.f32 %v29, %v2198
    %2200 = vmatpush1.msra.mxu0 %v2199
    %v2201 = vand.u32 %v278, 4294901760
    %v2202 = vsub.f32 %v278, %v2201
    %2203 = vmatprep.subr.mxu0 %v2202
    %v2204 = vand.u32 %v277, 4294901760
    %v2205 = vsub.f32 %v277, %v2204
    %2206 = vmatpush2.msra.mxu0 %v2205
    %v2207 = vand.u32 %v270, 4294901760
    %v2208 = vsub.f32 %v270, %v2207
    %2209 = vmatprep.subr.mxu0 %v2208
    %v2210 = vand.u32 %v269, 4294901760
    %v2211 = vsub.f32 %v269, %v2210
    %2212 = vmatpush2.msra.mxu0 %v2211
    %v2213 = vand.u32 %v262, 4294901760
    %v2214 = vsub.f32 %v262, %v2213
    %2215 = vmatprep.subr.mxu0 %v2214
    %v2216 = vand.u32 %v261, 4294901760
    %v2217 = vsub.f32 %v261, %v2216
    %2218 = vmatpush2.msra.mxu0 %v2217
    %v2219 = vand.u32 %v254, 4294901760
    %v2220 = vsub.f32 %v254, %v2219
    %2221 = vmatprep.subr.mxu0 %v2220
    %v2222 = vand.u32 %v253, 4294901760
    %v2223 = vsub.f32 %v253, %v2222
    %2224 = vmatpush2.msra.mxu0 %v2223
    %v2225 = vand.u32 %v246, 4294901760
    %v2226 = vsub.f32 %v246, %v2225
    %2227 = vmatprep.subr.mxu0 %v2226
    %v2228 = vand.u32 %v245, 4294901760
    %v2229 = vsub.f32 %v245, %v2228
    %2230 = vmatpush2.msra.mxu0 %v2229
    %v2231 = vand.u32 %v238, 4294901760
    %v2232 = vsub.f32 %v238, %v2231
    %2233 = vmatprep.subr.mxu0 %v2232
    %v2234 = vand.u32 %v237, 4294901760
    %v2235 = vsub.f32 %v237, %v2234
    %2236 = vmatpush2.msra.mxu0 %v2235
    %v2237 = vand.u32 %v230, 4294901760
    %v2238 = vsub.f32 %v230, %v2237
    %2239 = vmatprep.subr.mxu0 %v2238
    %v2240 = vand.u32 %v229, 4294901760
    %v2241 = vsub.f32 %v229, %v2240
    %2242 = vmatpush2.msra.mxu0 %v2241
    %v2243 = vand.u32 %v222, 4294901760
    %v2244 = vsub.f32 %v222, %v2243
    %2245 = vmatprep.subr.mxu0 %v2244
    %v2246 = vand.u32 %v221, 4294901760
    %v2247 = vsub.f32 %v221, %v2246
    %2248 = vmatpush2.msra.mxu0 %v2247
    %v2249 = vand.u32 %v214, 4294901760
    %v2250 = vsub.f32 %v214, %v2249
    %2251 = vmatprep.subr.mxu0 %v2250
    %v2252 = vand.u32 %v213, 4294901760
    %v2253 = vsub.f32 %v213, %v2252
    %2254 = vmatpush2.msra.mxu0 %v2253
    %v2255 = vand.u32 %v206, 4294901760
    %v2256 = vsub.f32 %v206, %v2255
    %2257 = vmatprep.subr.mxu0 %v2256
    %v2258 = vand.u32 %v205, 4294901760
    %v2259 = vsub.f32 %v205, %v2258
    %2260 = vmatpush2.msra.mxu0 %v2259
    %v2261 = vand.u32 %v198, 4294901760
    %v2262 = vsub.f32 %v198, %v2261
    %2263 = vmatprep.subr.mxu0 %v2262
    %v2264 = vand.u32 %v197, 4294901760
    %v2265 = vsub.f32 %v197, %v2264
    %2266 = vmatpush2.msra.mxu0 %v2265
    %v2267 = vand.u32 %v190, 4294901760
    %v2268 = vsub.f32 %v190, %v2267
    %2269 = vmatprep.subr.mxu0 %v2268
    %v2270 = vand.u32 %v189, 4294901760
    %v2271 = vsub.f32 %v189, %v2270
    %2272 = vmatpush2.msra.mxu0 %v2271
    %v2273 = vand.u32 %v182, 4294901760
    %v2274 = vsub.f32 %v182, %v2273
    %2275 = vmatprep.subr.mxu0 %v2274
    %v2276 = vand.u32 %v181, 4294901760
    %v2277 = vsub.f32 %v181, %v2276
    %2278 = vmatpush2.msra.mxu0 %v2277
    %v2279 = vand.u32 %v174, 4294901760
    %v2280 = vsub.f32 %v174, %v2279
    %2281 = vmatprep.subr.mxu0 %v2280
    %v2282 = vand.u32 %v173, 4294901760
    %v2283 = vsub.f32 %v173, %v2282
    %2284 = vmatpush2.msra.mxu0 %v2283
    %v2285 = vand.u32 %v166, 4294901760
    %v2286 = vsub.f32 %v166, %v2285
    %2287 = vmatprep.subr.mxu0 %v2286
    %v2288 = vand.u32 %v165, 4294901760
    %v2289 = vsub.f32 %v165, %v2288
    %2290 = vmatpush2.msra.mxu0 %v2289
    %v2291 = vand.u32 %v158, 4294901760
    %v2292 = vsub.f32 %v158, %v2291
    %2293 = vmatprep.subr.mxu0 %v2292
    %v2294 = vand.u32 %v157, 4294901760
    %v2295 = vsub.f32 %v157, %v2294
    %2296 = vmatpush2.msra.mxu0 %v2295
    %v2297 = vand.u32 %v26, 4294901760
    %v2298 = vsub.f32 %v26, %v2297
    %2299 = vmatprep.mubr.f32.mxu0 %v2298
    %v2300 = vand.u32 %v25, 4294901760
    %v2301 = vsub.f32 %v25, %v2300
    %2302 = vmatmul.mubr.f32.gmra.mxu0 %v2301
    %v2303 = vpop.f32.mrf.mxu0
    %v2304 = vadd.f32 %v2101, %v2303
    %v2305 = vpop.f32.mrf.mxu0
    %v2306 = vadd.f32 %v2103, %v2305
    %2307 = vdwg.mxu0
    %v2308 = vand.u32 %v150, 4294901760
    %2309 = vmatprep.subr.mxu0 %v2308
    %v2310 = vand.u32 %v149, 4294901760
    %2311 = vmatpush1.msra.mxu0 %v2310
    %v2312 = vand.u32 %v142, 4294901760
    %2313 = vmatprep.subr.mxu0 %v2312
    %v2314 = vand.u32 %v141, 4294901760
    %2315 = vmatpush1.msra.mxu0 %v2314
    %v2316 = vand.u32 %v134, 4294901760
    %2317 = vmatprep.subr.mxu0 %v2316
    %v2318 = vand.u32 %v133, 4294901760
    %2319 = vmatpush1.msra.mxu0 %v2318
    %v2320 = vand.u32 %v126, 4294901760
    %2321 = vmatprep.subr.mxu0 %v2320
    %v2322 = vand.u32 %v125, 4294901760
    %2323 = vmatpush1.msra.mxu0 %v2322
    %v2324 = vand.u32 %v118, 4294901760
    %2325 = vmatprep.subr.mxu0 %v2324
    %v2326 = vand.u32 %v117, 4294901760
    %2327 = vmatpush1.msra.mxu0 %v2326
    %v2328 = vand.u32 %v110, 4294901760
    %2329 = vmatprep.subr.mxu0 %v2328
    %v2330 = vand.u32 %v109, 4294901760
    %2331 = vmatpush1.msra.mxu0 %v2330
    %v2332 = vand.u32 %v102, 4294901760
    %2333 = vmatprep.subr.mxu0 %v2332
    %v2334 = vand.u32 %v101, 4294901760
    %2335 = vmatpush1.msra.mxu0 %v2334
    %v2336 = vand.u32 %v94, 4294901760
    %2337 = vmatprep.subr.mxu0 %v2336
    %v2338 = vand.u32 %v93, 4294901760
    %2339 = vmatpush1.msra.mxu0 %v2338
    %v2340 = vand.u32 %v86, 4294901760
    %2341 = vmatprep.subr.mxu0 %v2340
    %v2342 = vand.u32 %v85, 4294901760
    %2343 = vmatpush1.msra.mxu0 %v2342
    %v2344 = vand.u32 %v78, 4294901760
    %2345 = vmatprep.subr.mxu0 %v2344
    %v2346 = vand.u32 %v77, 4294901760
    %2347 = vmatpush1.msra.mxu0 %v2346
    %v2348 = vand.u32 %v70, 4294901760
    %2349 = vmatprep.subr.mxu0 %v2348
    %v2350 = vand.u32 %v69, 4294901760
    %2351 = vmatpush1.msra.mxu0 %v2350
    %v2352 = vand.u32 %v62, 4294901760
    %2353 = vmatprep.subr.mxu0 %v2352
    %v2354 = vand.u32 %v61, 4294901760
    %2355 = vmatpush1.msra.mxu0 %v2354
    %v2356 = vand.u32 %v54, 4294901760
    %2357 = vmatprep.subr.mxu0 %v2356
    %v2358 = vand.u32 %v53, 4294901760
    %2359 = vmatpush1.msra.mxu0 %v2358
    %v2360 = vand.u32 %v46, 4294901760
    %2361 = vmatprep.subr.mxu0 %v2360
    %v2362 = vand.u32 %v45, 4294901760
    %2363 = vmatpush1.msra.mxu0 %v2362
    %v2364 = vand.u32 %v38, 4294901760
    %2365 = vmatprep.subr.mxu0 %v2364
    %v2366 = vand.u32 %v37, 4294901760
    %2367 = vmatpush1.msra.mxu0 %v2366
    %v2368 = vand.u32 %v30, 4294901760
    %2369 = vmatprep.subr.mxu0 %v2368
    %v2370 = vand.u32 %v29, 4294901760
    %2371 = vmatpush1.msra.mxu0 %v2370
    %v2372 = vand.u32 %v278, 4294901760
    %2373 = vmatprep.subr.mxu0 %v2372
    %v2374 = vand.u32 %v277, 4294901760
    %2375 = vmatpush2.msra.mxu0 %v2374
    %v2376 = vand.u32 %v270, 4294901760
    %2377 = vmatprep.subr.mxu0 %v2376
    %v2378 = vand.u32 %v269, 4294901760
    %2379 = vmatpush2.msra.mxu0 %v2378
    %v2380 = vand.u32 %v262, 4294901760
    %2381 = vmatprep.subr.mxu0 %v2380
    %v2382 = vand.u32 %v261, 4294901760
    %2383 = vmatpush2.msra.mxu0 %v2382
    %v2384 = vand.u32 %v254, 4294901760
    %2385 = vmatprep.subr.mxu0 %v2384
    %v2386 = vand.u32 %v253, 4294901760
    %2387 = vmatpush2.msra.mxu0 %v2386
    %v2388 = vand.u32 %v246, 4294901760
    %2389 = vmatprep.subr.mxu0 %v2388
    %v2390 = vand.u32 %v245, 4294901760
    %2391 = vmatpush2.msra.mxu0 %v2390
    %v2392 = vand.u32 %v238, 4294901760
    %2393 = vmatprep.subr.mxu0 %v2392
    %v2394 = vand.u32 %v237, 4294901760
    %2395 = vmatpush2.msra.mxu0 %v2394
    %v2396 = vand.u32 %v230, 4294901760
    %2397 = vmatprep.subr.mxu0 %v2396
    %v2398 = vand.u32 %v229, 4294901760
    %2399 = vmatpush2.msra.mxu0 %v2398
    %v2400 = vand.u32 %v222, 4294901760
    %2401 = vmatprep.subr.mxu0 %v2400
    %v2402 = vand.u32 %v221, 4294901760
    %2403 = vmatpush2.msra.mxu0 %v2402
    %v2404 = vand.u32 %v214, 4294901760
    %2405 = vmatprep.subr.mxu0 %v2404
    %v2406 = vand.u32 %v213, 4294901760
    %2407 = vmatpush2.msra.mxu0 %v2406
    %v2408 = vand.u32 %v206, 4294901760
    %2409 = vmatprep.subr.mxu0 %v2408
    %v2410 = vand.u32 %v205, 4294901760
    %2411 = vmatpush2.msra.mxu0 %v2410
    %v2412 = vand.u32 %v198, 4294901760
    %2413 = vmatprep.subr.mxu0 %v2412
    %v2414 = vand.u32 %v197, 4294901760
    %2415 = vmatpush2.msra.mxu0 %v2414
    %v2416 = vand.u32 %v190, 4294901760
    %2417 = vmatprep.subr.mxu0 %v2416
    %v2418 = vand.u32 %v189, 4294901760
    %2419 = vmatpush2.msra.mxu0 %v2418
    %v2420 = vand.u32 %v182, 4294901760
    %2421 = vmatprep.subr.mxu0 %v2420
    %v2422 = vand.u32 %v181, 4294901760
    %2423 = vmatpush2.msra.mxu0 %v2422
    %v2424 = vand.u32 %v174, 4294901760
    %2425 = vmatprep.subr.mxu0 %v2424
    %v2426 = vand.u32 %v173, 4294901760
    %2427 = vmatpush2.msra.mxu0 %v2426
    %v2428 = vand.u32 %v166, 4294901760
    %2429 = vmatprep.subr.mxu0 %v2428
    %v2430 = vand.u32 %v165, 4294901760
    %2431 = vmatpush2.msra.mxu0 %v2430
    %v2432 = vand.u32 %v158, 4294901760
    %2433 = vmatprep.subr.mxu0 %v2432
    %v2434 = vand.u32 %v157, 4294901760
    %2435 = vmatpush2.msra.mxu0 %v2434
    %v2436 = vand.u32 %v26, 4294901760
    %v2437 = vsub.f32 %v26, %v2436
    %v2438 = vand.u32 %v2437, 4294901760
    %2439 = vmatprep.mubr.f32.mxu0 %v2438
    %v2440 = vand.u32 %v25, 4294901760
    %v2441 = vsub.f32 %v25, %v2440
    %v2442 = vand.u32 %v2441, 4294901760
    %2443 = vmatmul.mubr.f32.gmra.mxu0 %v2442
    %v2444 = vpop.f32.mrf.mxu0
    %v2445 = vadd.f32 %v2304, %v2444
    %v2446 = vpop.f32.mrf.mxu0
    %v2447 = vadd.f32 %v2306, %v2446
    %2448 = vdwg.mxu0
    %v2449 = vand.u32 %v150, 4294901760
    %v2450 = vsub.f32 %v150, %v2449
    %v2451 = vand.u32 %v2450, 4294901760
    %2452 = vmatprep.subr.mxu0 %v2451
    %v2453 = vand.u32 %v149, 4294901760
    %v2454 = vsub.f32 %v149, %v2453
    %v2455 = vand.u32 %v2454, 4294901760
    %2456 = vmatpush1.msra.mxu0 %v2455
    %v2457 = vand.u32 %v142, 4294901760
    %v2458 = vsub.f32 %v142, %v2457
    %v2459 = vand.u32 %v2458, 4294901760
    %2460 = vmatprep.subr.mxu0 %v2459
    %v2461 = vand.u32 %v141, 4294901760
    %v2462 = vsub.f32 %v141, %v2461
    %v2463 = vand.u32 %v2462, 4294901760
    %2464 = vmatpush1.msra.mxu0 %v2463
    %v2465 = vand.u32 %v134, 4294901760
    %v2466 = vsub.f32 %v134, %v2465
    %v2467 = vand.u32 %v2466, 4294901760
    %2468 = vmatprep.subr.mxu0 %v2467
    %v2469 = vand.u32 %v133, 4294901760
    %v2470 = vsub.f32 %v133, %v2469
    %v2471 = vand.u32 %v2470, 4294901760
    %2472 = vmatpush1.msra.mxu0 %v2471
    %v2473 = vand.u32 %v126, 4294901760
    %v2474 = vsub.f32 %v126, %v2473
    %v2475 = vand.u32 %v2474, 4294901760
    %2476 = vmatprep.subr.mxu0 %v2475
    %v2477 = vand.u32 %v125, 4294901760
    %v2478 = vsub.f32 %v125, %v2477
    %v2479 = vand.u32 %v2478, 4294901760
    %2480 = vmatpush1.msra.mxu0 %v2479
    %v2481 = vand.u32 %v118, 4294901760
    %v2482 = vsub.f32 %v118, %v2481
    %v2483 = vand.u32 %v2482, 4294901760
    %2484 = vmatprep.subr.mxu0 %v2483
    %v2485 = vand.u32 %v117, 4294901760
    %v2486 = vsub.f32 %v117, %v2485
    %v2487 = vand.u32 %v2486, 4294901760
    %2488 = vmatpush1.msra.mxu0 %v2487
    %v2489 = vand.u32 %v110, 4294901760
    %v2490 = vsub.f32 %v110, %v2489
    %v2491 = vand.u32 %v2490, 4294901760
    %2492 = vmatprep.subr.mxu0 %v2491
    %v2493 = vand.u32 %v109, 4294901760
    %v2494 = vsub.f32 %v109, %v2493
    %v2495 = vand.u32 %v2494, 4294901760
    %2496 = vmatpush1.msra.mxu0 %v2495
    %v2497 = vand.u32 %v102, 4294901760
    %v2498 = vsub.f32 %v102, %v2497
    %v2499 = vand.u32 %v2498, 4294901760
    %2500 = vmatprep.subr.mxu0 %v2499
    %v2501 = vand.u32 %v101, 4294901760
    %v2502 = vsub.f32 %v101, %v2501
    %v2503 = vand.u32 %v2502, 4294901760
    %2504 = vmatpush1.msra.mxu0 %v2503
    %v2505 = vand.u32 %v94, 4294901760
    %v2506 = vsub.f32 %v94, %v2505
    %v2507 = vand.u32 %v2506, 4294901760
    %2508 = vmatprep.subr.mxu0 %v2507
    %v2509 = vand.u32 %v93, 4294901760
    %v2510 = vsub.f32 %v93, %v2509
    %v2511 = vand.u32 %v2510, 4294901760
    %2512 = vmatpush1.msra.mxu0 %v2511
    %v2513 = vand.u32 %v86, 4294901760
    %v2514 = vsub.f32 %v86, %v2513
    %v2515 = vand.u32 %v2514, 4294901760
    %2516 = vmatprep.subr.mxu0 %v2515
    %v2517 = vand.u32 %v85, 4294901760
    %v2518 = vsub.f32 %v85, %v2517
    %v2519 = vand.u32 %v2518, 4294901760
    %2520 = vmatpush1.msra.mxu0 %v2519
    %v2521 = vand.u32 %v78, 4294901760
    %v2522 = vsub.f32 %v78, %v2521
    %v2523 = vand.u32 %v2522, 4294901760
    %2524 = vmatprep.subr.mxu0 %v2523
    %v2525 = vand.u32 %v77, 4294901760
    %v2526 = vsub.f32 %v77, %v2525
    %v2527 = vand.u32 %v2526, 4294901760
    %2528 = vmatpush1.msra.mxu0 %v2527
    %v2529 = vand.u32 %v70, 4294901760
    %v2530 = vsub.f32 %v70, %v2529
    %v2531 = vand.u32 %v2530, 4294901760
    %2532 = vmatprep.subr.mxu0 %v2531
    %v2533 = vand.u32 %v69, 4294901760
    %v2534 = vsub.f32 %v69, %v2533
    %v2535 = vand.u32 %v2534, 4294901760
    %2536 = vmatpush1.msra.mxu0 %v2535
    %v2537 = vand.u32 %v62, 4294901760
    %v2538 = vsub.f32 %v62, %v2537
    %v2539 = vand.u32 %v2538, 4294901760
    %2540 = vmatprep.subr.mxu0 %v2539
    %v2541 = vand.u32 %v61, 4294901760
    %v2542 = vsub.f32 %v61, %v2541
    %v2543 = vand.u32 %v2542, 4294901760
    %2544 = vmatpush1.msra.mxu0 %v2543
    %v2545 = vand.u32 %v54, 4294901760
    %v2546 = vsub.f32 %v54, %v2545
    %v2547 = vand.u32 %v2546, 4294901760
    %2548 = vmatprep.subr.mxu0 %v2547
    %v2549 = vand.u32 %v53, 4294901760
    %v2550 = vsub.f32 %v53, %v2549
    %v2551 = vand.u32 %v2550, 4294901760
    %2552 = vmatpush1.msra.mxu0 %v2551
    %v2553 = vand.u32 %v46, 4294901760
    %v2554 = vsub.f32 %v46, %v2553
    %v2555 = vand.u32 %v2554, 4294901760
    %2556 = vmatprep.subr.mxu0 %v2555
    %v2557 = vand.u32 %v45, 4294901760
    %v2558 = vsub.f32 %v45, %v2557
    %v2559 = vand.u32 %v2558, 4294901760
    %2560 = vmatpush1.msra.mxu0 %v2559
    %v2561 = vand.u32 %v38, 4294901760
    %v2562 = vsub.f32 %v38, %v2561
    %v2563 = vand.u32 %v2562, 4294901760
    %2564 = vmatprep.subr.mxu0 %v2563
    %v2565 = vand.u32 %v37, 4294901760
    %v2566 = vsub.f32 %v37, %v2565
    %v2567 = vand.u32 %v2566, 4294901760
    %2568 = vmatpush1.msra.mxu0 %v2567
    %v2569 = vand.u32 %v30, 4294901760
    %v2570 = vsub.f32 %v30, %v2569
    %v2571 = vand.u32 %v2570, 4294901760
    %2572 = vmatprep.subr.mxu0 %v2571
    %v2573 = vand.u32 %v29, 4294901760
    %v2574 = vsub.f32 %v29, %v2573
    %v2575 = vand.u32 %v2574, 4294901760
    %2576 = vmatpush1.msra.mxu0 %v2575
    %v2577 = vand.u32 %v278, 4294901760
    %v2578 = vsub.f32 %v278, %v2577
    %v2579 = vand.u32 %v2578, 4294901760
    %2580 = vmatprep.subr.mxu0 %v2579
    %v2581 = vand.u32 %v277, 4294901760
    %v2582 = vsub.f32 %v277, %v2581
    %v2583 = vand.u32 %v2582, 4294901760
    %2584 = vmatpush2.msra.mxu0 %v2583
    %v2585 = vand.u32 %v270, 4294901760
    %v2586 = vsub.f32 %v270, %v2585
    %v2587 = vand.u32 %v2586, 4294901760
    %2588 = vmatprep.subr.mxu0 %v2587
    %v2589 = vand.u32 %v269, 4294901760
    %v2590 = vsub.f32 %v269, %v2589
    %v2591 = vand.u32 %v2590, 4294901760
    %2592 = vmatpush2.msra.mxu0 %v2591
    %v2593 = vand.u32 %v262, 4294901760
    %v2594 = vsub.f32 %v262, %v2593
    %v2595 = vand.u32 %v2594, 4294901760
    %2596 = vmatprep.subr.mxu0 %v2595
    %v2597 = vand.u32 %v261, 4294901760
    %v2598 = vsub.f32 %v261, %v2597
    %v2599 = vand.u32 %v2598, 4294901760
    %2600 = vmatpush2.msra.mxu0 %v2599
    %v2601 = vand.u32 %v254, 4294901760
    %v2602 = vsub.f32 %v254, %v2601
    %v2603 = vand.u32 %v2602, 4294901760
    %2604 = vmatprep.subr.mxu0 %v2603
    %v2605 = vand.u32 %v253, 4294901760
    %v2606 = vsub.f32 %v253, %v2605
    %v2607 = vand.u32 %v2606, 4294901760
    %2608 = vmatpush2.msra.mxu0 %v2607
    %v2609 = vand.u32 %v246, 4294901760
    %v2610 = vsub.f32 %v246, %v2609
    %v2611 = vand.u32 %v2610, 4294901760
    %2612 = vmatprep.subr.mxu0 %v2611
    %v2613 = vand.u32 %v245, 4294901760
    %v2614 = vsub.f32 %v245, %v2613
    %v2615 = vand.u32 %v2614, 4294901760
    %2616 = vmatpush2.msra.mxu0 %v2615
    %v2617 = vand.u32 %v238, 4294901760
    %v2618 = vsub.f32 %v238, %v2617
    %v2619 = vand.u32 %v2618, 4294901760
    %2620 = vmatprep.subr.mxu0 %v2619
    %v2621 = vand.u32 %v237, 4294901760
    %v2622 = vsub.f32 %v237, %v2621
    %v2623 = vand.u32 %v2622, 4294901760
    %2624 = vmatpush2.msra.mxu0 %v2623
    %v2625 = vand.u32 %v230, 4294901760
    %v2626 = vsub.f32 %v230, %v2625
    %v2627 = vand.u32 %v2626, 4294901760
    %2628 = vmatprep.subr.mxu0 %v2627
    %v2629 = vand.u32 %v229, 4294901760
    %v2630 = vsub.f32 %v229, %v2629
    %v2631 = vand.u32 %v2630, 4294901760
    %2632 = vmatpush2.msra.mxu0 %v2631
    %v2633 = vand.u32 %v222, 4294901760
    %v2634 = vsub.f32 %v222, %v2633
    %v2635 = vand.u32 %v2634, 4294901760
    %2636 = vmatprep.subr.mxu0 %v2635
    %v2637 = vand.u32 %v221, 4294901760
    %v2638 = vsub.f32 %v221, %v2637
    %v2639 = vand.u32 %v2638, 4294901760
    %2640 = vmatpush2.msra.mxu0 %v2639
    %v2641 = vand.u32 %v214, 4294901760
    %v2642 = vsub.f32 %v214, %v2641
    %v2643 = vand.u32 %v2642, 4294901760
    %2644 = vmatprep.subr.mxu0 %v2643
    %v2645 = vand.u32 %v213, 4294901760
    %v2646 = vsub.f32 %v213, %v2645
    %v2647 = vand.u32 %v2646, 4294901760
    %2648 = vmatpush2.msra.mxu0 %v2647
    %v2649 = vand.u32 %v206, 4294901760
    %v2650 = vsub.f32 %v206, %v2649
    %v2651 = vand.u32 %v2650, 4294901760
    %2652 = vmatprep.subr.mxu0 %v2651
    %v2653 = vand.u32 %v205, 4294901760
    %v2654 = vsub.f32 %v205, %v2653
    %v2655 = vand.u32 %v2654, 4294901760
    %2656 = vmatpush2.msra.mxu0 %v2655
    %v2657 = vand.u32 %v198, 4294901760
    %v2658 = vsub.f32 %v198, %v2657
    %v2659 = vand.u32 %v2658, 4294901760
    %2660 = vmatprep.subr.mxu0 %v2659
    %v2661 = vand.u32 %v197, 4294901760
    %v2662 = vsub.f32 %v197, %v2661
    %v2663 = vand.u32 %v2662, 4294901760
    %2664 = vmatpush2.msra.mxu0 %v2663
    %v2665 = vand.u32 %v190, 4294901760
    %v2666 = vsub.f32 %v190, %v2665
    %v2667 = vand.u32 %v2666, 4294901760
    %2668 = vmatprep.subr.mxu0 %v2667
    %v2669 = vand.u32 %v189, 4294901760
    %v2670 = vsub.f32 %v189, %v2669
    %v2671 = vand.u32 %v2670, 4294901760
    %2672 = vmatpush2.msra.mxu0 %v2671
    %v2673 = vand.u32 %v182, 4294901760
    %v2674 = vsub.f32 %v182, %v2673
    %v2675 = vand.u32 %v2674, 4294901760
    %2676 = vmatprep.subr.mxu0 %v2675
    %v2677 = vand.u32 %v181, 4294901760
    %v2678 = vsub.f32 %v181, %v2677
    %v2679 = vand.u32 %v2678, 4294901760
    %2680 = vmatpush2.msra.mxu0 %v2679
    %v2681 = vand.u32 %v174, 4294901760
    %v2682 = vsub.f32 %v174, %v2681
    %v2683 = vand.u32 %v2682, 4294901760
    %2684 = vmatprep.subr.mxu0 %v2683
    %v2685 = vand.u32 %v173, 4294901760
    %v2686 = vsub.f32 %v173, %v2685
    %v2687 = vand.u32 %v2686, 4294901760
    %2688 = vmatpush2.msra.mxu0 %v2687
    %v2689 = vand.u32 %v166, 4294901760
    %v2690 = vsub.f32 %v166, %v2689
    %v2691 = vand.u32 %v2690, 4294901760
    %2692 = vmatprep.subr.mxu0 %v2691
    %v2693 = vand.u32 %v165, 4294901760
    %v2694 = vsub.f32 %v165, %v2693
    %v2695 = vand.u32 %v2694, 4294901760
    %2696 = vmatpush2.msra.mxu0 %v2695
    %v2697 = vand.u32 %v158, 4294901760
    %v2698 = vsub.f32 %v158, %v2697
    %v2699 = vand.u32 %v2698, 4294901760
    %2700 = vmatprep.subr.mxu0 %v2699
    %v2701 = vand.u32 %v157, 4294901760
    %v2702 = vsub.f32 %v157, %v2701
    %v2703 = vand.u32 %v2702, 4294901760
    %2704 = vmatpush2.msra.mxu0 %v2703
    %v2705 = vand.u32 %v26, 4294901760
    %2706 = vmatprep.mubr.f32.mxu0 %v2705
    %v2707 = vand.u32 %v25, 4294901760
    %2708 = vmatmul.mubr.f32.gmra.mxu0 %v2707
    %v2709 = vpop.f32.mrf.mxu0
    %v2710 = vadd.f32 %v2445, %v2709
    %v2711 = vpop.f32.mrf.mxu0
    %v2712 = vadd.f32 %v2447, %v2711
    %2713 = vdwg.mxu0
    %v2714 = vand.u32 %v150, 4294901760
    %2715 = vmatprep.subr.mxu0 %v2714
    %v2716 = vand.u32 %v149, 4294901760
    %2717 = vmatpush1.msra.mxu0 %v2716
    %v2718 = vand.u32 %v142, 4294901760
    %2719 = vmatprep.subr.mxu0 %v2718
    %v2720 = vand.u32 %v141, 4294901760
    %2721 = vmatpush1.msra.mxu0 %v2720
    %v2722 = vand.u32 %v134, 4294901760
    %2723 = vmatprep.subr.mxu0 %v2722
    %v2724 = vand.u32 %v133, 4294901760
    %2725 = vmatpush1.msra.mxu0 %v2724
    %v2726 = vand.u32 %v126, 4294901760
    %2727 = vmatprep.subr.mxu0 %v2726
    %v2728 = vand.u32 %v125, 4294901760
    %2729 = vmatpush1.msra.mxu0 %v2728
    %v2730 = vand.u32 %v118, 4294901760
    %2731 = vmatprep.subr.mxu0 %v2730
    %v2732 = vand.u32 %v117, 4294901760
    %2733 = vmatpush1.msra.mxu0 %v2732
    %v2734 = vand.u32 %v110, 4294901760
    %2735 = vmatprep.subr.mxu0 %v2734
    %v2736 = vand.u32 %v109, 4294901760
    %2737 = vmatpush1.msra.mxu0 %v2736
    %v2738 = vand.u32 %v102, 4294901760
    %2739 = vmatprep.subr.mxu0 %v2738
    %v2740 = vand.u32 %v101, 4294901760
    %2741 = vmatpush1.msra.mxu0 %v2740
    %v2742 = vand.u32 %v94, 4294901760
    %2743 = vmatprep.subr.mxu0 %v2742
    %v2744 = vand.u32 %v93, 4294901760
    %2745 = vmatpush1.msra.mxu0 %v2744
    %v2746 = vand.u32 %v86, 4294901760
    %2747 = vmatprep.subr.mxu0 %v2746
    %v2748 = vand.u32 %v85, 4294901760
    %2749 = vmatpush1.msra.mxu0 %v2748
    %v2750 = vand.u32 %v78, 4294901760
    %2751 = vmatprep.subr.mxu0 %v2750
    %v2752 = vand.u32 %v77, 4294901760
    %2753 = vmatpush1.msra.mxu0 %v2752
    %v2754 = vand.u32 %v70, 4294901760
    %2755 = vmatprep.subr.mxu0 %v2754
    %v2756 = vand.u32 %v69, 4294901760
    %2757 = vmatpush1.msra.mxu0 %v2756
    %v2758 = vand.u32 %v62, 4294901760
    %2759 = vmatprep.subr.mxu0 %v2758
    %v2760 = vand.u32 %v61, 4294901760
    %2761 = vmatpush1.msra.mxu0 %v2760
    %v2762 = vand.u32 %v54, 4294901760
    %2763 = vmatprep.subr.mxu0 %v2762
    %v2764 = vand.u32 %v53, 4294901760
    %2765 = vmatpush1.msra.mxu0 %v2764
    %v2766 = vand.u32 %v46, 4294901760
    %2767 = vmatprep.subr.mxu0 %v2766
    %v2768 = vand.u32 %v45, 4294901760
    %2769 = vmatpush1.msra.mxu0 %v2768
    %v2770 = vand.u32 %v38, 4294901760
    %2771 = vmatprep.subr.mxu0 %v2770
    %v2772 = vand.u32 %v37, 4294901760
    %2773 = vmatpush1.msra.mxu0 %v2772
    %v2774 = vand.u32 %v30, 4294901760
    %2775 = vmatprep.subr.mxu0 %v2774
    %v2776 = vand.u32 %v29, 4294901760
    %2777 = vmatpush1.msra.mxu0 %v2776
    %v2778 = vand.u32 %v278, 4294901760
    %2779 = vmatprep.subr.mxu0 %v2778
    %v2780 = vand.u32 %v277, 4294901760
    %2781 = vmatpush2.msra.mxu0 %v2780
    %v2782 = vand.u32 %v270, 4294901760
    %2783 = vmatprep.subr.mxu0 %v2782
    %v2784 = vand.u32 %v269, 4294901760
    %2785 = vmatpush2.msra.mxu0 %v2784
    %v2786 = vand.u32 %v262, 4294901760
    %2787 = vmatprep.subr.mxu0 %v2786
    %v2788 = vand.u32 %v261, 4294901760
    %2789 = vmatpush2.msra.mxu0 %v2788
    %v2790 = vand.u32 %v254, 4294901760
    %2791 = vmatprep.subr.mxu0 %v2790
    %v2792 = vand.u32 %v253, 4294901760
    %2793 = vmatpush2.msra.mxu0 %v2792
    %v2794 = vand.u32 %v246, 4294901760
    %2795 = vmatprep.subr.mxu0 %v2794
    %v2796 = vand.u32 %v245, 4294901760
    %2797 = vmatpush2.msra.mxu0 %v2796
    %v2798 = vand.u32 %v238, 4294901760
    %2799 = vmatprep.subr.mxu0 %v2798
    %v2800 = vand.u32 %v237, 4294901760
    %2801 = vmatpush2.msra.mxu0 %v2800
    %v2802 = vand.u32 %v230, 4294901760
    %2803 = vmatprep.subr.mxu0 %v2802
    %v2804 = vand.u32 %v229, 4294901760
    %2805 = vmatpush2.msra.mxu0 %v2804
    %v2806 = vand.u32 %v222, 4294901760
    %2807 = vmatprep.subr.mxu0 %v2806
    %v2808 = vand.u32 %v221, 4294901760
    %2809 = vmatpush2.msra.mxu0 %v2808
    %v2810 = vand.u32 %v214, 4294901760
    %2811 = vmatprep.subr.mxu0 %v2810
    %v2812 = vand.u32 %v213, 4294901760
    %2813 = vmatpush2.msra.mxu0 %v2812
    %v2814 = vand.u32 %v206, 4294901760
    %2815 = vmatprep.subr.mxu0 %v2814
    %v2816 = vand.u32 %v205, 4294901760
    %2817 = vmatpush2.msra.mxu0 %v2816
    %v2818 = vand.u32 %v198, 4294901760
    %2819 = vmatprep.subr.mxu0 %v2818
    %v2820 = vand.u32 %v197, 4294901760
    %2821 = vmatpush2.msra.mxu0 %v2820
    %v2822 = vand.u32 %v190, 4294901760
    %2823 = vmatprep.subr.mxu0 %v2822
    %v2824 = vand.u32 %v189, 4294901760
    %2825 = vmatpush2.msra.mxu0 %v2824
    %v2826 = vand.u32 %v182, 4294901760
    %2827 = vmatprep.subr.mxu0 %v2826
    %v2828 = vand.u32 %v181, 4294901760
    %2829 = vmatpush2.msra.mxu0 %v2828
    %v2830 = vand.u32 %v174, 4294901760
    %2831 = vmatprep.subr.mxu0 %v2830
    %v2832 = vand.u32 %v173, 4294901760
    %2833 = vmatpush2.msra.mxu0 %v2832
    %v2834 = vand.u32 %v166, 4294901760
    %2835 = vmatprep.subr.mxu0 %v2834
    %v2836 = vand.u32 %v165, 4294901760
    %2837 = vmatpush2.msra.mxu0 %v2836
    %v2838 = vand.u32 %v158, 4294901760
    %2839 = vmatprep.subr.mxu0 %v2838
    %v2840 = vand.u32 %v157, 4294901760
    %2841 = vmatpush2.msra.mxu0 %v2840
    %v2842 = vand.u32 %v26, 4294901760
    %2843 = vmatprep.mubr.f32.mxu0 %v2842
    %v2844 = vand.u32 %v25, 4294901760
    %2845 = vmatmul.mubr.f32.gmra.mxu0 %v2844
    %v2846 = vpop.f32.mrf.mxu0
    %v2847 = vadd.f32 %v2710, %v2846
    %v2848 = vpop.f32.mrf.mxu0
    %v2849 = vadd.f32 %v2712, %v2848
    %2850 = vdwg.mxu0
    %v2851 = vand.u32 %v152, 4294901760
    %2852 = vmatprep.subr.mxu0 %v2851
    %v2853 = vand.u32 %v151, 4294901760
    %2854 = vmatpush1.msra.mxu0 %v2853
    %v2855 = vand.u32 %v144, 4294901760
    %2856 = vmatprep.subr.mxu0 %v2855
    %v2857 = vand.u32 %v143, 4294901760
    %2858 = vmatpush1.msra.mxu0 %v2857
    %v2859 = vand.u32 %v136, 4294901760
    %2860 = vmatprep.subr.mxu0 %v2859
    %v2861 = vand.u32 %v135, 4294901760
    %2862 = vmatpush1.msra.mxu0 %v2861
    %v2863 = vand.u32 %v128, 4294901760
    %2864 = vmatprep.subr.mxu0 %v2863
    %v2865 = vand.u32 %v127, 4294901760
    %2866 = vmatpush1.msra.mxu0 %v2865
    %v2867 = vand.u32 %v120, 4294901760
    %2868 = vmatprep.subr.mxu0 %v2867
    %v2869 = vand.u32 %v119, 4294901760
    %2870 = vmatpush1.msra.mxu0 %v2869
    %v2871 = vand.u32 %v112, 4294901760
    %2872 = vmatprep.subr.mxu0 %v2871
    %v2873 = vand.u32 %v111, 4294901760
    %2874 = vmatpush1.msra.mxu0 %v2873
    %v2875 = vand.u32 %v104, 4294901760
    %2876 = vmatprep.subr.mxu0 %v2875
    %v2877 = vand.u32 %v103, 4294901760
    %2878 = vmatpush1.msra.mxu0 %v2877
    %v2879 = vand.u32 %v96, 4294901760
    %2880 = vmatprep.subr.mxu0 %v2879
    %v2881 = vand.u32 %v95, 4294901760
    %2882 = vmatpush1.msra.mxu0 %v2881
    %v2883 = vand.u32 %v88, 4294901760
    %2884 = vmatprep.subr.mxu0 %v2883
    %v2885 = vand.u32 %v87, 4294901760
    %2886 = vmatpush1.msra.mxu0 %v2885
    %v2887 = vand.u32 %v80, 4294901760
    %2888 = vmatprep.subr.mxu0 %v2887
    %v2889 = vand.u32 %v79, 4294901760
    %2890 = vmatpush1.msra.mxu0 %v2889
    %v2891 = vand.u32 %v72, 4294901760
    %2892 = vmatprep.subr.mxu0 %v2891
    %v2893 = vand.u32 %v71, 4294901760
    %2894 = vmatpush1.msra.mxu0 %v2893
    %v2895 = vand.u32 %v64, 4294901760
    %2896 = vmatprep.subr.mxu0 %v2895
    %v2897 = vand.u32 %v63, 4294901760
    %2898 = vmatpush1.msra.mxu0 %v2897
    %v2899 = vand.u32 %v56, 4294901760
    %2900 = vmatprep.subr.mxu0 %v2899
    %v2901 = vand.u32 %v55, 4294901760
    %2902 = vmatpush1.msra.mxu0 %v2901
    %v2903 = vand.u32 %v48, 4294901760
    %2904 = vmatprep.subr.mxu0 %v2903
    %v2905 = vand.u32 %v47, 4294901760
    %2906 = vmatpush1.msra.mxu0 %v2905
    %v2907 = vand.u32 %v40, 4294901760
    %2908 = vmatprep.subr.mxu0 %v2907
    %v2909 = vand.u32 %v39, 4294901760
    %2910 = vmatpush1.msra.mxu0 %v2909
    %v2911 = vand.u32 %v32, 4294901760
    %2912 = vmatprep.subr.mxu0 %v2911
    %v2913 = vand.u32 %v31, 4294901760
    %2914 = vmatpush1.msra.mxu0 %v2913
    %v2915 = vand.u32 %v280, 4294901760
    %2916 = vmatprep.subr.mxu0 %v2915
    %v2917 = vand.u32 %v279, 4294901760
    %2918 = vmatpush2.msra.mxu0 %v2917
    %v2919 = vand.u32 %v272, 4294901760
    %2920 = vmatprep.subr.mxu0 %v2919
    %v2921 = vand.u32 %v271, 4294901760
    %2922 = vmatpush2.msra.mxu0 %v2921
    %v2923 = vand.u32 %v264, 4294901760
    %2924 = vmatprep.subr.mxu0 %v2923
    %v2925 = vand.u32 %v263, 4294901760
    %2926 = vmatpush2.msra.mxu0 %v2925
    %v2927 = vand.u32 %v256, 4294901760
    %2928 = vmatprep.subr.mxu0 %v2927
    %v2929 = vand.u32 %v255, 4294901760
    %2930 = vmatpush2.msra.mxu0 %v2929
    %v2931 = vand.u32 %v248, 4294901760
    %2932 = vmatprep.subr.mxu0 %v2931
    %v2933 = vand.u32 %v247, 4294901760
    %2934 = vmatpush2.msra.mxu0 %v2933
    %v2935 = vand.u32 %v240, 4294901760
    %2936 = vmatprep.subr.mxu0 %v2935
    %v2937 = vand.u32 %v239, 4294901760
    %2938 = vmatpush2.msra.mxu0 %v2937
    %v2939 = vand.u32 %v232, 4294901760
    %2940 = vmatprep.subr.mxu0 %v2939
    %v2941 = vand.u32 %v231, 4294901760
    %2942 = vmatpush2.msra.mxu0 %v2941
    %v2943 = vand.u32 %v224, 4294901760
    %2944 = vmatprep.subr.mxu0 %v2943
    %v2945 = vand.u32 %v223, 4294901760
    %2946 = vmatpush2.msra.mxu0 %v2945
    %v2947 = vand.u32 %v216, 4294901760
    %2948 = vmatprep.subr.mxu0 %v2947
    %v2949 = vand.u32 %v215, 4294901760
    %2950 = vmatpush2.msra.mxu0 %v2949
    %v2951 = vand.u32 %v208, 4294901760
    %2952 = vmatprep.subr.mxu0 %v2951
    %v2953 = vand.u32 %v207, 4294901760
    %2954 = vmatpush2.msra.mxu0 %v2953
    %v2955 = vand.u32 %v200, 4294901760
    %2956 = vmatprep.subr.mxu0 %v2955
    %v2957 = vand.u32 %v199, 4294901760
    %2958 = vmatpush2.msra.mxu0 %v2957
    %v2959 = vand.u32 %v192, 4294901760
    %2960 = vmatprep.subr.mxu0 %v2959
    %v2961 = vand.u32 %v191, 4294901760
    %2962 = vmatpush2.msra.mxu0 %v2961
    %v2963 = vand.u32 %v184, 4294901760
    %2964 = vmatprep.subr.mxu0 %v2963
    %v2965 = vand.u32 %v183, 4294901760
    %2966 = vmatpush2.msra.mxu0 %v2965
    %v2967 = vand.u32 %v176, 4294901760
    %2968 = vmatprep.subr.mxu0 %v2967
    %v2969 = vand.u32 %v175, 4294901760
    %2970 = vmatpush2.msra.mxu0 %v2969
    %v2971 = vand.u32 %v168, 4294901760
    %2972 = vmatprep.subr.mxu0 %v2971
    %v2973 = vand.u32 %v167, 4294901760
    %2974 = vmatpush2.msra.mxu0 %v2973
    %v2975 = vand.u32 %v160, 4294901760
    %2976 = vmatprep.subr.mxu0 %v2975
    %v2977 = vand.u32 %v159, 4294901760
    %2978 = vmatpush2.msra.mxu0 %v2977
    %v2979 = vand.u32 %v26, 4294901760
    %v2980 = vsub.f32 %v26, %v2979
    %v2981 = vand.u32 %v2980, 4294901760
    %v2982 = vsub.f32 %v2980, %v2981
    %v2983 = vand.u32 %v2982, 4294901760
    %2984 = vmatprep.mubr.f32.mxu0 %v2983
    %v2985 = vand.u32 %v25, 4294901760
    %v2986 = vsub.f32 %v25, %v2985
    %v2987 = vand.u32 %v2986, 4294901760
    %v2988 = vsub.f32 %v2986, %v2987
    %v2989 = vand.u32 %v2988, 4294901760
    %2990 = vmatmul.mubr.f32.gmra.mxu0 %v2989
    %v2991 = vpop.f32.mrf.mxu0
    %v2992 = vadd.f32 0.0, %v2991
    %v2993 = vpop.f32.mrf.mxu0
    %v2994 = vadd.f32 0.0, %v2993
    %2995 = vdwg.mxu0
    %v2996 = vand.u32 %v152, 4294901760
    %v2997 = vsub.f32 %v152, %v2996
    %v2998 = vand.u32 %v2997, 4294901760
    %v2999 = vsub.f32 %v2997, %v2998
    %v3000 = vand.u32 %v2999, 4294901760
    %3001 = vmatprep.subr.mxu0 %v3000
    %v3002 = vand.u32 %v151, 4294901760
    %v3003 = vsub.f32 %v151, %v3002
    %v3004 = vand.u32 %v3003, 4294901760
    %v3005 = vsub.f32 %v3003, %v3004
    %v3006 = vand.u32 %v3005, 4294901760
    %3007 = vmatpush1.msra.mxu0 %v3006
    %v3008 = vand.u32 %v144, 4294901760
    %v3009 = vsub.f32 %v144, %v3008
    %v3010 = vand.u32 %v3009, 4294901760
    %v3011 = vsub.f32 %v3009, %v3010
    %v3012 = vand.u32 %v3011, 4294901760
    %3013 = vmatprep.subr.mxu0 %v3012
    %v3014 = vand.u32 %v143, 4294901760
    %v3015 = vsub.f32 %v143, %v3014
    %v3016 = vand.u32 %v3015, 4294901760
    %v3017 = vsub.f32 %v3015, %v3016
    %v3018 = vand.u32 %v3017, 4294901760
    %3019 = vmatpush1.msra.mxu0 %v3018
    %v3020 = vand.u32 %v136, 4294901760
    %v3021 = vsub.f32 %v136, %v3020
    %v3022 = vand.u32 %v3021, 4294901760
    %v3023 = vsub.f32 %v3021, %v3022
    %v3024 = vand.u32 %v3023, 4294901760
    %3025 = vmatprep.subr.mxu0 %v3024
    %v3026 = vand.u32 %v135, 4294901760
    %v3027 = vsub.f32 %v135, %v3026
    %v3028 = vand.u32 %v3027, 4294901760
    %v3029 = vsub.f32 %v3027, %v3028
    %v3030 = vand.u32 %v3029, 4294901760
    %3031 = vmatpush1.msra.mxu0 %v3030
    %v3032 = vand.u32 %v128, 4294901760
    %v3033 = vsub.f32 %v128, %v3032
    %v3034 = vand.u32 %v3033, 4294901760
    %v3035 = vsub.f32 %v3033, %v3034
    %v3036 = vand.u32 %v3035, 4294901760
    %3037 = vmatprep.subr.mxu0 %v3036
    %v3038 = vand.u32 %v127, 4294901760
    %v3039 = vsub.f32 %v127, %v3038
    %v3040 = vand.u32 %v3039, 4294901760
    %v3041 = vsub.f32 %v3039, %v3040
    %v3042 = vand.u32 %v3041, 4294901760
    %3043 = vmatpush1.msra.mxu0 %v3042
    %v3044 = vand.u32 %v120, 4294901760
    %v3045 = vsub.f32 %v120, %v3044
    %v3046 = vand.u32 %v3045, 4294901760
    %v3047 = vsub.f32 %v3045, %v3046
    %v3048 = vand.u32 %v3047, 4294901760
    %3049 = vmatprep.subr.mxu0 %v3048
    %v3050 = vand.u32 %v119, 4294901760
    %v3051 = vsub.f32 %v119, %v3050
    %v3052 = vand.u32 %v3051, 4294901760
    %v3053 = vsub.f32 %v3051, %v3052
    %v3054 = vand.u32 %v3053, 4294901760
    %3055 = vmatpush1.msra.mxu0 %v3054
    %v3056 = vand.u32 %v112, 4294901760
    %v3057 = vsub.f32 %v112, %v3056
    %v3058 = vand.u32 %v3057, 4294901760
    %v3059 = vsub.f32 %v3057, %v3058
    %v3060 = vand.u32 %v3059, 4294901760
    %3061 = vmatprep.subr.mxu0 %v3060
    %v3062 = vand.u32 %v111, 4294901760
    %v3063 = vsub.f32 %v111, %v3062
    %v3064 = vand.u32 %v3063, 4294901760
    %v3065 = vsub.f32 %v3063, %v3064
    %v3066 = vand.u32 %v3065, 4294901760
    %3067 = vmatpush1.msra.mxu0 %v3066
    %v3068 = vand.u32 %v104, 4294901760
    %v3069 = vsub.f32 %v104, %v3068
    %v3070 = vand.u32 %v3069, 4294901760
    %v3071 = vsub.f32 %v3069, %v3070
    %v3072 = vand.u32 %v3071, 4294901760
    %3073 = vmatprep.subr.mxu0 %v3072
    %v3074 = vand.u32 %v103, 4294901760
    %v3075 = vsub.f32 %v103, %v3074
    %v3076 = vand.u32 %v3075, 4294901760
    %v3077 = vsub.f32 %v3075, %v3076
    %v3078 = vand.u32 %v3077, 4294901760
    %3079 = vmatpush1.msra.mxu0 %v3078
    %v3080 = vand.u32 %v96, 4294901760
    %v3081 = vsub.f32 %v96, %v3080
    %v3082 = vand.u32 %v3081, 4294901760
    %v3083 = vsub.f32 %v3081, %v3082
    %v3084 = vand.u32 %v3083, 4294901760
    %3085 = vmatprep.subr.mxu0 %v3084
    %v3086 = vand.u32 %v95, 4294901760
    %v3087 = vsub.f32 %v95, %v3086
    %v3088 = vand.u32 %v3087, 4294901760
    %v3089 = vsub.f32 %v3087, %v3088
    %v3090 = vand.u32 %v3089, 4294901760
    %3091 = vmatpush1.msra.mxu0 %v3090
    %v3092 = vand.u32 %v88, 4294901760
    %v3093 = vsub.f32 %v88, %v3092
    %v3094 = vand.u32 %v3093, 4294901760
    %v3095 = vsub.f32 %v3093, %v3094
    %v3096 = vand.u32 %v3095, 4294901760
    %3097 = vmatprep.subr.mxu0 %v3096
    %v3098 = vand.u32 %v87, 4294901760
    %v3099 = vsub.f32 %v87, %v3098
    %v3100 = vand.u32 %v3099, 4294901760
    %v3101 = vsub.f32 %v3099, %v3100
    %v3102 = vand.u32 %v3101, 4294901760
    %3103 = vmatpush1.msra.mxu0 %v3102
    %v3104 = vand.u32 %v80, 4294901760
    %v3105 = vsub.f32 %v80, %v3104
    %v3106 = vand.u32 %v3105, 4294901760
    %v3107 = vsub.f32 %v3105, %v3106
    %v3108 = vand.u32 %v3107, 4294901760
    %3109 = vmatprep.subr.mxu0 %v3108
    %v3110 = vand.u32 %v79, 4294901760
    %v3111 = vsub.f32 %v79, %v3110
    %v3112 = vand.u32 %v3111, 4294901760
    %v3113 = vsub.f32 %v3111, %v3112
    %v3114 = vand.u32 %v3113, 4294901760
    %3115 = vmatpush1.msra.mxu0 %v3114
    %v3116 = vand.u32 %v72, 4294901760
    %v3117 = vsub.f32 %v72, %v3116
    %v3118 = vand.u32 %v3117, 4294901760
    %v3119 = vsub.f32 %v3117, %v3118
    %v3120 = vand.u32 %v3119, 4294901760
    %3121 = vmatprep.subr.mxu0 %v3120
    %v3122 = vand.u32 %v71, 4294901760
    %v3123 = vsub.f32 %v71, %v3122
    %v3124 = vand.u32 %v3123, 4294901760
    %v3125 = vsub.f32 %v3123, %v3124
    %v3126 = vand.u32 %v3125, 4294901760
    %3127 = vmatpush1.msra.mxu0 %v3126
    %v3128 = vand.u32 %v64, 4294901760
    %v3129 = vsub.f32 %v64, %v3128
    %v3130 = vand.u32 %v3129, 4294901760
    %v3131 = vsub.f32 %v3129, %v3130
    %v3132 = vand.u32 %v3131, 4294901760
    %3133 = vmatprep.subr.mxu0 %v3132
    %v3134 = vand.u32 %v63, 4294901760
    %v3135 = vsub.f32 %v63, %v3134
    %v3136 = vand.u32 %v3135, 4294901760
    %v3137 = vsub.f32 %v3135, %v3136
    %v3138 = vand.u32 %v3137, 4294901760
    %3139 = vmatpush1.msra.mxu0 %v3138
    %v3140 = vand.u32 %v56, 4294901760
    %v3141 = vsub.f32 %v56, %v3140
    %v3142 = vand.u32 %v3141, 4294901760
    %v3143 = vsub.f32 %v3141, %v3142
    %v3144 = vand.u32 %v3143, 4294901760
    %3145 = vmatprep.subr.mxu0 %v3144
    %v3146 = vand.u32 %v55, 4294901760
    %v3147 = vsub.f32 %v55, %v3146
    %v3148 = vand.u32 %v3147, 4294901760
    %v3149 = vsub.f32 %v3147, %v3148
    %v3150 = vand.u32 %v3149, 4294901760
    %3151 = vmatpush1.msra.mxu0 %v3150
    %v3152 = vand.u32 %v48, 4294901760
    %v3153 = vsub.f32 %v48, %v3152
    %v3154 = vand.u32 %v3153, 4294901760
    %v3155 = vsub.f32 %v3153, %v3154
    %v3156 = vand.u32 %v3155, 4294901760
    %3157 = vmatprep.subr.mxu0 %v3156
    %v3158 = vand.u32 %v47, 4294901760
    %v3159 = vsub.f32 %v47, %v3158
    %v3160 = vand.u32 %v3159, 4294901760
    %v3161 = vsub.f32 %v3159, %v3160
    %v3162 = vand.u32 %v3161, 4294901760
    %3163 = vmatpush1.msra.mxu0 %v3162
    %v3164 = vand.u32 %v40, 4294901760
    %v3165 = vsub.f32 %v40, %v3164
    %v3166 = vand.u32 %v3165, 4294901760
    %v3167 = vsub.f32 %v3165, %v3166
    %v3168 = vand.u32 %v3167, 4294901760
    %3169 = vmatprep.subr.mxu0 %v3168
    %v3170 = vand.u32 %v39, 4294901760
    %v3171 = vsub.f32 %v39, %v3170
    %v3172 = vand.u32 %v3171, 4294901760
    %v3173 = vsub.f32 %v3171, %v3172
    %v3174 = vand.u32 %v3173, 4294901760
    %3175 = vmatpush1.msra.mxu0 %v3174
    %v3176 = vand.u32 %v32, 4294901760
    %v3177 = vsub.f32 %v32, %v3176
    %v3178 = vand.u32 %v3177, 4294901760
    %v3179 = vsub.f32 %v3177, %v3178
    %v3180 = vand.u32 %v3179, 4294901760
    %3181 = vmatprep.subr.mxu0 %v3180
    %v3182 = vand.u32 %v31, 4294901760
    %v3183 = vsub.f32 %v31, %v3182
    %v3184 = vand.u32 %v3183, 4294901760
    %v3185 = vsub.f32 %v3183, %v3184
    %v3186 = vand.u32 %v3185, 4294901760
    %3187 = vmatpush1.msra.mxu0 %v3186
    %v3188 = vand.u32 %v280, 4294901760
    %v3189 = vsub.f32 %v280, %v3188
    %v3190 = vand.u32 %v3189, 4294901760
    %v3191 = vsub.f32 %v3189, %v3190
    %v3192 = vand.u32 %v3191, 4294901760
    %3193 = vmatprep.subr.mxu0 %v3192
    %v3194 = vand.u32 %v279, 4294901760
    %v3195 = vsub.f32 %v279, %v3194
    %v3196 = vand.u32 %v3195, 4294901760
    %v3197 = vsub.f32 %v3195, %v3196
    %v3198 = vand.u32 %v3197, 4294901760
    %3199 = vmatpush2.msra.mxu0 %v3198
    %v3200 = vand.u32 %v272, 4294901760
    %v3201 = vsub.f32 %v272, %v3200
    %v3202 = vand.u32 %v3201, 4294901760
    %v3203 = vsub.f32 %v3201, %v3202
    %v3204 = vand.u32 %v3203, 4294901760
    %3205 = vmatprep.subr.mxu0 %v3204
    %v3206 = vand.u32 %v271, 4294901760
    %v3207 = vsub.f32 %v271, %v3206
    %v3208 = vand.u32 %v3207, 4294901760
    %v3209 = vsub.f32 %v3207, %v3208
    %v3210 = vand.u32 %v3209, 4294901760
    %3211 = vmatpush2.msra.mxu0 %v3210
    %v3212 = vand.u32 %v264, 4294901760
    %v3213 = vsub.f32 %v264, %v3212
    %v3214 = vand.u32 %v3213, 4294901760
    %v3215 = vsub.f32 %v3213, %v3214
    %v3216 = vand.u32 %v3215, 4294901760
    %3217 = vmatprep.subr.mxu0 %v3216
    %v3218 = vand.u32 %v263, 4294901760
    %v3219 = vsub.f32 %v263, %v3218
    %v3220 = vand.u32 %v3219, 4294901760
    %v3221 = vsub.f32 %v3219, %v3220
    %v3222 = vand.u32 %v3221, 4294901760
    %3223 = vmatpush2.msra.mxu0 %v3222
    %v3224 = vand.u32 %v256, 4294901760
    %v3225 = vsub.f32 %v256, %v3224
    %v3226 = vand.u32 %v3225, 4294901760
    %v3227 = vsub.f32 %v3225, %v3226
    %v3228 = vand.u32 %v3227, 4294901760
    %3229 = vmatprep.subr.mxu0 %v3228
    %v3230 = vand.u32 %v255, 4294901760
    %v3231 = vsub.f32 %v255, %v3230
    %v3232 = vand.u32 %v3231, 4294901760
    %v3233 = vsub.f32 %v3231, %v3232
    %v3234 = vand.u32 %v3233, 4294901760
    %3235 = vmatpush2.msra.mxu0 %v3234
    %v3236 = vand.u32 %v248, 4294901760
    %v3237 = vsub.f32 %v248, %v3236
    %v3238 = vand.u32 %v3237, 4294901760
    %v3239 = vsub.f32 %v3237, %v3238
    %v3240 = vand.u32 %v3239, 4294901760
    %3241 = vmatprep.subr.mxu0 %v3240
    %v3242 = vand.u32 %v247, 4294901760
    %v3243 = vsub.f32 %v247, %v3242
    %v3244 = vand.u32 %v3243, 4294901760
    %v3245 = vsub.f32 %v3243, %v3244
    %v3246 = vand.u32 %v3245, 4294901760
    %3247 = vmatpush2.msra.mxu0 %v3246
    %v3248 = vand.u32 %v240, 4294901760
    %v3249 = vsub.f32 %v240, %v3248
    %v3250 = vand.u32 %v3249, 4294901760
    %v3251 = vsub.f32 %v3249, %v3250
    %v3252 = vand.u32 %v3251, 4294901760
    %3253 = vmatprep.subr.mxu0 %v3252
    %v3254 = vand.u32 %v239, 4294901760
    %v3255 = vsub.f32 %v239, %v3254
    %v3256 = vand.u32 %v3255, 4294901760
    %v3257 = vsub.f32 %v3255, %v3256
    %v3258 = vand.u32 %v3257, 4294901760
    %3259 = vmatpush2.msra.mxu0 %v3258
    %v3260 = vand.u32 %v232, 4294901760
    %v3261 = vsub.f32 %v232, %v3260
    %v3262 = vand.u32 %v3261, 4294901760
    %v3263 = vsub.f32 %v3261, %v3262
    %v3264 = vand.u32 %v3263, 4294901760
    %3265 = vmatprep.subr.mxu0 %v3264
    %v3266 = vand.u32 %v231, 4294901760
    %v3267 = vsub.f32 %v231, %v3266
    %v3268 = vand.u32 %v3267, 4294901760
    %v3269 = vsub.f32 %v3267, %v3268
    %v3270 = vand.u32 %v3269, 4294901760
    %3271 = vmatpush2.msra.mxu0 %v3270
    %v3272 = vand.u32 %v224, 4294901760
    %v3273 = vsub.f32 %v224, %v3272
    %v3274 = vand.u32 %v3273, 4294901760
    %v3275 = vsub.f32 %v3273, %v3274
    %v3276 = vand.u32 %v3275, 4294901760
    %3277 = vmatprep.subr.mxu0 %v3276
    %v3278 = vand.u32 %v223, 4294901760
    %v3279 = vsub.f32 %v223, %v3278
    %v3280 = vand.u32 %v3279, 4294901760
    %v3281 = vsub.f32 %v3279, %v3280
    %v3282 = vand.u32 %v3281, 4294901760
    %3283 = vmatpush2.msra.mxu0 %v3282
    %v3284 = vand.u32 %v216, 4294901760
    %v3285 = vsub.f32 %v216, %v3284
    %v3286 = vand.u32 %v3285, 4294901760
    %v3287 = vsub.f32 %v3285, %v3286
    %v3288 = vand.u32 %v3287, 4294901760
    %3289 = vmatprep.subr.mxu0 %v3288
    %v3290 = vand.u32 %v215, 4294901760
    %v3291 = vsub.f32 %v215, %v3290
    %v3292 = vand.u32 %v3291, 4294901760
    %v3293 = vsub.f32 %v3291, %v3292
    %v3294 = vand.u32 %v3293, 4294901760
    %3295 = vmatpush2.msra.mxu0 %v3294
    %v3296 = vand.u32 %v208, 4294901760
    %v3297 = vsub.f32 %v208, %v3296
    %v3298 = vand.u32 %v3297, 4294901760
    %v3299 = vsub.f32 %v3297, %v3298
    %v3300 = vand.u32 %v3299, 4294901760
    %3301 = vmatprep.subr.mxu0 %v3300
    %v3302 = vand.u32 %v207, 4294901760
    %v3303 = vsub.f32 %v207, %v3302
    %v3304 = vand.u32 %v3303, 4294901760
    %v3305 = vsub.f32 %v3303, %v3304
    %v3306 = vand.u32 %v3305, 4294901760
    %3307 = vmatpush2.msra.mxu0 %v3306
    %v3308 = vand.u32 %v200, 4294901760
    %v3309 = vsub.f32 %v200, %v3308
    %v3310 = vand.u32 %v3309, 4294901760
    %v3311 = vsub.f32 %v3309, %v3310
    %v3312 = vand.u32 %v3311, 4294901760
    %3313 = vmatprep.subr.mxu0 %v3312
    %v3314 = vand.u32 %v199, 4294901760
    %v3315 = vsub.f32 %v199, %v3314
    %v3316 = vand.u32 %v3315, 4294901760
    %v3317 = vsub.f32 %v3315, %v3316
    %v3318 = vand.u32 %v3317, 4294901760
    %3319 = vmatpush2.msra.mxu0 %v3318
    %v3320 = vand.u32 %v192, 4294901760
    %v3321 = vsub.f32 %v192, %v3320
    %v3322 = vand.u32 %v3321, 4294901760
    %v3323 = vsub.f32 %v3321, %v3322
    %v3324 = vand.u32 %v3323, 4294901760
    %3325 = vmatprep.subr.mxu0 %v3324
    %v3326 = vand.u32 %v191, 4294901760
    %v3327 = vsub.f32 %v191, %v3326
    %v3328 = vand.u32 %v3327, 4294901760
    %v3329 = vsub.f32 %v3327, %v3328
    %v3330 = vand.u32 %v3329, 4294901760
    %3331 = vmatpush2.msra.mxu0 %v3330
    %v3332 = vand.u32 %v184, 4294901760
    %v3333 = vsub.f32 %v184, %v3332
    %v3334 = vand.u32 %v3333, 4294901760
    %v3335 = vsub.f32 %v3333, %v3334
    %v3336 = vand.u32 %v3335, 4294901760
    %3337 = vmatprep.subr.mxu0 %v3336
    %v3338 = vand.u32 %v183, 4294901760
    %v3339 = vsub.f32 %v183, %v3338
    %v3340 = vand.u32 %v3339, 4294901760
    %v3341 = vsub.f32 %v3339, %v3340
    %v3342 = vand.u32 %v3341, 4294901760
    %3343 = vmatpush2.msra.mxu0 %v3342
    %v3344 = vand.u32 %v176, 4294901760
    %v3345 = vsub.f32 %v176, %v3344
    %v3346 = vand.u32 %v3345, 4294901760
    %v3347 = vsub.f32 %v3345, %v3346
    %v3348 = vand.u32 %v3347, 4294901760
    %3349 = vmatprep.subr.mxu0 %v3348
    %v3350 = vand.u32 %v175, 4294901760
    %v3351 = vsub.f32 %v175, %v3350
    %v3352 = vand.u32 %v3351, 4294901760
    %v3353 = vsub.f32 %v3351, %v3352
    %v3354 = vand.u32 %v3353, 4294901760
    %3355 = vmatpush2.msra.mxu0 %v3354
    %v3356 = vand.u32 %v168, 4294901760
    %v3357 = vsub.f32 %v168, %v3356
    %v3358 = vand.u32 %v3357, 4294901760
    %v3359 = vsub.f32 %v3357, %v3358
    %v3360 = vand.u32 %v3359, 4294901760
    %3361 = vmatprep.subr.mxu0 %v3360
    %v3362 = vand.u32 %v167, 4294901760
    %v3363 = vsub.f32 %v167, %v3362
    %v3364 = vand.u32 %v3363, 4294901760
    %v3365 = vsub.f32 %v3363, %v3364
    %v3366 = vand.u32 %v3365, 4294901760
    %3367 = vmatpush2.msra.mxu0 %v3366
    %v3368 = vand.u32 %v160, 4294901760
    %v3369 = vsub.f32 %v160, %v3368
    %v3370 = vand.u32 %v3369, 4294901760
    %v3371 = vsub.f32 %v3369, %v3370
    %v3372 = vand.u32 %v3371, 4294901760
    %3373 = vmatprep.subr.mxu0 %v3372
    %v3374 = vand.u32 %v159, 4294901760
    %v3375 = vsub.f32 %v159, %v3374
    %v3376 = vand.u32 %v3375, 4294901760
    %v3377 = vsub.f32 %v3375, %v3376
    %v3378 = vand.u32 %v3377, 4294901760
    %3379 = vmatpush2.msra.mxu0 %v3378
    %v3380 = vand.u32 %v26, 4294901760
    %3381 = vmatprep.mubr.f32.mxu0 %v3380
    %v3382 = vand.u32 %v25, 4294901760
    %3383 = vmatmul.mubr.f32.gmra.mxu0 %v3382
    %v3384 = vpop.f32.mrf.mxu0
    %v3385 = vadd.f32 %v2992, %v3384
    %v3386 = vpop.f32.mrf.mxu0
    %v3387 = vadd.f32 %v2994, %v3386
    %3388 = vdwg.mxu0
    %v3389 = vand.u32 %v152, 4294901760
    %v3390 = vsub.f32 %v152, %v3389
    %3391 = vmatprep.subr.mxu0 %v3390
    %v3392 = vand.u32 %v151, 4294901760
    %v3393 = vsub.f32 %v151, %v3392
    %3394 = vmatpush1.msra.mxu0 %v3393
    %v3395 = vand.u32 %v144, 4294901760
    %v3396 = vsub.f32 %v144, %v3395
    %3397 = vmatprep.subr.mxu0 %v3396
    %v3398 = vand.u32 %v143, 4294901760
    %v3399 = vsub.f32 %v143, %v3398
    %3400 = vmatpush1.msra.mxu0 %v3399
    %v3401 = vand.u32 %v136, 4294901760
    %v3402 = vsub.f32 %v136, %v3401
    %3403 = vmatprep.subr.mxu0 %v3402
    %v3404 = vand.u32 %v135, 4294901760
    %v3405 = vsub.f32 %v135, %v3404
    %3406 = vmatpush1.msra.mxu0 %v3405
    %v3407 = vand.u32 %v128, 4294901760
    %v3408 = vsub.f32 %v128, %v3407
    %3409 = vmatprep.subr.mxu0 %v3408
    %v3410 = vand.u32 %v127, 4294901760
    %v3411 = vsub.f32 %v127, %v3410
    %3412 = vmatpush1.msra.mxu0 %v3411
    %v3413 = vand.u32 %v120, 4294901760
    %v3414 = vsub.f32 %v120, %v3413
    %3415 = vmatprep.subr.mxu0 %v3414
    %v3416 = vand.u32 %v119, 4294901760
    %v3417 = vsub.f32 %v119, %v3416
    %3418 = vmatpush1.msra.mxu0 %v3417
    %v3419 = vand.u32 %v112, 4294901760
    %v3420 = vsub.f32 %v112, %v3419
    %3421 = vmatprep.subr.mxu0 %v3420
    %v3422 = vand.u32 %v111, 4294901760
    %v3423 = vsub.f32 %v111, %v3422
    %3424 = vmatpush1.msra.mxu0 %v3423
    %v3425 = vand.u32 %v104, 4294901760
    %v3426 = vsub.f32 %v104, %v3425
    %3427 = vmatprep.subr.mxu0 %v3426
    %v3428 = vand.u32 %v103, 4294901760
    %v3429 = vsub.f32 %v103, %v3428
    %3430 = vmatpush1.msra.mxu0 %v3429
    %v3431 = vand.u32 %v96, 4294901760
    %v3432 = vsub.f32 %v96, %v3431
    %3433 = vmatprep.subr.mxu0 %v3432
    %v3434 = vand.u32 %v95, 4294901760
    %v3435 = vsub.f32 %v95, %v3434
    %3436 = vmatpush1.msra.mxu0 %v3435
    %v3437 = vand.u32 %v88, 4294901760
    %v3438 = vsub.f32 %v88, %v3437
    %3439 = vmatprep.subr.mxu0 %v3438
    %v3440 = vand.u32 %v87, 4294901760
    %v3441 = vsub.f32 %v87, %v3440
    %3442 = vmatpush1.msra.mxu0 %v3441
    %v3443 = vand.u32 %v80, 4294901760
    %v3444 = vsub.f32 %v80, %v3443
    %3445 = vmatprep.subr.mxu0 %v3444
    %v3446 = vand.u32 %v79, 4294901760
    %v3447 = vsub.f32 %v79, %v3446
    %3448 = vmatpush1.msra.mxu0 %v3447
    %v3449 = vand.u32 %v72, 4294901760
    %v3450 = vsub.f32 %v72, %v3449
    %3451 = vmatprep.subr.mxu0 %v3450
    %v3452 = vand.u32 %v71, 4294901760
    %v3453 = vsub.f32 %v71, %v3452
    %3454 = vmatpush1.msra.mxu0 %v3453
    %v3455 = vand.u32 %v64, 4294901760
    %v3456 = vsub.f32 %v64, %v3455
    %3457 = vmatprep.subr.mxu0 %v3456
    %v3458 = vand.u32 %v63, 4294901760
    %v3459 = vsub.f32 %v63, %v3458
    %3460 = vmatpush1.msra.mxu0 %v3459
    %v3461 = vand.u32 %v56, 4294901760
    %v3462 = vsub.f32 %v56, %v3461
    %3463 = vmatprep.subr.mxu0 %v3462
    %v3464 = vand.u32 %v55, 4294901760
    %v3465 = vsub.f32 %v55, %v3464
    %3466 = vmatpush1.msra.mxu0 %v3465
    %v3467 = vand.u32 %v48, 4294901760
    %v3468 = vsub.f32 %v48, %v3467
    %3469 = vmatprep.subr.mxu0 %v3468
    %v3470 = vand.u32 %v47, 4294901760
    %v3471 = vsub.f32 %v47, %v3470
    %3472 = vmatpush1.msra.mxu0 %v3471
    %v3473 = vand.u32 %v40, 4294901760
    %v3474 = vsub.f32 %v40, %v3473
    %3475 = vmatprep.subr.mxu0 %v3474
    %v3476 = vand.u32 %v39, 4294901760
    %v3477 = vsub.f32 %v39, %v3476
    %3478 = vmatpush1.msra.mxu0 %v3477
    %v3479 = vand.u32 %v32, 4294901760
    %v3480 = vsub.f32 %v32, %v3479
    %3481 = vmatprep.subr.mxu0 %v3480
    %v3482 = vand.u32 %v31, 4294901760
    %v3483 = vsub.f32 %v31, %v3482
    %3484 = vmatpush1.msra.mxu0 %v3483
    %v3485 = vand.u32 %v280, 4294901760
    %v3486 = vsub.f32 %v280, %v3485
    %3487 = vmatprep.subr.mxu0 %v3486
    %v3488 = vand.u32 %v279, 4294901760
    %v3489 = vsub.f32 %v279, %v3488
    %3490 = vmatpush2.msra.mxu0 %v3489
    %v3491 = vand.u32 %v272, 4294901760
    %v3492 = vsub.f32 %v272, %v3491
    %3493 = vmatprep.subr.mxu0 %v3492
    %v3494 = vand.u32 %v271, 4294901760
    %v3495 = vsub.f32 %v271, %v3494
    %3496 = vmatpush2.msra.mxu0 %v3495
    %v3497 = vand.u32 %v264, 4294901760
    %v3498 = vsub.f32 %v264, %v3497
    %3499 = vmatprep.subr.mxu0 %v3498
    %v3500 = vand.u32 %v263, 4294901760
    %v3501 = vsub.f32 %v263, %v3500
    %3502 = vmatpush2.msra.mxu0 %v3501
    %v3503 = vand.u32 %v256, 4294901760
    %v3504 = vsub.f32 %v256, %v3503
    %3505 = vmatprep.subr.mxu0 %v3504
    %v3506 = vand.u32 %v255, 4294901760
    %v3507 = vsub.f32 %v255, %v3506
    %3508 = vmatpush2.msra.mxu0 %v3507
    %v3509 = vand.u32 %v248, 4294901760
    %v3510 = vsub.f32 %v248, %v3509
    %3511 = vmatprep.subr.mxu0 %v3510
    %v3512 = vand.u32 %v247, 4294901760
    %v3513 = vsub.f32 %v247, %v3512
    %3514 = vmatpush2.msra.mxu0 %v3513
    %v3515 = vand.u32 %v240, 4294901760
    %v3516 = vsub.f32 %v240, %v3515
    %3517 = vmatprep.subr.mxu0 %v3516
    %v3518 = vand.u32 %v239, 4294901760
    %v3519 = vsub.f32 %v239, %v3518
    %3520 = vmatpush2.msra.mxu0 %v3519
    %v3521 = vand.u32 %v232, 4294901760
    %v3522 = vsub.f32 %v232, %v3521
    %3523 = vmatprep.subr.mxu0 %v3522
    %v3524 = vand.u32 %v231, 4294901760
    %v3525 = vsub.f32 %v231, %v3524
    %3526 = vmatpush2.msra.mxu0 %v3525
    %v3527 = vand.u32 %v224, 4294901760
    %v3528 = vsub.f32 %v224, %v3527
    %3529 = vmatprep.subr.mxu0 %v3528
    %v3530 = vand.u32 %v223, 4294901760
    %v3531 = vsub.f32 %v223, %v3530
    %3532 = vmatpush2.msra.mxu0 %v3531
    %v3533 = vand.u32 %v216, 4294901760
    %v3534 = vsub.f32 %v216, %v3533
    %3535 = vmatprep.subr.mxu0 %v3534
    %v3536 = vand.u32 %v215, 4294901760
    %v3537 = vsub.f32 %v215, %v3536
    %3538 = vmatpush2.msra.mxu0 %v3537
    %v3539 = vand.u32 %v208, 4294901760
    %v3540 = vsub.f32 %v208, %v3539
    %3541 = vmatprep.subr.mxu0 %v3540
    %v3542 = vand.u32 %v207, 4294901760
    %v3543 = vsub.f32 %v207, %v3542
    %3544 = vmatpush2.msra.mxu0 %v3543
    %v3545 = vand.u32 %v200, 4294901760
    %v3546 = vsub.f32 %v200, %v3545
    %3547 = vmatprep.subr.mxu0 %v3546
    %v3548 = vand.u32 %v199, 4294901760
    %v3549 = vsub.f32 %v199, %v3548
    %3550 = vmatpush2.msra.mxu0 %v3549
    %v3551 = vand.u32 %v192, 4294901760
    %v3552 = vsub.f32 %v192, %v3551
    %3553 = vmatprep.subr.mxu0 %v3552
    %v3554 = vand.u32 %v191, 4294901760
    %v3555 = vsub.f32 %v191, %v3554
    %3556 = vmatpush2.msra.mxu0 %v3555
    %v3557 = vand.u32 %v184, 4294901760
    %v3558 = vsub.f32 %v184, %v3557
    %3559 = vmatprep.subr.mxu0 %v3558
    %v3560 = vand.u32 %v183, 4294901760
    %v3561 = vsub.f32 %v183, %v3560
    %3562 = vmatpush2.msra.mxu0 %v3561
    %v3563 = vand.u32 %v176, 4294901760
    %v3564 = vsub.f32 %v176, %v3563
    %3565 = vmatprep.subr.mxu0 %v3564
    %v3566 = vand.u32 %v175, 4294901760
    %v3567 = vsub.f32 %v175, %v3566
    %3568 = vmatpush2.msra.mxu0 %v3567
    %v3569 = vand.u32 %v168, 4294901760
    %v3570 = vsub.f32 %v168, %v3569
    %3571 = vmatprep.subr.mxu0 %v3570
    %v3572 = vand.u32 %v167, 4294901760
    %v3573 = vsub.f32 %v167, %v3572
    %3574 = vmatpush2.msra.mxu0 %v3573
    %v3575 = vand.u32 %v160, 4294901760
    %v3576 = vsub.f32 %v160, %v3575
    %3577 = vmatprep.subr.mxu0 %v3576
    %v3578 = vand.u32 %v159, 4294901760
    %v3579 = vsub.f32 %v159, %v3578
    %3580 = vmatpush2.msra.mxu0 %v3579
    %v3581 = vand.u32 %v26, 4294901760
    %v3582 = vsub.f32 %v26, %v3581
    %3583 = vmatprep.mubr.f32.mxu0 %v3582
    %v3584 = vand.u32 %v25, 4294901760
    %v3585 = vsub.f32 %v25, %v3584
    %3586 = vmatmul.mubr.f32.gmra.mxu0 %v3585
    %v3587 = vpop.f32.mrf.mxu0
    %v3588 = vadd.f32 %v3385, %v3587
    %v3589 = vpop.f32.mrf.mxu0
    %v3590 = vadd.f32 %v3387, %v3589
    %3591 = vdwg.mxu0
    %v3592 = vand.u32 %v152, 4294901760
    %3593 = vmatprep.subr.mxu0 %v3592
    %v3594 = vand.u32 %v151, 4294901760
    %3595 = vmatpush1.msra.mxu0 %v3594
    %v3596 = vand.u32 %v144, 4294901760
    %3597 = vmatprep.subr.mxu0 %v3596
    %v3598 = vand.u32 %v143, 4294901760
    %3599 = vmatpush1.msra.mxu0 %v3598
    %v3600 = vand.u32 %v136, 4294901760
    %3601 = vmatprep.subr.mxu0 %v3600
    %v3602 = vand.u32 %v135, 4294901760
    %3603 = vmatpush1.msra.mxu0 %v3602
    %v3604 = vand.u32 %v128, 4294901760
    %3605 = vmatprep.subr.mxu0 %v3604
    %v3606 = vand.u32 %v127, 4294901760
    %3607 = vmatpush1.msra.mxu0 %v3606
    %v3608 = vand.u32 %v120, 4294901760
    %3609 = vmatprep.subr.mxu0 %v3608
    %v3610 = vand.u32 %v119, 4294901760
    %3611 = vmatpush1.msra.mxu0 %v3610
    %v3612 = vand.u32 %v112, 4294901760
    %3613 = vmatprep.subr.mxu0 %v3612
    %v3614 = vand.u32 %v111, 4294901760
    %3615 = vmatpush1.msra.mxu0 %v3614
    %v3616 = vand.u32 %v104, 4294901760
    %3617 = vmatprep.subr.mxu0 %v3616
    %v3618 = vand.u32 %v103, 4294901760
    %3619 = vmatpush1.msra.mxu0 %v3618
    %v3620 = vand.u32 %v96, 4294901760
    %3621 = vmatprep.subr.mxu0 %v3620
    %v3622 = vand.u32 %v95, 4294901760
    %3623 = vmatpush1.msra.mxu0 %v3622
    %v3624 = vand.u32 %v88, 4294901760
    %3625 = vmatprep.subr.mxu0 %v3624
    %v3626 = vand.u32 %v87, 4294901760
    %3627 = vmatpush1.msra.mxu0 %v3626
    %v3628 = vand.u32 %v80, 4294901760
    %3629 = vmatprep.subr.mxu0 %v3628
    %v3630 = vand.u32 %v79, 4294901760
    %3631 = vmatpush1.msra.mxu0 %v3630
    %v3632 = vand.u32 %v72, 4294901760
    %3633 = vmatprep.subr.mxu0 %v3632
    %v3634 = vand.u32 %v71, 4294901760
    %3635 = vmatpush1.msra.mxu0 %v3634
    %v3636 = vand.u32 %v64, 4294901760
    %3637 = vmatprep.subr.mxu0 %v3636
    %v3638 = vand.u32 %v63, 4294901760
    %3639 = vmatpush1.msra.mxu0 %v3638
    %v3640 = vand.u32 %v56, 4294901760
    %3641 = vmatprep.subr.mxu0 %v3640
    %v3642 = vand.u32 %v55, 4294901760
    %3643 = vmatpush1.msra.mxu0 %v3642
    %v3644 = vand.u32 %v48, 4294901760
    %3645 = vmatprep.subr.mxu0 %v3644
    %v3646 = vand.u32 %v47, 4294901760
    %3647 = vmatpush1.msra.mxu0 %v3646
    %v3648 = vand.u32 %v40, 4294901760
    %3649 = vmatprep.subr.mxu0 %v3648
    %v3650 = vand.u32 %v39, 4294901760
    %3651 = vmatpush1.msra.mxu0 %v3650
    %v3652 = vand.u32 %v32, 4294901760
    %3653 = vmatprep.subr.mxu0 %v3652
    %v3654 = vand.u32 %v31, 4294901760
    %3655 = vmatpush1.msra.mxu0 %v3654
    %v3656 = vand.u32 %v280, 4294901760
    %3657 = vmatprep.subr.mxu0 %v3656
    %v3658 = vand.u32 %v279, 4294901760
    %3659 = vmatpush2.msra.mxu0 %v3658
    %v3660 = vand.u32 %v272, 4294901760
    %3661 = vmatprep.subr.mxu0 %v3660
    %v3662 = vand.u32 %v271, 4294901760
    %3663 = vmatpush2.msra.mxu0 %v3662
    %v3664 = vand.u32 %v264, 4294901760
    %3665 = vmatprep.subr.mxu0 %v3664
    %v3666 = vand.u32 %v263, 4294901760
    %3667 = vmatpush2.msra.mxu0 %v3666
    %v3668 = vand.u32 %v256, 4294901760
    %3669 = vmatprep.subr.mxu0 %v3668
    %v3670 = vand.u32 %v255, 4294901760
    %3671 = vmatpush2.msra.mxu0 %v3670
    %v3672 = vand.u32 %v248, 4294901760
    %3673 = vmatprep.subr.mxu0 %v3672
    %v3674 = vand.u32 %v247, 4294901760
    %3675 = vmatpush2.msra.mxu0 %v3674
    %v3676 = vand.u32 %v240, 4294901760
    %3677 = vmatprep.subr.mxu0 %v3676
    %v3678 = vand.u32 %v239, 4294901760
    %3679 = vmatpush2.msra.mxu0 %v3678
    %v3680 = vand.u32 %v232, 4294901760
    %3681 = vmatprep.subr.mxu0 %v3680
    %v3682 = vand.u32 %v231, 4294901760
    %3683 = vmatpush2.msra.mxu0 %v3682
    %v3684 = vand.u32 %v224, 4294901760
    %3685 = vmatprep.subr.mxu0 %v3684
    %v3686 = vand.u32 %v223, 4294901760
    %3687 = vmatpush2.msra.mxu0 %v3686
    %v3688 = vand.u32 %v216, 4294901760
    %3689 = vmatprep.subr.mxu0 %v3688
    %v3690 = vand.u32 %v215, 4294901760
    %3691 = vmatpush2.msra.mxu0 %v3690
    %v3692 = vand.u32 %v208, 4294901760
    %3693 = vmatprep.subr.mxu0 %v3692
    %v3694 = vand.u32 %v207, 4294901760
    %3695 = vmatpush2.msra.mxu0 %v3694
    %v3696 = vand.u32 %v200, 4294901760
    %3697 = vmatprep.subr.mxu0 %v3696
    %v3698 = vand.u32 %v199, 4294901760
    %3699 = vmatpush2.msra.mxu0 %v3698
    %v3700 = vand.u32 %v192, 4294901760
    %3701 = vmatprep.subr.mxu0 %v3700
    %v3702 = vand.u32 %v191, 4294901760
    %3703 = vmatpush2.msra.mxu0 %v3702
    %v3704 = vand.u32 %v184, 4294901760
    %3705 = vmatprep.subr.mxu0 %v3704
    %v3706 = vand.u32 %v183, 4294901760
    %3707 = vmatpush2.msra.mxu0 %v3706
    %v3708 = vand.u32 %v176, 4294901760
    %3709 = vmatprep.subr.mxu0 %v3708
    %v3710 = vand.u32 %v175, 4294901760
    %3711 = vmatpush2.msra.mxu0 %v3710
    %v3712 = vand.u32 %v168, 4294901760
    %3713 = vmatprep.subr.mxu0 %v3712
    %v3714 = vand.u32 %v167, 4294901760
    %3715 = vmatpush2.msra.mxu0 %v3714
    %v3716 = vand.u32 %v160, 4294901760
    %3717 = vmatprep.subr.mxu0 %v3716
    %v3718 = vand.u32 %v159, 4294901760
    %3719 = vmatpush2.msra.mxu0 %v3718
    %v3720 = vand.u32 %v26, 4294901760
    %v3721 = vsub.f32 %v26, %v3720
    %v3722 = vand.u32 %v3721, 4294901760
    %3723 = vmatprep.mubr.f32.mxu0 %v3722
    %v3724 = vand.u32 %v25, 4294901760
    %v3725 = vsub.f32 %v25, %v3724
    %v3726 = vand.u32 %v3725, 4294901760
    %3727 = vmatmul.mubr.f32.gmra.mxu0 %v3726
    %v3728 = vpop.f32.mrf.mxu0
    %v3729 = vadd.f32 %v3588, %v3728
    %v3730 = vpop.f32.mrf.mxu0
    %v3731 = vadd.f32 %v3590, %v3730
    %3732 = vdwg.mxu0
    %v3733 = vand.u32 %v152, 4294901760
    %v3734 = vsub.f32 %v152, %v3733
    %v3735 = vand.u32 %v3734, 4294901760
    %3736 = vmatprep.subr.mxu0 %v3735
    %v3737 = vand.u32 %v151, 4294901760
    %v3738 = vsub.f32 %v151, %v3737
    %v3739 = vand.u32 %v3738, 4294901760
    %3740 = vmatpush1.msra.mxu0 %v3739
    %v3741 = vand.u32 %v144, 4294901760
    %v3742 = vsub.f32 %v144, %v3741
    %v3743 = vand.u32 %v3742, 4294901760
    %3744 = vmatprep.subr.mxu0 %v3743
    %v3745 = vand.u32 %v143, 4294901760
    %v3746 = vsub.f32 %v143, %v3745
    %v3747 = vand.u32 %v3746, 4294901760
    %3748 = vmatpush1.msra.mxu0 %v3747
    %v3749 = vand.u32 %v136, 4294901760
    %v3750 = vsub.f32 %v136, %v3749
    %v3751 = vand.u32 %v3750, 4294901760
    %3752 = vmatprep.subr.mxu0 %v3751
    %v3753 = vand.u32 %v135, 4294901760
    %v3754 = vsub.f32 %v135, %v3753
    %v3755 = vand.u32 %v3754, 4294901760
    %3756 = vmatpush1.msra.mxu0 %v3755
    %v3757 = vand.u32 %v128, 4294901760
    %v3758 = vsub.f32 %v128, %v3757
    %v3759 = vand.u32 %v3758, 4294901760
    %3760 = vmatprep.subr.mxu0 %v3759
    %v3761 = vand.u32 %v127, 4294901760
    %v3762 = vsub.f32 %v127, %v3761
    %v3763 = vand.u32 %v3762, 4294901760
    %3764 = vmatpush1.msra.mxu0 %v3763
    %v3765 = vand.u32 %v120, 4294901760
    %v3766 = vsub.f32 %v120, %v3765
    %v3767 = vand.u32 %v3766, 4294901760
    %3768 = vmatprep.subr.mxu0 %v3767
    %v3769 = vand.u32 %v119, 4294901760
    %v3770 = vsub.f32 %v119, %v3769
    %v3771 = vand.u32 %v3770, 4294901760
    %3772 = vmatpush1.msra.mxu0 %v3771
    %v3773 = vand.u32 %v112, 4294901760
    %v3774 = vsub.f32 %v112, %v3773
    %v3775 = vand.u32 %v3774, 4294901760
    %3776 = vmatprep.subr.mxu0 %v3775
    %v3777 = vand.u32 %v111, 4294901760
    %v3778 = vsub.f32 %v111, %v3777
    %v3779 = vand.u32 %v3778, 4294901760
    %3780 = vmatpush1.msra.mxu0 %v3779
    %v3781 = vand.u32 %v104, 4294901760
    %v3782 = vsub.f32 %v104, %v3781
    %v3783 = vand.u32 %v3782, 4294901760
    %3784 = vmatprep.subr.mxu0 %v3783
    %v3785 = vand.u32 %v103, 4294901760
    %v3786 = vsub.f32 %v103, %v3785
    %v3787 = vand.u32 %v3786, 4294901760
    %3788 = vmatpush1.msra.mxu0 %v3787
    %v3789 = vand.u32 %v96, 4294901760
    %v3790 = vsub.f32 %v96, %v3789
    %v3791 = vand.u32 %v3790, 4294901760
    %3792 = vmatprep.subr.mxu0 %v3791
    %v3793 = vand.u32 %v95, 4294901760
    %v3794 = vsub.f32 %v95, %v3793
    %v3795 = vand.u32 %v3794, 4294901760
    %3796 = vmatpush1.msra.mxu0 %v3795
    %v3797 = vand.u32 %v88, 4294901760
    %v3798 = vsub.f32 %v88, %v3797
    %v3799 = vand.u32 %v3798, 4294901760
    %3800 = vmatprep.subr.mxu0 %v3799
    %v3801 = vand.u32 %v87, 4294901760
    %v3802 = vsub.f32 %v87, %v3801
    %v3803 = vand.u32 %v3802, 4294901760
    %3804 = vmatpush1.msra.mxu0 %v3803
    %v3805 = vand.u32 %v80, 4294901760
    %v3806 = vsub.f32 %v80, %v3805
    %v3807 = vand.u32 %v3806, 4294901760
    %3808 = vmatprep.subr.mxu0 %v3807
    %v3809 = vand.u32 %v79, 4294901760
    %v3810 = vsub.f32 %v79, %v3809
    %v3811 = vand.u32 %v3810, 4294901760
    %3812 = vmatpush1.msra.mxu0 %v3811
    %v3813 = vand.u32 %v72, 4294901760
    %v3814 = vsub.f32 %v72, %v3813
    %v3815 = vand.u32 %v3814, 4294901760
    %3816 = vmatprep.subr.mxu0 %v3815
    %v3817 = vand.u32 %v71, 4294901760
    %v3818 = vsub.f32 %v71, %v3817
    %v3819 = vand.u32 %v3818, 4294901760
    %3820 = vmatpush1.msra.mxu0 %v3819
    %v3821 = vand.u32 %v64, 4294901760
    %v3822 = vsub.f32 %v64, %v3821
    %v3823 = vand.u32 %v3822, 4294901760
    %3824 = vmatprep.subr.mxu0 %v3823
    %v3825 = vand.u32 %v63, 4294901760
    %v3826 = vsub.f32 %v63, %v3825
    %v3827 = vand.u32 %v3826, 4294901760
    %3828 = vmatpush1.msra.mxu0 %v3827
    %v3829 = vand.u32 %v56, 4294901760
    %v3830 = vsub.f32 %v56, %v3829
    %v3831 = vand.u32 %v3830, 4294901760
    %3832 = vmatprep.subr.mxu0 %v3831
    %v3833 = vand.u32 %v55, 4294901760
    %v3834 = vsub.f32 %v55, %v3833
    %v3835 = vand.u32 %v3834, 4294901760
    %3836 = vmatpush1.msra.mxu0 %v3835
    %v3837 = vand.u32 %v48, 4294901760
    %v3838 = vsub.f32 %v48, %v3837
    %v3839 = vand.u32 %v3838, 4294901760
    %3840 = vmatprep.subr.mxu0 %v3839
    %v3841 = vand.u32 %v47, 4294901760
    %v3842 = vsub.f32 %v47, %v3841
    %v3843 = vand.u32 %v3842, 4294901760
    %3844 = vmatpush1.msra.mxu0 %v3843
    %v3845 = vand.u32 %v40, 4294901760
    %v3846 = vsub.f32 %v40, %v3845
    %v3847 = vand.u32 %v3846, 4294901760
    %3848 = vmatprep.subr.mxu0 %v3847
    %v3849 = vand.u32 %v39, 4294901760
    %v3850 = vsub.f32 %v39, %v3849
    %v3851 = vand.u32 %v3850, 4294901760
    %3852 = vmatpush1.msra.mxu0 %v3851
    %v3853 = vand.u32 %v32, 4294901760
    %v3854 = vsub.f32 %v32, %v3853
    %v3855 = vand.u32 %v3854, 4294901760
    %3856 = vmatprep.subr.mxu0 %v3855
    %v3857 = vand.u32 %v31, 4294901760
    %v3858 = vsub.f32 %v31, %v3857
    %v3859 = vand.u32 %v3858, 4294901760
    %3860 = vmatpush1.msra.mxu0 %v3859
    %v3861 = vand.u32 %v280, 4294901760
    %v3862 = vsub.f32 %v280, %v3861
    %v3863 = vand.u32 %v3862, 4294901760
    %3864 = vmatprep.subr.mxu0 %v3863
    %v3865 = vand.u32 %v279, 4294901760
    %v3866 = vsub.f32 %v279, %v3865
    %v3867 = vand.u32 %v3866, 4294901760
    %3868 = vmatpush2.msra.mxu0 %v3867
    %v3869 = vand.u32 %v272, 4294901760
    %v3870 = vsub.f32 %v272, %v3869
    %v3871 = vand.u32 %v3870, 4294901760
    %3872 = vmatprep.subr.mxu0 %v3871
    %v3873 = vand.u32 %v271, 4294901760
    %v3874 = vsub.f32 %v271, %v3873
    %v3875 = vand.u32 %v3874, 4294901760
    %3876 = vmatpush2.msra.mxu0 %v3875
    %v3877 = vand.u32 %v264, 4294901760
    %v3878 = vsub.f32 %v264, %v3877
    %v3879 = vand.u32 %v3878, 4294901760
    %3880 = vmatprep.subr.mxu0 %v3879
    %v3881 = vand.u32 %v263, 4294901760
    %v3882 = vsub.f32 %v263, %v3881
    %v3883 = vand.u32 %v3882, 4294901760
    %3884 = vmatpush2.msra.mxu0 %v3883
    %v3885 = vand.u32 %v256, 4294901760
    %v3886 = vsub.f32 %v256, %v3885
    %v3887 = vand.u32 %v3886, 4294901760
    %3888 = vmatprep.subr.mxu0 %v3887
    %v3889 = vand.u32 %v255, 4294901760
    %v3890 = vsub.f32 %v255, %v3889
    %v3891 = vand.u32 %v3890, 4294901760
    %3892 = vmatpush2.msra.mxu0 %v3891
    %v3893 = vand.u32 %v248, 4294901760
    %v3894 = vsub.f32 %v248, %v3893
    %v3895 = vand.u32 %v3894, 4294901760
    %3896 = vmatprep.subr.mxu0 %v3895
    %v3897 = vand.u32 %v247, 4294901760
    %v3898 = vsub.f32 %v247, %v3897
    %v3899 = vand.u32 %v3898, 4294901760
    %3900 = vmatpush2.msra.mxu0 %v3899
    %v3901 = vand.u32 %v240, 4294901760
    %v3902 = vsub.f32 %v240, %v3901
    %v3903 = vand.u32 %v3902, 4294901760
    %3904 = vmatprep.subr.mxu0 %v3903
    %v3905 = vand.u32 %v239, 4294901760
    %v3906 = vsub.f32 %v239, %v3905
    %v3907 = vand.u32 %v3906, 4294901760
    %3908 = vmatpush2.msra.mxu0 %v3907
    %v3909 = vand.u32 %v232, 4294901760
    %v3910 = vsub.f32 %v232, %v3909
    %v3911 = vand.u32 %v3910, 4294901760
    %3912 = vmatprep.subr.mxu0 %v3911
    %v3913 = vand.u32 %v231, 4294901760
    %v3914 = vsub.f32 %v231, %v3913
    %v3915 = vand.u32 %v3914, 4294901760
    %3916 = vmatpush2.msra.mxu0 %v3915
    %v3917 = vand.u32 %v224, 4294901760
    %v3918 = vsub.f32 %v224, %v3917
    %v3919 = vand.u32 %v3918, 4294901760
    %3920 = vmatprep.subr.mxu0 %v3919
    %v3921 = vand.u32 %v223, 4294901760
    %v3922 = vsub.f32 %v223, %v3921
    %v3923 = vand.u32 %v3922, 4294901760
    %3924 = vmatpush2.msra.mxu0 %v3923
    %v3925 = vand.u32 %v216, 4294901760
    %v3926 = vsub.f32 %v216, %v3925
    %v3927 = vand.u32 %v3926, 4294901760
    %3928 = vmatprep.subr.mxu0 %v3927
    %v3929 = vand.u32 %v215, 4294901760
    %v3930 = vsub.f32 %v215, %v3929
    %v3931 = vand.u32 %v3930, 4294901760
    %3932 = vmatpush2.msra.mxu0 %v3931
    %v3933 = vand.u32 %v208, 4294901760
    %v3934 = vsub.f32 %v208, %v3933
    %v3935 = vand.u32 %v3934, 4294901760
    %3936 = vmatprep.subr.mxu0 %v3935
    %v3937 = vand.u32 %v207, 4294901760
    %v3938 = vsub.f32 %v207, %v3937
    %v3939 = vand.u32 %v3938, 4294901760
    %3940 = vmatpush2.msra.mxu0 %v3939
    %v3941 = vand.u32 %v200, 4294901760
    %v3942 = vsub.f32 %v200, %v3941
    %v3943 = vand.u32 %v3942, 4294901760
    %3944 = vmatprep.subr.mxu0 %v3943
    %v3945 = vand.u32 %v199, 4294901760
    %v3946 = vsub.f32 %v199, %v3945
    %v3947 = vand.u32 %v3946, 4294901760
    %3948 = vmatpush2.msra.mxu0 %v3947
    %v3949 = vand.u32 %v192, 4294901760
    %v3950 = vsub.f32 %v192, %v3949
    %v3951 = vand.u32 %v3950, 4294901760
    %3952 = vmatprep.subr.mxu0 %v3951
    %v3953 = vand.u32 %v191, 4294901760
    %v3954 = vsub.f32 %v191, %v3953
    %v3955 = vand.u32 %v3954, 4294901760
    %3956 = vmatpush2.msra.mxu0 %v3955
    %v3957 = vand.u32 %v184, 4294901760
    %v3958 = vsub.f32 %v184, %v3957
    %v3959 = vand.u32 %v3958, 4294901760
    %3960 = vmatprep.subr.mxu0 %v3959
    %v3961 = vand.u32 %v183, 4294901760
    %v3962 = vsub.f32 %v183, %v3961
    %v3963 = vand.u32 %v3962, 4294901760
    %3964 = vmatpush2.msra.mxu0 %v3963
    %v3965 = vand.u32 %v176, 4294901760
    %v3966 = vsub.f32 %v176, %v3965
    %v3967 = vand.u32 %v3966, 4294901760
    %3968 = vmatprep.subr.mxu0 %v3967
    %v3969 = vand.u32 %v175, 4294901760
    %v3970 = vsub.f32 %v175, %v3969
    %v3971 = vand.u32 %v3970, 4294901760
    %3972 = vmatpush2.msra.mxu0 %v3971
    %v3973 = vand.u32 %v168, 4294901760
    %v3974 = vsub.f32 %v168, %v3973
    %v3975 = vand.u32 %v3974, 4294901760
    %3976 = vmatprep.subr.mxu0 %v3975
    %v3977 = vand.u32 %v167, 4294901760
    %v3978 = vsub.f32 %v167, %v3977
    %v3979 = vand.u32 %v3978, 4294901760
    %3980 = vmatpush2.msra.mxu0 %v3979
    %v3981 = vand.u32 %v160, 4294901760
    %v3982 = vsub.f32 %v160, %v3981
    %v3983 = vand.u32 %v3982, 4294901760
    %3984 = vmatprep.subr.mxu0 %v3983
    %v3985 = vand.u32 %v159, 4294901760
    %v3986 = vsub.f32 %v159, %v3985
    %v3987 = vand.u32 %v3986, 4294901760
    %3988 = vmatpush2.msra.mxu0 %v3987
    %v3989 = vand.u32 %v26, 4294901760
    %3990 = vmatprep.mubr.f32.mxu0 %v3989
    %v3991 = vand.u32 %v25, 4294901760
    %3992 = vmatmul.mubr.f32.gmra.mxu0 %v3991
    %v3993 = vpop.f32.mrf.mxu0
    %v3994 = vadd.f32 %v3729, %v3993
    %v3995 = vpop.f32.mrf.mxu0
    %v3996 = vadd.f32 %v3731, %v3995
    %3997 = vdwg.mxu0
    %v3998 = vand.u32 %v152, 4294901760
    %3999 = vmatprep.subr.mxu0 %v3998
    %v4000 = vand.u32 %v151, 4294901760
    %4001 = vmatpush1.msra.mxu0 %v4000
    %v4002 = vand.u32 %v144, 4294901760
    %4003 = vmatprep.subr.mxu0 %v4002
    %v4004 = vand.u32 %v143, 4294901760
    %4005 = vmatpush1.msra.mxu0 %v4004
    %v4006 = vand.u32 %v136, 4294901760
    %4007 = vmatprep.subr.mxu0 %v4006
    %v4008 = vand.u32 %v135, 4294901760
    %4009 = vmatpush1.msra.mxu0 %v4008
    %v4010 = vand.u32 %v128, 4294901760
    %4011 = vmatprep.subr.mxu0 %v4010
    %v4012 = vand.u32 %v127, 4294901760
    %4013 = vmatpush1.msra.mxu0 %v4012
    %v4014 = vand.u32 %v120, 4294901760
    %4015 = vmatprep.subr.mxu0 %v4014
    %v4016 = vand.u32 %v119, 4294901760
    %4017 = vmatpush1.msra.mxu0 %v4016
    %v4018 = vand.u32 %v112, 4294901760
    %4019 = vmatprep.subr.mxu0 %v4018
    %v4020 = vand.u32 %v111, 4294901760
    %4021 = vmatpush1.msra.mxu0 %v4020
    %v4022 = vand.u32 %v104, 4294901760
    %4023 = vmatprep.subr.mxu0 %v4022
    %v4024 = vand.u32 %v103, 4294901760
    %4025 = vmatpush1.msra.mxu0 %v4024
    %v4026 = vand.u32 %v96, 4294901760
    %4027 = vmatprep.subr.mxu0 %v4026
    %v4028 = vand.u32 %v95, 4294901760
    %4029 = vmatpush1.msra.mxu0 %v4028
    %v4030 = vand.u32 %v88, 4294901760
    %4031 = vmatprep.subr.mxu0 %v4030
    %v4032 = vand.u32 %v87, 4294901760
    %4033 = vmatpush1.msra.mxu0 %v4032
    %v4034 = vand.u32 %v80, 4294901760
    %4035 = vmatprep.subr.mxu0 %v4034
    %v4036 = vand.u32 %v79, 4294901760
    %4037 = vmatpush1.msra.mxu0 %v4036
    %v4038 = vand.u32 %v72, 4294901760
    %4039 = vmatprep.subr.mxu0 %v4038
    %v4040 = vand.u32 %v71, 4294901760
    %4041 = vmatpush1.msra.mxu0 %v4040
    %v4042 = vand.u32 %v64, 4294901760
    %4043 = vmatprep.subr.mxu0 %v4042
    %v4044 = vand.u32 %v63, 4294901760
    %4045 = vmatpush1.msra.mxu0 %v4044
    %v4046 = vand.u32 %v56, 4294901760
    %4047 = vmatprep.subr.mxu0 %v4046
    %v4048 = vand.u32 %v55, 4294901760
    %4049 = vmatpush1.msra.mxu0 %v4048
    %v4050 = vand.u32 %v48, 4294901760
    %4051 = vmatprep.subr.mxu0 %v4050
    %v4052 = vand.u32 %v47, 4294901760
    %4053 = vmatpush1.msra.mxu0 %v4052
    %v4054 = vand.u32 %v40, 4294901760
    %4055 = vmatprep.subr.mxu0 %v4054
    %v4056 = vand.u32 %v39, 4294901760
    %4057 = vmatpush1.msra.mxu0 %v4056
    %v4058 = vand.u32 %v32, 4294901760
    %4059 = vmatprep.subr.mxu0 %v4058
    %v4060 = vand.u32 %v31, 4294901760
    %4061 = vmatpush1.msra.mxu0 %v4060
    %v4062 = vand.u32 %v280, 4294901760
    %4063 = vmatprep.subr.mxu0 %v4062
    %v4064 = vand.u32 %v279, 4294901760
    %4065 = vmatpush2.msra.mxu0 %v4064
    %v4066 = vand.u32 %v272, 4294901760
    %4067 = vmatprep.subr.mxu0 %v4066
    %v4068 = vand.u32 %v271, 4294901760
    %4069 = vmatpush2.msra.mxu0 %v4068
    %v4070 = vand.u32 %v264, 4294901760
    %4071 = vmatprep.subr.mxu0 %v4070
    %v4072 = vand.u32 %v263, 4294901760
    %4073 = vmatpush2.msra.mxu0 %v4072
    %v4074 = vand.u32 %v256, 4294901760
    %4075 = vmatprep.subr.mxu0 %v4074
    %v4076 = vand.u32 %v255, 4294901760
    %4077 = vmatpush2.msra.mxu0 %v4076
    %v4078 = vand.u32 %v248, 4294901760
    %4079 = vmatprep.subr.mxu0 %v4078
    %v4080 = vand.u32 %v247, 4294901760
    %4081 = vmatpush2.msra.mxu0 %v4080
    %v4082 = vand.u32 %v240, 4294901760
    %4083 = vmatprep.subr.mxu0 %v4082
    %v4084 = vand.u32 %v239, 4294901760
    %4085 = vmatpush2.msra.mxu0 %v4084
    %v4086 = vand.u32 %v232, 4294901760
    %4087 = vmatprep.subr.mxu0 %v4086
    %v4088 = vand.u32 %v231, 4294901760
    %4089 = vmatpush2.msra.mxu0 %v4088
    %v4090 = vand.u32 %v224, 4294901760
    %4091 = vmatprep.subr.mxu0 %v4090
    %v4092 = vand.u32 %v223, 4294901760
    %4093 = vmatpush2.msra.mxu0 %v4092
    %v4094 = vand.u32 %v216, 4294901760
    %4095 = vmatprep.subr.mxu0 %v4094
    %v4096 = vand.u32 %v215, 4294901760
    %4097 = vmatpush2.msra.mxu0 %v4096
    %v4098 = vand.u32 %v208, 4294901760
    %4099 = vmatprep.subr.mxu0 %v4098
    %v4100 = vand.u32 %v207, 4294901760
    %4101 = vmatpush2.msra.mxu0 %v4100
    %v4102 = vand.u32 %v200, 4294901760
    %4103 = vmatprep.subr.mxu0 %v4102
    %v4104 = vand.u32 %v199, 4294901760
    %4105 = vmatpush2.msra.mxu0 %v4104
    %v4106 = vand.u32 %v192, 4294901760
    %4107 = vmatprep.subr.mxu0 %v4106
    %v4108 = vand.u32 %v191, 4294901760
    %4109 = vmatpush2.msra.mxu0 %v4108
    %v4110 = vand.u32 %v184, 4294901760
    %4111 = vmatprep.subr.mxu0 %v4110
    %v4112 = vand.u32 %v183, 4294901760
    %4113 = vmatpush2.msra.mxu0 %v4112
    %v4114 = vand.u32 %v176, 4294901760
    %4115 = vmatprep.subr.mxu0 %v4114
    %v4116 = vand.u32 %v175, 4294901760
    %4117 = vmatpush2.msra.mxu0 %v4116
    %v4118 = vand.u32 %v168, 4294901760
    %4119 = vmatprep.subr.mxu0 %v4118
    %v4120 = vand.u32 %v167, 4294901760
    %4121 = vmatpush2.msra.mxu0 %v4120
    %v4122 = vand.u32 %v160, 4294901760
    %4123 = vmatprep.subr.mxu0 %v4122
    %v4124 = vand.u32 %v159, 4294901760
    %4125 = vmatpush2.msra.mxu0 %v4124
    %v4126 = vand.u32 %v26, 4294901760
    %4127 = vmatprep.mubr.f32.mxu0 %v4126
    %v4128 = vand.u32 %v25, 4294901760
    %4129 = vmatmul.mubr.f32.gmra.mxu0 %v4128
    %v4130 = vpop.f32.mrf.mxu0
    %v4131 = vadd.f32 %v3994, %v4130
    %v4132 = vpop.f32.mrf.mxu0
    %v4133 = vadd.f32 %v3996, %v4132
    %4134 = vdwg.mxu0
    %v4135 = vand.u32 %v154, 4294901760
    %4136 = vmatprep.subr.mxu0 %v4135
    %v4137 = vand.u32 %v153, 4294901760
    %4138 = vmatpush1.msra.mxu0 %v4137
    %v4139 = vand.u32 %v146, 4294901760
    %4140 = vmatprep.subr.mxu0 %v4139
    %v4141 = vand.u32 %v145, 4294901760
    %4142 = vmatpush1.msra.mxu0 %v4141
    %v4143 = vand.u32 %v138, 4294901760
    %4144 = vmatprep.subr.mxu0 %v4143
    %v4145 = vand.u32 %v137, 4294901760
    %4146 = vmatpush1.msra.mxu0 %v4145
    %v4147 = vand.u32 %v130, 4294901760
    %4148 = vmatprep.subr.mxu0 %v4147
    %v4149 = vand.u32 %v129, 4294901760
    %4150 = vmatpush1.msra.mxu0 %v4149
    %v4151 = vand.u32 %v122, 4294901760
    %4152 = vmatprep.subr.mxu0 %v4151
    %v4153 = vand.u32 %v121, 4294901760
    %4154 = vmatpush1.msra.mxu0 %v4153
    %v4155 = vand.u32 %v114, 4294901760
    %4156 = vmatprep.subr.mxu0 %v4155
    %v4157 = vand.u32 %v113, 4294901760
    %4158 = vmatpush1.msra.mxu0 %v4157
    %v4159 = vand.u32 %v106, 4294901760
    %4160 = vmatprep.subr.mxu0 %v4159
    %v4161 = vand.u32 %v105, 4294901760
    %4162 = vmatpush1.msra.mxu0 %v4161
    %v4163 = vand.u32 %v98, 4294901760
    %4164 = vmatprep.subr.mxu0 %v4163
    %v4165 = vand.u32 %v97, 4294901760
    %4166 = vmatpush1.msra.mxu0 %v4165
    %v4167 = vand.u32 %v90, 4294901760
    %4168 = vmatprep.subr.mxu0 %v4167
    %v4169 = vand.u32 %v89, 4294901760
    %4170 = vmatpush1.msra.mxu0 %v4169
    %v4171 = vand.u32 %v82, 4294901760
    %4172 = vmatprep.subr.mxu0 %v4171
    %v4173 = vand.u32 %v81, 4294901760
    %4174 = vmatpush1.msra.mxu0 %v4173
    %v4175 = vand.u32 %v74, 4294901760
    %4176 = vmatprep.subr.mxu0 %v4175
    %v4177 = vand.u32 %v73, 4294901760
    %4178 = vmatpush1.msra.mxu0 %v4177
    %v4179 = vand.u32 %v66, 4294901760
    %4180 = vmatprep.subr.mxu0 %v4179
    %v4181 = vand.u32 %v65, 4294901760
    %4182 = vmatpush1.msra.mxu0 %v4181
    %v4183 = vand.u32 %v58, 4294901760
    %4184 = vmatprep.subr.mxu0 %v4183
    %v4185 = vand.u32 %v57, 4294901760
    %4186 = vmatpush1.msra.mxu0 %v4185
    %v4187 = vand.u32 %v50, 4294901760
    %4188 = vmatprep.subr.mxu0 %v4187
    %v4189 = vand.u32 %v49, 4294901760
    %4190 = vmatpush1.msra.mxu0 %v4189
    %v4191 = vand.u32 %v42, 4294901760
    %4192 = vmatprep.subr.mxu0 %v4191
    %v4193 = vand.u32 %v41, 4294901760
    %4194 = vmatpush1.msra.mxu0 %v4193
    %v4195 = vand.u32 %v34, 4294901760
    %4196 = vmatprep.subr.mxu0 %v4195
    %v4197 = vand.u32 %v33, 4294901760
    %4198 = vmatpush1.msra.mxu0 %v4197
    %v4199 = vand.u32 %v282, 4294901760
    %4200 = vmatprep.subr.mxu0 %v4199
    %v4201 = vand.u32 %v281, 4294901760
    %4202 = vmatpush2.msra.mxu0 %v4201
    %v4203 = vand.u32 %v274, 4294901760
    %4204 = vmatprep.subr.mxu0 %v4203
    %v4205 = vand.u32 %v273, 4294901760
    %4206 = vmatpush2.msra.mxu0 %v4205
    %v4207 = vand.u32 %v266, 4294901760
    %4208 = vmatprep.subr.mxu0 %v4207
    %v4209 = vand.u32 %v265, 4294901760
    %4210 = vmatpush2.msra.mxu0 %v4209
    %v4211 = vand.u32 %v258, 4294901760
    %4212 = vmatprep.subr.mxu0 %v4211
    %v4213 = vand.u32 %v257, 4294901760
    %4214 = vmatpush2.msra.mxu0 %v4213
    %v4215 = vand.u32 %v250, 4294901760
    %4216 = vmatprep.subr.mxu0 %v4215
    %v4217 = vand.u32 %v249, 4294901760
    %4218 = vmatpush2.msra.mxu0 %v4217
    %v4219 = vand.u32 %v242, 4294901760
    %4220 = vmatprep.subr.mxu0 %v4219
    %v4221 = vand.u32 %v241, 4294901760
    %4222 = vmatpush2.msra.mxu0 %v4221
    %v4223 = vand.u32 %v234, 4294901760
    %4224 = vmatprep.subr.mxu0 %v4223
    %v4225 = vand.u32 %v233, 4294901760
    %4226 = vmatpush2.msra.mxu0 %v4225
    %v4227 = vand.u32 %v226, 4294901760
    %4228 = vmatprep.subr.mxu0 %v4227
    %v4229 = vand.u32 %v225, 4294901760
    %4230 = vmatpush2.msra.mxu0 %v4229
    %v4231 = vand.u32 %v218, 4294901760
    %4232 = vmatprep.subr.mxu0 %v4231
    %v4233 = vand.u32 %v217, 4294901760
    %4234 = vmatpush2.msra.mxu0 %v4233
    %v4235 = vand.u32 %v210, 4294901760
    %4236 = vmatprep.subr.mxu0 %v4235
    %v4237 = vand.u32 %v209, 4294901760
    %4238 = vmatpush2.msra.mxu0 %v4237
    %v4239 = vand.u32 %v202, 4294901760
    %4240 = vmatprep.subr.mxu0 %v4239
    %v4241 = vand.u32 %v201, 4294901760
    %4242 = vmatpush2.msra.mxu0 %v4241
    %v4243 = vand.u32 %v194, 4294901760
    %4244 = vmatprep.subr.mxu0 %v4243
    %v4245 = vand.u32 %v193, 4294901760
    %4246 = vmatpush2.msra.mxu0 %v4245
    %v4247 = vand.u32 %v186, 4294901760
    %4248 = vmatprep.subr.mxu0 %v4247
    %v4249 = vand.u32 %v185, 4294901760
    %4250 = vmatpush2.msra.mxu0 %v4249
    %v4251 = vand.u32 %v178, 4294901760
    %4252 = vmatprep.subr.mxu0 %v4251
    %v4253 = vand.u32 %v177, 4294901760
    %4254 = vmatpush2.msra.mxu0 %v4253
    %v4255 = vand.u32 %v170, 4294901760
    %4256 = vmatprep.subr.mxu0 %v4255
    %v4257 = vand.u32 %v169, 4294901760
    %4258 = vmatpush2.msra.mxu0 %v4257
    %v4259 = vand.u32 %v162, 4294901760
    %4260 = vmatprep.subr.mxu0 %v4259
    %v4261 = vand.u32 %v161, 4294901760
    %4262 = vmatpush2.msra.mxu0 %v4261
    %v4263 = vand.u32 %v26, 4294901760
    %v4264 = vsub.f32 %v26, %v4263
    %v4265 = vand.u32 %v4264, 4294901760
    %v4266 = vsub.f32 %v4264, %v4265
    %v4267 = vand.u32 %v4266, 4294901760
    %4268 = vmatprep.mubr.f32.mxu0 %v4267
    %v4269 = vand.u32 %v25, 4294901760
    %v4270 = vsub.f32 %v25, %v4269
    %v4271 = vand.u32 %v4270, 4294901760
    %v4272 = vsub.f32 %v4270, %v4271
    %v4273 = vand.u32 %v4272, 4294901760
    %4274 = vmatmul.mubr.f32.gmra.mxu0 %v4273
    %v4275 = vpop.f32.mrf.mxu0
    %v4276 = vadd.f32 0.0, %v4275
    %v4277 = vpop.f32.mrf.mxu0
    %v4278 = vadd.f32 0.0, %v4277
    %4279 = vdwg.mxu0
    %v4280 = vand.u32 %v154, 4294901760
    %v4281 = vsub.f32 %v154, %v4280
    %v4282 = vand.u32 %v4281, 4294901760
    %v4283 = vsub.f32 %v4281, %v4282
    %v4284 = vand.u32 %v4283, 4294901760
    %4285 = vmatprep.subr.mxu0 %v4284
    %v4286 = vand.u32 %v153, 4294901760
    %v4287 = vsub.f32 %v153, %v4286
    %v4288 = vand.u32 %v4287, 4294901760
    %v4289 = vsub.f32 %v4287, %v4288
    %v4290 = vand.u32 %v4289, 4294901760
    %4291 = vmatpush1.msra.mxu0 %v4290
    %v4292 = vand.u32 %v146, 4294901760
    %v4293 = vsub.f32 %v146, %v4292
    %v4294 = vand.u32 %v4293, 4294901760
    %v4295 = vsub.f32 %v4293, %v4294
    %v4296 = vand.u32 %v4295, 4294901760
    %4297 = vmatprep.subr.mxu0 %v4296
    %v4298 = vand.u32 %v145, 4294901760
    %v4299 = vsub.f32 %v145, %v4298
    %v4300 = vand.u32 %v4299, 4294901760
    %v4301 = vsub.f32 %v4299, %v4300
    %v4302 = vand.u32 %v4301, 4294901760
    %4303 = vmatpush1.msra.mxu0 %v4302
    %v4304 = vand.u32 %v138, 4294901760
    %v4305 = vsub.f32 %v138, %v4304
    %v4306 = vand.u32 %v4305, 4294901760
    %v4307 = vsub.f32 %v4305, %v4306
    %v4308 = vand.u32 %v4307, 4294901760
    %4309 = vmatprep.subr.mxu0 %v4308
    %v4310 = vand.u32 %v137, 4294901760
    %v4311 = vsub.f32 %v137, %v4310
    %v4312 = vand.u32 %v4311, 4294901760
    %v4313 = vsub.f32 %v4311, %v4312
    %v4314 = vand.u32 %v4313, 4294901760
    %4315 = vmatpush1.msra.mxu0 %v4314
    %v4316 = vand.u32 %v130, 4294901760
    %v4317 = vsub.f32 %v130, %v4316
    %v4318 = vand.u32 %v4317, 4294901760
    %v4319 = vsub.f32 %v4317, %v4318
    %v4320 = vand.u32 %v4319, 4294901760
    %4321 = vmatprep.subr.mxu0 %v4320
    %v4322 = vand.u32 %v129, 4294901760
    %v4323 = vsub.f32 %v129, %v4322
    %v4324 = vand.u32 %v4323, 4294901760
    %v4325 = vsub.f32 %v4323, %v4324
    %v4326 = vand.u32 %v4325, 4294901760
    %4327 = vmatpush1.msra.mxu0 %v4326
    %v4328 = vand.u32 %v122, 4294901760
    %v4329 = vsub.f32 %v122, %v4328
    %v4330 = vand.u32 %v4329, 4294901760
    %v4331 = vsub.f32 %v4329, %v4330
    %v4332 = vand.u32 %v4331, 4294901760
    %4333 = vmatprep.subr.mxu0 %v4332
    %v4334 = vand.u32 %v121, 4294901760
    %v4335 = vsub.f32 %v121, %v4334
    %v4336 = vand.u32 %v4335, 4294901760
    %v4337 = vsub.f32 %v4335, %v4336
    %v4338 = vand.u32 %v4337, 4294901760
    %4339 = vmatpush1.msra.mxu0 %v4338
    %v4340 = vand.u32 %v114, 4294901760
    %v4341 = vsub.f32 %v114, %v4340
    %v4342 = vand.u32 %v4341, 4294901760
    %v4343 = vsub.f32 %v4341, %v4342
    %v4344 = vand.u32 %v4343, 4294901760
    %4345 = vmatprep.subr.mxu0 %v4344
    %v4346 = vand.u32 %v113, 4294901760
    %v4347 = vsub.f32 %v113, %v4346
    %v4348 = vand.u32 %v4347, 4294901760
    %v4349 = vsub.f32 %v4347, %v4348
    %v4350 = vand.u32 %v4349, 4294901760
    %4351 = vmatpush1.msra.mxu0 %v4350
    %v4352 = vand.u32 %v106, 4294901760
    %v4353 = vsub.f32 %v106, %v4352
    %v4354 = vand.u32 %v4353, 4294901760
    %v4355 = vsub.f32 %v4353, %v4354
    %v4356 = vand.u32 %v4355, 4294901760
    %4357 = vmatprep.subr.mxu0 %v4356
    %v4358 = vand.u32 %v105, 4294901760
    %v4359 = vsub.f32 %v105, %v4358
    %v4360 = vand.u32 %v4359, 4294901760
    %v4361 = vsub.f32 %v4359, %v4360
    %v4362 = vand.u32 %v4361, 4294901760
    %4363 = vmatpush1.msra.mxu0 %v4362
    %v4364 = vand.u32 %v98, 4294901760
    %v4365 = vsub.f32 %v98, %v4364
    %v4366 = vand.u32 %v4365, 4294901760
    %v4367 = vsub.f32 %v4365, %v4366
    %v4368 = vand.u32 %v4367, 4294901760
    %4369 = vmatprep.subr.mxu0 %v4368
    %v4370 = vand.u32 %v97, 4294901760
    %v4371 = vsub.f32 %v97, %v4370
    %v4372 = vand.u32 %v4371, 4294901760
    %v4373 = vsub.f32 %v4371, %v4372
    %v4374 = vand.u32 %v4373, 4294901760
    %4375 = vmatpush1.msra.mxu0 %v4374
    %v4376 = vand.u32 %v90, 4294901760
    %v4377 = vsub.f32 %v90, %v4376
    %v4378 = vand.u32 %v4377, 4294901760
    %v4379 = vsub.f32 %v4377, %v4378
    %v4380 = vand.u32 %v4379, 4294901760
    %4381 = vmatprep.subr.mxu0 %v4380
    %v4382 = vand.u32 %v89, 4294901760
    %v4383 = vsub.f32 %v89, %v4382
    %v4384 = vand.u32 %v4383, 4294901760
    %v4385 = vsub.f32 %v4383, %v4384
    %v4386 = vand.u32 %v4385, 4294901760
    %4387 = vmatpush1.msra.mxu0 %v4386
    %v4388 = vand.u32 %v82, 4294901760
    %v4389 = vsub.f32 %v82, %v4388
    %v4390 = vand.u32 %v4389, 4294901760
    %v4391 = vsub.f32 %v4389, %v4390
    %v4392 = vand.u32 %v4391, 4294901760
    %4393 = vmatprep.subr.mxu0 %v4392
    %v4394 = vand.u32 %v81, 4294901760
    %v4395 = vsub.f32 %v81, %v4394
    %v4396 = vand.u32 %v4395, 4294901760
    %v4397 = vsub.f32 %v4395, %v4396
    %v4398 = vand.u32 %v4397, 4294901760
    %4399 = vmatpush1.msra.mxu0 %v4398
    %v4400 = vand.u32 %v74, 4294901760
    %v4401 = vsub.f32 %v74, %v4400
    %v4402 = vand.u32 %v4401, 4294901760
    %v4403 = vsub.f32 %v4401, %v4402
    %v4404 = vand.u32 %v4403, 4294901760
    %4405 = vmatprep.subr.mxu0 %v4404
    %v4406 = vand.u32 %v73, 4294901760
    %v4407 = vsub.f32 %v73, %v4406
    %v4408 = vand.u32 %v4407, 4294901760
    %v4409 = vsub.f32 %v4407, %v4408
    %v4410 = vand.u32 %v4409, 4294901760
    %4411 = vmatpush1.msra.mxu0 %v4410
    %v4412 = vand.u32 %v66, 4294901760
    %v4413 = vsub.f32 %v66, %v4412
    %v4414 = vand.u32 %v4413, 4294901760
    %v4415 = vsub.f32 %v4413, %v4414
    %v4416 = vand.u32 %v4415, 4294901760
    %4417 = vmatprep.subr.mxu0 %v4416
    %v4418 = vand.u32 %v65, 4294901760
    %v4419 = vsub.f32 %v65, %v4418
    %v4420 = vand.u32 %v4419, 4294901760
    %v4421 = vsub.f32 %v4419, %v4420
    %v4422 = vand.u32 %v4421, 4294901760
    %4423 = vmatpush1.msra.mxu0 %v4422
    %v4424 = vand.u32 %v58, 4294901760
    %v4425 = vsub.f32 %v58, %v4424
    %v4426 = vand.u32 %v4425, 4294901760
    %v4427 = vsub.f32 %v4425, %v4426
    %v4428 = vand.u32 %v4427, 4294901760
    %4429 = vmatprep.subr.mxu0 %v4428
    %v4430 = vand.u32 %v57, 4294901760
    %v4431 = vsub.f32 %v57, %v4430
    %v4432 = vand.u32 %v4431, 4294901760
    %v4433 = vsub.f32 %v4431, %v4432
    %v4434 = vand.u32 %v4433, 4294901760
    %4435 = vmatpush1.msra.mxu0 %v4434
    %v4436 = vand.u32 %v50, 4294901760
    %v4437 = vsub.f32 %v50, %v4436
    %v4438 = vand.u32 %v4437, 4294901760
    %v4439 = vsub.f32 %v4437, %v4438
    %v4440 = vand.u32 %v4439, 4294901760
    %4441 = vmatprep.subr.mxu0 %v4440
    %v4442 = vand.u32 %v49, 4294901760
    %v4443 = vsub.f32 %v49, %v4442
    %v4444 = vand.u32 %v4443, 4294901760
    %v4445 = vsub.f32 %v4443, %v4444
    %v4446 = vand.u32 %v4445, 4294901760
    %4447 = vmatpush1.msra.mxu0 %v4446
    %v4448 = vand.u32 %v42, 4294901760
    %v4449 = vsub.f32 %v42, %v4448
    %v4450 = vand.u32 %v4449, 4294901760
    %v4451 = vsub.f32 %v4449, %v4450
    %v4452 = vand.u32 %v4451, 4294901760
    %4453 = vmatprep.subr.mxu0 %v4452
    %v4454 = vand.u32 %v41, 4294901760
    %v4455 = vsub.f32 %v41, %v4454
    %v4456 = vand.u32 %v4455, 4294901760
    %v4457 = vsub.f32 %v4455, %v4456
    %v4458 = vand.u32 %v4457, 4294901760
    %4459 = vmatpush1.msra.mxu0 %v4458
    %v4460 = vand.u32 %v34, 4294901760
    %v4461 = vsub.f32 %v34, %v4460
    %v4462 = vand.u32 %v4461, 4294901760
    %v4463 = vsub.f32 %v4461, %v4462
    %v4464 = vand.u32 %v4463, 4294901760
    %4465 = vmatprep.subr.mxu0 %v4464
    %v4466 = vand.u32 %v33, 4294901760
    %v4467 = vsub.f32 %v33, %v4466
    %v4468 = vand.u32 %v4467, 4294901760
    %v4469 = vsub.f32 %v4467, %v4468
    %v4470 = vand.u32 %v4469, 4294901760
    %4471 = vmatpush1.msra.mxu0 %v4470
    %v4472 = vand.u32 %v282, 4294901760
    %v4473 = vsub.f32 %v282, %v4472
    %v4474 = vand.u32 %v4473, 4294901760
    %v4475 = vsub.f32 %v4473, %v4474
    %v4476 = vand.u32 %v4475, 4294901760
    %4477 = vmatprep.subr.mxu0 %v4476
    %v4478 = vand.u32 %v281, 4294901760
    %v4479 = vsub.f32 %v281, %v4478
    %v4480 = vand.u32 %v4479, 4294901760
    %v4481 = vsub.f32 %v4479, %v4480
    %v4482 = vand.u32 %v4481, 4294901760
    %4483 = vmatpush2.msra.mxu0 %v4482
    %v4484 = vand.u32 %v274, 4294901760
    %v4485 = vsub.f32 %v274, %v4484
    %v4486 = vand.u32 %v4485, 4294901760
    %v4487 = vsub.f32 %v4485, %v4486
    %v4488 = vand.u32 %v4487, 4294901760
    %4489 = vmatprep.subr.mxu0 %v4488
    %v4490 = vand.u32 %v273, 4294901760
    %v4491 = vsub.f32 %v273, %v4490
    %v4492 = vand.u32 %v4491, 4294901760
    %v4493 = vsub.f32 %v4491, %v4492
    %v4494 = vand.u32 %v4493, 4294901760
    %4495 = vmatpush2.msra.mxu0 %v4494
    %v4496 = vand.u32 %v266, 4294901760
    %v4497 = vsub.f32 %v266, %v4496
    %v4498 = vand.u32 %v4497, 4294901760
    %v4499 = vsub.f32 %v4497, %v4498
    %v4500 = vand.u32 %v4499, 4294901760
    %4501 = vmatprep.subr.mxu0 %v4500
    %v4502 = vand.u32 %v265, 4294901760
    %v4503 = vsub.f32 %v265, %v4502
    %v4504 = vand.u32 %v4503, 4294901760
    %v4505 = vsub.f32 %v4503, %v4504
    %v4506 = vand.u32 %v4505, 4294901760
    %4507 = vmatpush2.msra.mxu0 %v4506
    %v4508 = vand.u32 %v258, 4294901760
    %v4509 = vsub.f32 %v258, %v4508
    %v4510 = vand.u32 %v4509, 4294901760
    %v4511 = vsub.f32 %v4509, %v4510
    %v4512 = vand.u32 %v4511, 4294901760
    %4513 = vmatprep.subr.mxu0 %v4512
    %v4514 = vand.u32 %v257, 4294901760
    %v4515 = vsub.f32 %v257, %v4514
    %v4516 = vand.u32 %v4515, 4294901760
    %v4517 = vsub.f32 %v4515, %v4516
    %v4518 = vand.u32 %v4517, 4294901760
    %4519 = vmatpush2.msra.mxu0 %v4518
    %v4520 = vand.u32 %v250, 4294901760
    %v4521 = vsub.f32 %v250, %v4520
    %v4522 = vand.u32 %v4521, 4294901760
    %v4523 = vsub.f32 %v4521, %v4522
    %v4524 = vand.u32 %v4523, 4294901760
    %4525 = vmatprep.subr.mxu0 %v4524
    %v4526 = vand.u32 %v249, 4294901760
    %v4527 = vsub.f32 %v249, %v4526
    %v4528 = vand.u32 %v4527, 4294901760
    %v4529 = vsub.f32 %v4527, %v4528
    %v4530 = vand.u32 %v4529, 4294901760
    %4531 = vmatpush2.msra.mxu0 %v4530
    %v4532 = vand.u32 %v242, 4294901760
    %v4533 = vsub.f32 %v242, %v4532
    %v4534 = vand.u32 %v4533, 4294901760
    %v4535 = vsub.f32 %v4533, %v4534
    %v4536 = vand.u32 %v4535, 4294901760
    %4537 = vmatprep.subr.mxu0 %v4536
    %v4538 = vand.u32 %v241, 4294901760
    %v4539 = vsub.f32 %v241, %v4538
    %v4540 = vand.u32 %v4539, 4294901760
    %v4541 = vsub.f32 %v4539, %v4540
    %v4542 = vand.u32 %v4541, 4294901760
    %4543 = vmatpush2.msra.mxu0 %v4542
    %v4544 = vand.u32 %v234, 4294901760
    %v4545 = vsub.f32 %v234, %v4544
    %v4546 = vand.u32 %v4545, 4294901760
    %v4547 = vsub.f32 %v4545, %v4546
    %v4548 = vand.u32 %v4547, 4294901760
    %4549 = vmatprep.subr.mxu0 %v4548
    %v4550 = vand.u32 %v233, 4294901760
    %v4551 = vsub.f32 %v233, %v4550
    %v4552 = vand.u32 %v4551, 4294901760
    %v4553 = vsub.f32 %v4551, %v4552
    %v4554 = vand.u32 %v4553, 4294901760
    %4555 = vmatpush2.msra.mxu0 %v4554
    %v4556 = vand.u32 %v226, 4294901760
    %v4557 = vsub.f32 %v226, %v4556
    %v4558 = vand.u32 %v4557, 4294901760
    %v4559 = vsub.f32 %v4557, %v4558
    %v4560 = vand.u32 %v4559, 4294901760
    %4561 = vmatprep.subr.mxu0 %v4560
    %v4562 = vand.u32 %v225, 4294901760
    %v4563 = vsub.f32 %v225, %v4562
    %v4564 = vand.u32 %v4563, 4294901760
    %v4565 = vsub.f32 %v4563, %v4564
    %v4566 = vand.u32 %v4565, 4294901760
    %4567 = vmatpush2.msra.mxu0 %v4566
    %v4568 = vand.u32 %v218, 4294901760
    %v4569 = vsub.f32 %v218, %v4568
    %v4570 = vand.u32 %v4569, 4294901760
    %v4571 = vsub.f32 %v4569, %v4570
    %v4572 = vand.u32 %v4571, 4294901760
    %4573 = vmatprep.subr.mxu0 %v4572
    %v4574 = vand.u32 %v217, 4294901760
    %v4575 = vsub.f32 %v217, %v4574
    %v4576 = vand.u32 %v4575, 4294901760
    %v4577 = vsub.f32 %v4575, %v4576
    %v4578 = vand.u32 %v4577, 4294901760
    %4579 = vmatpush2.msra.mxu0 %v4578
    %v4580 = vand.u32 %v210, 4294901760
    %v4581 = vsub.f32 %v210, %v4580
    %v4582 = vand.u32 %v4581, 4294901760
    %v4583 = vsub.f32 %v4581, %v4582
    %v4584 = vand.u32 %v4583, 4294901760
    %4585 = vmatprep.subr.mxu0 %v4584
    %v4586 = vand.u32 %v209, 4294901760
    %v4587 = vsub.f32 %v209, %v4586
    %v4588 = vand.u32 %v4587, 4294901760
    %v4589 = vsub.f32 %v4587, %v4588
    %v4590 = vand.u32 %v4589, 4294901760
    %4591 = vmatpush2.msra.mxu0 %v4590
    %v4592 = vand.u32 %v202, 4294901760
    %v4593 = vsub.f32 %v202, %v4592
    %v4594 = vand.u32 %v4593, 4294901760
    %v4595 = vsub.f32 %v4593, %v4594
    %v4596 = vand.u32 %v4595, 4294901760
    %4597 = vmatprep.subr.mxu0 %v4596
    %v4598 = vand.u32 %v201, 4294901760
    %v4599 = vsub.f32 %v201, %v4598
    %v4600 = vand.u32 %v4599, 4294901760
    %v4601 = vsub.f32 %v4599, %v4600
    %v4602 = vand.u32 %v4601, 4294901760
    %4603 = vmatpush2.msra.mxu0 %v4602
    %v4604 = vand.u32 %v194, 4294901760
    %v4605 = vsub.f32 %v194, %v4604
    %v4606 = vand.u32 %v4605, 4294901760
    %v4607 = vsub.f32 %v4605, %v4606
    %v4608 = vand.u32 %v4607, 4294901760
    %4609 = vmatprep.subr.mxu0 %v4608
    %v4610 = vand.u32 %v193, 4294901760
    %v4611 = vsub.f32 %v193, %v4610
    %v4612 = vand.u32 %v4611, 4294901760
    %v4613 = vsub.f32 %v4611, %v4612
    %v4614 = vand.u32 %v4613, 4294901760
    %4615 = vmatpush2.msra.mxu0 %v4614
    %v4616 = vand.u32 %v186, 4294901760
    %v4617 = vsub.f32 %v186, %v4616
    %v4618 = vand.u32 %v4617, 4294901760
    %v4619 = vsub.f32 %v4617, %v4618
    %v4620 = vand.u32 %v4619, 4294901760
    %4621 = vmatprep.subr.mxu0 %v4620
    %v4622 = vand.u32 %v185, 4294901760
    %v4623 = vsub.f32 %v185, %v4622
    %v4624 = vand.u32 %v4623, 4294901760
    %v4625 = vsub.f32 %v4623, %v4624
    %v4626 = vand.u32 %v4625, 4294901760
    %4627 = vmatpush2.msra.mxu0 %v4626
    %v4628 = vand.u32 %v178, 4294901760
    %v4629 = vsub.f32 %v178, %v4628
    %v4630 = vand.u32 %v4629, 4294901760
    %v4631 = vsub.f32 %v4629, %v4630
    %v4632 = vand.u32 %v4631, 4294901760
    %4633 = vmatprep.subr.mxu0 %v4632
    %v4634 = vand.u32 %v177, 4294901760
    %v4635 = vsub.f32 %v177, %v4634
    %v4636 = vand.u32 %v4635, 4294901760
    %v4637 = vsub.f32 %v4635, %v4636
    %v4638 = vand.u32 %v4637, 4294901760
    %4639 = vmatpush2.msra.mxu0 %v4638
    %v4640 = vand.u32 %v170, 4294901760
    %v4641 = vsub.f32 %v170, %v4640
    %v4642 = vand.u32 %v4641, 4294901760
    %v4643 = vsub.f32 %v4641, %v4642
    %v4644 = vand.u32 %v4643, 4294901760
    %4645 = vmatprep.subr.mxu0 %v4644
    %v4646 = vand.u32 %v169, 4294901760
    %v4647 = vsub.f32 %v169, %v4646
    %v4648 = vand.u32 %v4647, 4294901760
    %v4649 = vsub.f32 %v4647, %v4648
    %v4650 = vand.u32 %v4649, 4294901760
    %4651 = vmatpush2.msra.mxu0 %v4650
    %v4652 = vand.u32 %v162, 4294901760
    %v4653 = vsub.f32 %v162, %v4652
    %v4654 = vand.u32 %v4653, 4294901760
    %v4655 = vsub.f32 %v4653, %v4654
    %v4656 = vand.u32 %v4655, 4294901760
    %4657 = vmatprep.subr.mxu0 %v4656
    %v4658 = vand.u32 %v161, 4294901760
    %v4659 = vsub.f32 %v161, %v4658
    %v4660 = vand.u32 %v4659, 4294901760
    %v4661 = vsub.f32 %v4659, %v4660
    %v4662 = vand.u32 %v4661, 4294901760
    %4663 = vmatpush2.msra.mxu0 %v4662
    %v4664 = vand.u32 %v26, 4294901760
    %4665 = vmatprep.mubr.f32.mxu0 %v4664
    %v4666 = vand.u32 %v25, 4294901760
    %4667 = vmatmul.mubr.f32.gmra.mxu0 %v4666
    %v4668 = vpop.f32.mrf.mxu0
    %v4669 = vadd.f32 %v4276, %v4668
    %v4670 = vpop.f32.mrf.mxu0
    %v4671 = vadd.f32 %v4278, %v4670
    %4672 = vdwg.mxu0
    %v4673 = vand.u32 %v154, 4294901760
    %v4674 = vsub.f32 %v154, %v4673
    %4675 = vmatprep.subr.mxu0 %v4674
    %v4676 = vand.u32 %v153, 4294901760
    %v4677 = vsub.f32 %v153, %v4676
    %4678 = vmatpush1.msra.mxu0 %v4677
    %v4679 = vand.u32 %v146, 4294901760
    %v4680 = vsub.f32 %v146, %v4679
    %4681 = vmatprep.subr.mxu0 %v4680
    %v4682 = vand.u32 %v145, 4294901760
    %v4683 = vsub.f32 %v145, %v4682
    %4684 = vmatpush1.msra.mxu0 %v4683
    %v4685 = vand.u32 %v138, 4294901760
    %v4686 = vsub.f32 %v138, %v4685
    %4687 = vmatprep.subr.mxu0 %v4686
    %v4688 = vand.u32 %v137, 4294901760
    %v4689 = vsub.f32 %v137, %v4688
    %4690 = vmatpush1.msra.mxu0 %v4689
    %v4691 = vand.u32 %v130, 4294901760
    %v4692 = vsub.f32 %v130, %v4691
    %4693 = vmatprep.subr.mxu0 %v4692
    %v4694 = vand.u32 %v129, 4294901760
    %v4695 = vsub.f32 %v129, %v4694
    %4696 = vmatpush1.msra.mxu0 %v4695
    %v4697 = vand.u32 %v122, 4294901760
    %v4698 = vsub.f32 %v122, %v4697
    %4699 = vmatprep.subr.mxu0 %v4698
    %v4700 = vand.u32 %v121, 4294901760
    %v4701 = vsub.f32 %v121, %v4700
    %4702 = vmatpush1.msra.mxu0 %v4701
    %v4703 = vand.u32 %v114, 4294901760
    %v4704 = vsub.f32 %v114, %v4703
    %4705 = vmatprep.subr.mxu0 %v4704
    %v4706 = vand.u32 %v113, 4294901760
    %v4707 = vsub.f32 %v113, %v4706
    %4708 = vmatpush1.msra.mxu0 %v4707
    %v4709 = vand.u32 %v106, 4294901760
    %v4710 = vsub.f32 %v106, %v4709
    %4711 = vmatprep.subr.mxu0 %v4710
    %v4712 = vand.u32 %v105, 4294901760
    %v4713 = vsub.f32 %v105, %v4712
    %4714 = vmatpush1.msra.mxu0 %v4713
    %v4715 = vand.u32 %v98, 4294901760
    %v4716 = vsub.f32 %v98, %v4715
    %4717 = vmatprep.subr.mxu0 %v4716
    %v4718 = vand.u32 %v97, 4294901760
    %v4719 = vsub.f32 %v97, %v4718
    %4720 = vmatpush1.msra.mxu0 %v4719
    %v4721 = vand.u32 %v90, 4294901760
    %v4722 = vsub.f32 %v90, %v4721
    %4723 = vmatprep.subr.mxu0 %v4722
    %v4724 = vand.u32 %v89, 4294901760
    %v4725 = vsub.f32 %v89, %v4724
    %4726 = vmatpush1.msra.mxu0 %v4725
    %v4727 = vand.u32 %v82, 4294901760
    %v4728 = vsub.f32 %v82, %v4727
    %4729 = vmatprep.subr.mxu0 %v4728
    %v4730 = vand.u32 %v81, 4294901760
    %v4731 = vsub.f32 %v81, %v4730
    %4732 = vmatpush1.msra.mxu0 %v4731
    %v4733 = vand.u32 %v74, 4294901760
    %v4734 = vsub.f32 %v74, %v4733
    %4735 = vmatprep.subr.mxu0 %v4734
    %v4736 = vand.u32 %v73, 4294901760
    %v4737 = vsub.f32 %v73, %v4736
    %4738 = vmatpush1.msra.mxu0 %v4737
    %v4739 = vand.u32 %v66, 4294901760
    %v4740 = vsub.f32 %v66, %v4739
    %4741 = vmatprep.subr.mxu0 %v4740
    %v4742 = vand.u32 %v65, 4294901760
    %v4743 = vsub.f32 %v65, %v4742
    %4744 = vmatpush1.msra.mxu0 %v4743
    %v4745 = vand.u32 %v58, 4294901760
    %v4746 = vsub.f32 %v58, %v4745
    %4747 = vmatprep.subr.mxu0 %v4746
    %v4748 = vand.u32 %v57, 4294901760
    %v4749 = vsub.f32 %v57, %v4748
    %4750 = vmatpush1.msra.mxu0 %v4749
    %v4751 = vand.u32 %v50, 4294901760
    %v4752 = vsub.f32 %v50, %v4751
    %4753 = vmatprep.subr.mxu0 %v4752
    %v4754 = vand.u32 %v49, 4294901760
    %v4755 = vsub.f32 %v49, %v4754
    %4756 = vmatpush1.msra.mxu0 %v4755
    %v4757 = vand.u32 %v42, 4294901760
    %v4758 = vsub.f32 %v42, %v4757
    %4759 = vmatprep.subr.mxu0 %v4758
    %v4760 = vand.u32 %v41, 4294901760
    %v4761 = vsub.f32 %v41, %v4760
    %4762 = vmatpush1.msra.mxu0 %v4761
    %v4763 = vand.u32 %v34, 4294901760
    %v4764 = vsub.f32 %v34, %v4763
    %4765 = vmatprep.subr.mxu0 %v4764
    %v4766 = vand.u32 %v33, 4294901760
    %v4767 = vsub.f32 %v33, %v4766
    %4768 = vmatpush1.msra.mxu0 %v4767
    %v4769 = vand.u32 %v282, 4294901760
    %v4770 = vsub.f32 %v282, %v4769
    %4771 = vmatprep.subr.mxu0 %v4770
    %v4772 = vand.u32 %v281, 4294901760
    %v4773 = vsub.f32 %v281, %v4772
    %4774 = vmatpush2.msra.mxu0 %v4773
    %v4775 = vand.u32 %v274, 4294901760
    %v4776 = vsub.f32 %v274, %v4775
    %4777 = vmatprep.subr.mxu0 %v4776
    %v4778 = vand.u32 %v273, 4294901760
    %v4779 = vsub.f32 %v273, %v4778
    %4780 = vmatpush2.msra.mxu0 %v4779
    %v4781 = vand.u32 %v266, 4294901760
    %v4782 = vsub.f32 %v266, %v4781
    %4783 = vmatprep.subr.mxu0 %v4782
    %v4784 = vand.u32 %v265, 4294901760
    %v4785 = vsub.f32 %v265, %v4784
    %4786 = vmatpush2.msra.mxu0 %v4785
    %v4787 = vand.u32 %v258, 4294901760
    %v4788 = vsub.f32 %v258, %v4787
    %4789 = vmatprep.subr.mxu0 %v4788
    %v4790 = vand.u32 %v257, 4294901760
    %v4791 = vsub.f32 %v257, %v4790
    %4792 = vmatpush2.msra.mxu0 %v4791
    %v4793 = vand.u32 %v250, 4294901760
    %v4794 = vsub.f32 %v250, %v4793
    %4795 = vmatprep.subr.mxu0 %v4794
    %v4796 = vand.u32 %v249, 4294901760
    %v4797 = vsub.f32 %v249, %v4796
    %4798 = vmatpush2.msra.mxu0 %v4797
    %v4799 = vand.u32 %v242, 4294901760
    %v4800 = vsub.f32 %v242, %v4799
    %4801 = vmatprep.subr.mxu0 %v4800
    %v4802 = vand.u32 %v241, 4294901760
    %v4803 = vsub.f32 %v241, %v4802
    %4804 = vmatpush2.msra.mxu0 %v4803
    %v4805 = vand.u32 %v234, 4294901760
    %v4806 = vsub.f32 %v234, %v4805
    %4807 = vmatprep.subr.mxu0 %v4806
    %v4808 = vand.u32 %v233, 4294901760
    %v4809 = vsub.f32 %v233, %v4808
    %4810 = vmatpush2.msra.mxu0 %v4809
    %v4811 = vand.u32 %v226, 4294901760
    %v4812 = vsub.f32 %v226, %v4811
    %4813 = vmatprep.subr.mxu0 %v4812
    %v4814 = vand.u32 %v225, 4294901760
    %v4815 = vsub.f32 %v225, %v4814
    %4816 = vmatpush2.msra.mxu0 %v4815
    %v4817 = vand.u32 %v218, 4294901760
    %v4818 = vsub.f32 %v218, %v4817
    %4819 = vmatprep.subr.mxu0 %v4818
    %v4820 = vand.u32 %v217, 4294901760
    %v4821 = vsub.f32 %v217, %v4820
    %4822 = vmatpush2.msra.mxu0 %v4821
    %v4823 = vand.u32 %v210, 4294901760
    %v4824 = vsub.f32 %v210, %v4823
    %4825 = vmatprep.subr.mxu0 %v4824
    %v4826 = vand.u32 %v209, 4294901760
    %v4827 = vsub.f32 %v209, %v4826
    %4828 = vmatpush2.msra.mxu0 %v4827
    %v4829 = vand.u32 %v202, 4294901760
    %v4830 = vsub.f32 %v202, %v4829
    %4831 = vmatprep.subr.mxu0 %v4830
    %v4832 = vand.u32 %v201, 4294901760
    %v4833 = vsub.f32 %v201, %v4832
    %4834 = vmatpush2.msra.mxu0 %v4833
    %v4835 = vand.u32 %v194, 4294901760
    %v4836 = vsub.f32 %v194, %v4835
    %4837 = vmatprep.subr.mxu0 %v4836
    %v4838 = vand.u32 %v193, 4294901760
    %v4839 = vsub.f32 %v193, %v4838
    %4840 = vmatpush2.msra.mxu0 %v4839
    %v4841 = vand.u32 %v186, 4294901760
    %v4842 = vsub.f32 %v186, %v4841
    %4843 = vmatprep.subr.mxu0 %v4842
    %v4844 = vand.u32 %v185, 4294901760
    %v4845 = vsub.f32 %v185, %v4844
    %4846 = vmatpush2.msra.mxu0 %v4845
    %v4847 = vand.u32 %v178, 4294901760
    %v4848 = vsub.f32 %v178, %v4847
    %4849 = vmatprep.subr.mxu0 %v4848
    %v4850 = vand.u32 %v177, 4294901760
    %v4851 = vsub.f32 %v177, %v4850
    %4852 = vmatpush2.msra.mxu0 %v4851
    %v4853 = vand.u32 %v170, 4294901760
    %v4854 = vsub.f32 %v170, %v4853
    %4855 = vmatprep.subr.mxu0 %v4854
    %v4856 = vand.u32 %v169, 4294901760
    %v4857 = vsub.f32 %v169, %v4856
    %4858 = vmatpush2.msra.mxu0 %v4857
    %v4859 = vand.u32 %v162, 4294901760
    %v4860 = vsub.f32 %v162, %v4859
    %4861 = vmatprep.subr.mxu0 %v4860
    %v4862 = vand.u32 %v161, 4294901760
    %v4863 = vsub.f32 %v161, %v4862
    %4864 = vmatpush2.msra.mxu0 %v4863
    %v4865 = vand.u32 %v26, 4294901760
    %v4866 = vsub.f32 %v26, %v4865
    %4867 = vmatprep.mubr.f32.mxu0 %v4866
    %v4868 = vand.u32 %v25, 4294901760
    %v4869 = vsub.f32 %v25, %v4868
    %4870 = vmatmul.mubr.f32.gmra.mxu0 %v4869
    %v4871 = vpop.f32.mrf.mxu0
    %v4872 = vadd.f32 %v4669, %v4871
    %v4873 = vpop.f32.mrf.mxu0
    %v4874 = vadd.f32 %v4671, %v4873
    %4875 = vdwg.mxu0
    %v4876 = vand.u32 %v154, 4294901760
    %4877 = vmatprep.subr.mxu0 %v4876
    %v4878 = vand.u32 %v153, 4294901760
    %4879 = vmatpush1.msra.mxu0 %v4878
    %v4880 = vand.u32 %v146, 4294901760
    %4881 = vmatprep.subr.mxu0 %v4880
    %v4882 = vand.u32 %v145, 4294901760
    %4883 = vmatpush1.msra.mxu0 %v4882
    %v4884 = vand.u32 %v138, 4294901760
    %4885 = vmatprep.subr.mxu0 %v4884
    %v4886 = vand.u32 %v137, 4294901760
    %4887 = vmatpush1.msra.mxu0 %v4886
    %v4888 = vand.u32 %v130, 4294901760
    %4889 = vmatprep.subr.mxu0 %v4888
    %v4890 = vand.u32 %v129, 4294901760
    %4891 = vmatpush1.msra.mxu0 %v4890
    %v4892 = vand.u32 %v122, 4294901760
    %4893 = vmatprep.subr.mxu0 %v4892
    %v4894 = vand.u32 %v121, 4294901760
    %4895 = vmatpush1.msra.mxu0 %v4894
    %v4896 = vand.u32 %v114, 4294901760
    %4897 = vmatprep.subr.mxu0 %v4896
    %v4898 = vand.u32 %v113, 4294901760
    %4899 = vmatpush1.msra.mxu0 %v4898
    %v4900 = vand.u32 %v106, 4294901760
    %4901 = vmatprep.subr.mxu0 %v4900
    %v4902 = vand.u32 %v105, 4294901760
    %4903 = vmatpush1.msra.mxu0 %v4902
    %v4904 = vand.u32 %v98, 4294901760
    %4905 = vmatprep.subr.mxu0 %v4904
    %v4906 = vand.u32 %v97, 4294901760
    %4907 = vmatpush1.msra.mxu0 %v4906
    %v4908 = vand.u32 %v90, 4294901760
    %4909 = vmatprep.subr.mxu0 %v4908
    %v4910 = vand.u32 %v89, 4294901760
    %4911 = vmatpush1.msra.mxu0 %v4910
    %v4912 = vand.u32 %v82, 4294901760
    %4913 = vmatprep.subr.mxu0 %v4912
    %v4914 = vand.u32 %v81, 4294901760
    %4915 = vmatpush1.msra.mxu0 %v4914
    %v4916 = vand.u32 %v74, 4294901760
    %4917 = vmatprep.subr.mxu0 %v4916
    %v4918 = vand.u32 %v73, 4294901760
    %4919 = vmatpush1.msra.mxu0 %v4918
    %v4920 = vand.u32 %v66, 4294901760
    %4921 = vmatprep.subr.mxu0 %v4920
    %v4922 = vand.u32 %v65, 4294901760
    %4923 = vmatpush1.msra.mxu0 %v4922
    %v4924 = vand.u32 %v58, 4294901760
    %4925 = vmatprep.subr.mxu0 %v4924
    %v4926 = vand.u32 %v57, 4294901760
    %4927 = vmatpush1.msra.mxu0 %v4926
    %v4928 = vand.u32 %v50, 4294901760
    %4929 = vmatprep.subr.mxu0 %v4928
    %v4930 = vand.u32 %v49, 4294901760
    %4931 = vmatpush1.msra.mxu0 %v4930
    %v4932 = vand.u32 %v42, 4294901760
    %4933 = vmatprep.subr.mxu0 %v4932
    %v4934 = vand.u32 %v41, 4294901760
    %4935 = vmatpush1.msra.mxu0 %v4934
    %v4936 = vand.u32 %v34, 4294901760
    %4937 = vmatprep.subr.mxu0 %v4936
    %v4938 = vand.u32 %v33, 4294901760
    %4939 = vmatpush1.msra.mxu0 %v4938
    %v4940 = vand.u32 %v282, 4294901760
    %4941 = vmatprep.subr.mxu0 %v4940
    %v4942 = vand.u32 %v281, 4294901760
    %4943 = vmatpush2.msra.mxu0 %v4942
    %v4944 = vand.u32 %v274, 4294901760
    %4945 = vmatprep.subr.mxu0 %v4944
    %v4946 = vand.u32 %v273, 4294901760
    %4947 = vmatpush2.msra.mxu0 %v4946
    %v4948 = vand.u32 %v266, 4294901760
    %4949 = vmatprep.subr.mxu0 %v4948
    %v4950 = vand.u32 %v265, 4294901760
    %4951 = vmatpush2.msra.mxu0 %v4950
    %v4952 = vand.u32 %v258, 4294901760
    %4953 = vmatprep.subr.mxu0 %v4952
    %v4954 = vand.u32 %v257, 4294901760
    %4955 = vmatpush2.msra.mxu0 %v4954
    %v4956 = vand.u32 %v250, 4294901760
    %4957 = vmatprep.subr.mxu0 %v4956
    %v4958 = vand.u32 %v249, 4294901760
    %4959 = vmatpush2.msra.mxu0 %v4958
    %v4960 = vand.u32 %v242, 4294901760
    %4961 = vmatprep.subr.mxu0 %v4960
    %v4962 = vand.u32 %v241, 4294901760
    %4963 = vmatpush2.msra.mxu0 %v4962
    %v4964 = vand.u32 %v234, 4294901760
    %4965 = vmatprep.subr.mxu0 %v4964
    %v4966 = vand.u32 %v233, 4294901760
    %4967 = vmatpush2.msra.mxu0 %v4966
    %v4968 = vand.u32 %v226, 4294901760
    %4969 = vmatprep.subr.mxu0 %v4968
    %v4970 = vand.u32 %v225, 4294901760
    %4971 = vmatpush2.msra.mxu0 %v4970
    %v4972 = vand.u32 %v218, 4294901760
    %4973 = vmatprep.subr.mxu0 %v4972
    %v4974 = vand.u32 %v217, 4294901760
    %4975 = vmatpush2.msra.mxu0 %v4974
    %v4976 = vand.u32 %v210, 4294901760
    %4977 = vmatprep.subr.mxu0 %v4976
    %v4978 = vand.u32 %v209, 4294901760
    %4979 = vmatpush2.msra.mxu0 %v4978
    %v4980 = vand.u32 %v202, 4294901760
    %4981 = vmatprep.subr.mxu0 %v4980
    %v4982 = vand.u32 %v201, 4294901760
    %4983 = vmatpush2.msra.mxu0 %v4982
    %v4984 = vand.u32 %v194, 4294901760
    %4985 = vmatprep.subr.mxu0 %v4984
    %v4986 = vand.u32 %v193, 4294901760
    %4987 = vmatpush2.msra.mxu0 %v4986
    %v4988 = vand.u32 %v186, 4294901760
    %4989 = vmatprep.subr.mxu0 %v4988
    %v4990 = vand.u32 %v185, 4294901760
    %4991 = vmatpush2.msra.mxu0 %v4990
    %v4992 = vand.u32 %v178, 4294901760
    %4993 = vmatprep.subr.mxu0 %v4992
    %v4994 = vand.u32 %v177, 4294901760
    %4995 = vmatpush2.msra.mxu0 %v4994
    %v4996 = vand.u32 %v170, 4294901760
    %4997 = vmatprep.subr.mxu0 %v4996
    %v4998 = vand.u32 %v169, 4294901760
    %4999 = vmatpush2.msra.mxu0 %v4998
    %v5000 = vand.u32 %v162, 4294901760
    %5001 = vmatprep.subr.mxu0 %v5000
    %v5002 = vand.u32 %v161, 4294901760
    %5003 = vmatpush2.msra.mxu0 %v5002
    %v5004 = vand.u32 %v26, 4294901760
    %v5005 = vsub.f32 %v26, %v5004
    %v5006 = vand.u32 %v5005, 4294901760
    %5007 = vmatprep.mubr.f32.mxu0 %v5006
    %v5008 = vand.u32 %v25, 4294901760
    %v5009 = vsub.f32 %v25, %v5008
    %v5010 = vand.u32 %v5009, 4294901760
    %5011 = vmatmul.mubr.f32.gmra.mxu0 %v5010
    %v5012 = vpop.f32.mrf.mxu0
    %v5013 = vadd.f32 %v4872, %v5012
    %v5014 = vpop.f32.mrf.mxu0
    %v5015 = vadd.f32 %v4874, %v5014
    %5016 = vdwg.mxu0
    %v5017 = vand.u32 %v154, 4294901760
    %v5018 = vsub.f32 %v154, %v5017
    %v5019 = vand.u32 %v5018, 4294901760
    %5020 = vmatprep.subr.mxu0 %v5019
    %v5021 = vand.u32 %v153, 4294901760
    %v5022 = vsub.f32 %v153, %v5021
    %v5023 = vand.u32 %v5022, 4294901760
    %5024 = vmatpush1.msra.mxu0 %v5023
    %v5025 = vand.u32 %v146, 4294901760
    %v5026 = vsub.f32 %v146, %v5025
    %v5027 = vand.u32 %v5026, 4294901760
    %5028 = vmatprep.subr.mxu0 %v5027
    %v5029 = vand.u32 %v145, 4294901760
    %v5030 = vsub.f32 %v145, %v5029
    %v5031 = vand.u32 %v5030, 4294901760
    %5032 = vmatpush1.msra.mxu0 %v5031
    %v5033 = vand.u32 %v138, 4294901760
    %v5034 = vsub.f32 %v138, %v5033
    %v5035 = vand.u32 %v5034, 4294901760
    %5036 = vmatprep.subr.mxu0 %v5035
    %v5037 = vand.u32 %v137, 4294901760
    %v5038 = vsub.f32 %v137, %v5037
    %v5039 = vand.u32 %v5038, 4294901760
    %5040 = vmatpush1.msra.mxu0 %v5039
    %v5041 = vand.u32 %v130, 4294901760
    %v5042 = vsub.f32 %v130, %v5041
    %v5043 = vand.u32 %v5042, 4294901760
    %5044 = vmatprep.subr.mxu0 %v5043
    %v5045 = vand.u32 %v129, 4294901760
    %v5046 = vsub.f32 %v129, %v5045
    %v5047 = vand.u32 %v5046, 4294901760
    %5048 = vmatpush1.msra.mxu0 %v5047
    %v5049 = vand.u32 %v122, 4294901760
    %v5050 = vsub.f32 %v122, %v5049
    %v5051 = vand.u32 %v5050, 4294901760
    %5052 = vmatprep.subr.mxu0 %v5051
    %v5053 = vand.u32 %v121, 4294901760
    %v5054 = vsub.f32 %v121, %v5053
    %v5055 = vand.u32 %v5054, 4294901760
    %5056 = vmatpush1.msra.mxu0 %v5055
    %v5057 = vand.u32 %v114, 4294901760
    %v5058 = vsub.f32 %v114, %v5057
    %v5059 = vand.u32 %v5058, 4294901760
    %5060 = vmatprep.subr.mxu0 %v5059
    %v5061 = vand.u32 %v113, 4294901760
    %v5062 = vsub.f32 %v113, %v5061
    %v5063 = vand.u32 %v5062, 4294901760
    %5064 = vmatpush1.msra.mxu0 %v5063
    %v5065 = vand.u32 %v106, 4294901760
    %v5066 = vsub.f32 %v106, %v5065
    %v5067 = vand.u32 %v5066, 4294901760
    %5068 = vmatprep.subr.mxu0 %v5067
    %v5069 = vand.u32 %v105, 4294901760
    %v5070 = vsub.f32 %v105, %v5069
    %v5071 = vand.u32 %v5070, 4294901760
    %5072 = vmatpush1.msra.mxu0 %v5071
    %v5073 = vand.u32 %v98, 4294901760
    %v5074 = vsub.f32 %v98, %v5073
    %v5075 = vand.u32 %v5074, 4294901760
    %5076 = vmatprep.subr.mxu0 %v5075
    %v5077 = vand.u32 %v97, 4294901760
    %v5078 = vsub.f32 %v97, %v5077
    %v5079 = vand.u32 %v5078, 4294901760
    %5080 = vmatpush1.msra.mxu0 %v5079
    %v5081 = vand.u32 %v90, 4294901760
    %v5082 = vsub.f32 %v90, %v5081
    %v5083 = vand.u32 %v5082, 4294901760
    %5084 = vmatprep.subr.mxu0 %v5083
    %v5085 = vand.u32 %v89, 4294901760
    %v5086 = vsub.f32 %v89, %v5085
    %v5087 = vand.u32 %v5086, 4294901760
    %5088 = vmatpush1.msra.mxu0 %v5087
    %v5089 = vand.u32 %v82, 4294901760
    %v5090 = vsub.f32 %v82, %v5089
    %v5091 = vand.u32 %v5090, 4294901760
    %5092 = vmatprep.subr.mxu0 %v5091
    %v5093 = vand.u32 %v81, 4294901760
    %v5094 = vsub.f32 %v81, %v5093
    %v5095 = vand.u32 %v5094, 4294901760
    %5096 = vmatpush1.msra.mxu0 %v5095
    %v5097 = vand.u32 %v74, 4294901760
    %v5098 = vsub.f32 %v74, %v5097
    %v5099 = vand.u32 %v5098, 4294901760
    %5100 = vmatprep.subr.mxu0 %v5099
    %v5101 = vand.u32 %v73, 4294901760
    %v5102 = vsub.f32 %v73, %v5101
    %v5103 = vand.u32 %v5102, 4294901760
    %5104 = vmatpush1.msra.mxu0 %v5103
    %v5105 = vand.u32 %v66, 4294901760
    %v5106 = vsub.f32 %v66, %v5105
    %v5107 = vand.u32 %v5106, 4294901760
    %5108 = vmatprep.subr.mxu0 %v5107
    %v5109 = vand.u32 %v65, 4294901760
    %v5110 = vsub.f32 %v65, %v5109
    %v5111 = vand.u32 %v5110, 4294901760
    %5112 = vmatpush1.msra.mxu0 %v5111
    %v5113 = vand.u32 %v58, 4294901760
    %v5114 = vsub.f32 %v58, %v5113
    %v5115 = vand.u32 %v5114, 4294901760
    %5116 = vmatprep.subr.mxu0 %v5115
    %v5117 = vand.u32 %v57, 4294901760
    %v5118 = vsub.f32 %v57, %v5117
    %v5119 = vand.u32 %v5118, 4294901760
    %5120 = vmatpush1.msra.mxu0 %v5119
    %v5121 = vand.u32 %v50, 4294901760
    %v5122 = vsub.f32 %v50, %v5121
    %v5123 = vand.u32 %v5122, 4294901760
    %5124 = vmatprep.subr.mxu0 %v5123
    %v5125 = vand.u32 %v49, 4294901760
    %v5126 = vsub.f32 %v49, %v5125
    %v5127 = vand.u32 %v5126, 4294901760
    %5128 = vmatpush1.msra.mxu0 %v5127
    %v5129 = vand.u32 %v42, 4294901760
    %v5130 = vsub.f32 %v42, %v5129
    %v5131 = vand.u32 %v5130, 4294901760
    %5132 = vmatprep.subr.mxu0 %v5131
    %v5133 = vand.u32 %v41, 4294901760
    %v5134 = vsub.f32 %v41, %v5133
    %v5135 = vand.u32 %v5134, 4294901760
    %5136 = vmatpush1.msra.mxu0 %v5135
    %v5137 = vand.u32 %v34, 4294901760
    %v5138 = vsub.f32 %v34, %v5137
    %v5139 = vand.u32 %v5138, 4294901760
    %5140 = vmatprep.subr.mxu0 %v5139
    %v5141 = vand.u32 %v33, 4294901760
    %v5142 = vsub.f32 %v33, %v5141
    %v5143 = vand.u32 %v5142, 4294901760
    %5144 = vmatpush1.msra.mxu0 %v5143
    %v5145 = vand.u32 %v282, 4294901760
    %v5146 = vsub.f32 %v282, %v5145
    %v5147 = vand.u32 %v5146, 4294901760
    %5148 = vmatprep.subr.mxu0 %v5147
    %v5149 = vand.u32 %v281, 4294901760
    %v5150 = vsub.f32 %v281, %v5149
    %v5151 = vand.u32 %v5150, 4294901760
    %5152 = vmatpush2.msra.mxu0 %v5151
    %v5153 = vand.u32 %v274, 4294901760
    %v5154 = vsub.f32 %v274, %v5153
    %v5155 = vand.u32 %v5154, 4294901760
    %5156 = vmatprep.subr.mxu0 %v5155
    %v5157 = vand.u32 %v273, 4294901760
    %v5158 = vsub.f32 %v273, %v5157
    %v5159 = vand.u32 %v5158, 4294901760
    %5160 = vmatpush2.msra.mxu0 %v5159
    %v5161 = vand.u32 %v266, 4294901760
    %v5162 = vsub.f32 %v266, %v5161
    %v5163 = vand.u32 %v5162, 4294901760
    %5164 = vmatprep.subr.mxu0 %v5163
    %v5165 = vand.u32 %v265, 4294901760
    %v5166 = vsub.f32 %v265, %v5165
    %v5167 = vand.u32 %v5166, 4294901760
    %5168 = vmatpush2.msra.mxu0 %v5167
    %v5169 = vand.u32 %v258, 4294901760
    %v5170 = vsub.f32 %v258, %v5169
    %v5171 = vand.u32 %v5170, 4294901760
    %5172 = vmatprep.subr.mxu0 %v5171
    %v5173 = vand.u32 %v257, 4294901760
    %v5174 = vsub.f32 %v257, %v5173
    %v5175 = vand.u32 %v5174, 4294901760
    %5176 = vmatpush2.msra.mxu0 %v5175
    %v5177 = vand.u32 %v250, 4294901760
    %v5178 = vsub.f32 %v250, %v5177
    %v5179 = vand.u32 %v5178, 4294901760
    %5180 = vmatprep.subr.mxu0 %v5179
    %v5181 = vand.u32 %v249, 4294901760
    %v5182 = vsub.f32 %v249, %v5181
    %v5183 = vand.u32 %v5182, 4294901760
    %5184 = vmatpush2.msra.mxu0 %v5183
    %v5185 = vand.u32 %v242, 4294901760
    %v5186 = vsub.f32 %v242, %v5185
    %v5187 = vand.u32 %v5186, 4294901760
    %5188 = vmatprep.subr.mxu0 %v5187
    %v5189 = vand.u32 %v241, 4294901760
    %v5190 = vsub.f32 %v241, %v5189
    %v5191 = vand.u32 %v5190, 4294901760
    %5192 = vmatpush2.msra.mxu0 %v5191
    %v5193 = vand.u32 %v234, 4294901760
    %v5194 = vsub.f32 %v234, %v5193
    %v5195 = vand.u32 %v5194, 4294901760
    %5196 = vmatprep.subr.mxu0 %v5195
    %v5197 = vand.u32 %v233, 4294901760
    %v5198 = vsub.f32 %v233, %v5197
    %v5199 = vand.u32 %v5198, 4294901760
    %5200 = vmatpush2.msra.mxu0 %v5199
    %v5201 = vand.u32 %v226, 4294901760
    %v5202 = vsub.f32 %v226, %v5201
    %v5203 = vand.u32 %v5202, 4294901760
    %5204 = vmatprep.subr.mxu0 %v5203
    %v5205 = vand.u32 %v225, 4294901760
    %v5206 = vsub.f32 %v225, %v5205
    %v5207 = vand.u32 %v5206, 4294901760
    %5208 = vmatpush2.msra.mxu0 %v5207
    %v5209 = vand.u32 %v218, 4294901760
    %v5210 = vsub.f32 %v218, %v5209
    %v5211 = vand.u32 %v5210, 4294901760
    %5212 = vmatprep.subr.mxu0 %v5211
    %v5213 = vand.u32 %v217, 4294901760
    %v5214 = vsub.f32 %v217, %v5213
    %v5215 = vand.u32 %v5214, 4294901760
    %5216 = vmatpush2.msra.mxu0 %v5215
    %v5217 = vand.u32 %v210, 4294901760
    %v5218 = vsub.f32 %v210, %v5217
    %v5219 = vand.u32 %v5218, 4294901760
    %5220 = vmatprep.subr.mxu0 %v5219
    %v5221 = vand.u32 %v209, 4294901760
    %v5222 = vsub.f32 %v209, %v5221
    %v5223 = vand.u32 %v5222, 4294901760
    %5224 = vmatpush2.msra.mxu0 %v5223
    %v5225 = vand.u32 %v202, 4294901760
    %v5226 = vsub.f32 %v202, %v5225
    %v5227 = vand.u32 %v5226, 4294901760
    %5228 = vmatprep.subr.mxu0 %v5227
    %v5229 = vand.u32 %v201, 4294901760
    %v5230 = vsub.f32 %v201, %v5229
    %v5231 = vand.u32 %v5230, 4294901760
    %5232 = vmatpush2.msra.mxu0 %v5231
    %v5233 = vand.u32 %v194, 4294901760
    %v5234 = vsub.f32 %v194, %v5233
    %v5235 = vand.u32 %v5234, 4294901760
    %5236 = vmatprep.subr.mxu0 %v5235
    %v5237 = vand.u32 %v193, 4294901760
    %v5238 = vsub.f32 %v193, %v5237
    %v5239 = vand.u32 %v5238, 4294901760
    %5240 = vmatpush2.msra.mxu0 %v5239
    %v5241 = vand.u32 %v186, 4294901760
    %v5242 = vsub.f32 %v186, %v5241
    %v5243 = vand.u32 %v5242, 4294901760
    %5244 = vmatprep.subr.mxu0 %v5243
    %v5245 = vand.u32 %v185, 4294901760
    %v5246 = vsub.f32 %v185, %v5245
    %v5247 = vand.u32 %v5246, 4294901760
    %5248 = vmatpush2.msra.mxu0 %v5247
    %v5249 = vand.u32 %v178, 4294901760
    %v5250 = vsub.f32 %v178, %v5249
    %v5251 = vand.u32 %v5250, 4294901760
    %5252 = vmatprep.subr.mxu0 %v5251
    %v5253 = vand.u32 %v177, 4294901760
    %v5254 = vsub.f32 %v177, %v5253
    %v5255 = vand.u32 %v5254, 4294901760
    %5256 = vmatpush2.msra.mxu0 %v5255
    %v5257 = vand.u32 %v170, 4294901760
    %v5258 = vsub.f32 %v170, %v5257
    %v5259 = vand.u32 %v5258, 4294901760
    %5260 = vmatprep.subr.mxu0 %v5259
    %v5261 = vand.u32 %v169, 4294901760
    %v5262 = vsub.f32 %v169, %v5261
    %v5263 = vand.u32 %v5262, 4294901760
    %5264 = vmatpush2.msra.mxu0 %v5263
    %v5265 = vand.u32 %v162, 4294901760
    %v5266 = vsub.f32 %v162, %v5265
    %v5267 = vand.u32 %v5266, 4294901760
    %5268 = vmatprep.subr.mxu0 %v5267
    %v5269 = vand.u32 %v161, 4294901760
    %v5270 = vsub.f32 %v161, %v5269
    %v5271 = vand.u32 %v5270, 4294901760
    %5272 = vmatpush2.msra.mxu0 %v5271
    %v5273 = vand.u32 %v26, 4294901760
    %5274 = vmatprep.mubr.f32.mxu0 %v5273
    %v5275 = vand.u32 %v25, 4294901760
    %5276 = vmatmul.mubr.f32.gmra.mxu0 %v5275
    %v5277 = vpop.f32.mrf.mxu0
    %v5278 = vadd.f32 %v5013, %v5277
    %v5279 = vpop.f32.mrf.mxu0
    %v5280 = vadd.f32 %v5015, %v5279
    %5281 = vdwg.mxu0
    %v5282 = vand.u32 %v154, 4294901760
    %5283 = vmatprep.subr.mxu0 %v5282
    %v5284 = vand.u32 %v153, 4294901760
    %5285 = vmatpush1.msra.mxu0 %v5284
    %v5286 = vand.u32 %v146, 4294901760
    %5287 = vmatprep.subr.mxu0 %v5286
    %v5288 = vand.u32 %v145, 4294901760
    %5289 = vmatpush1.msra.mxu0 %v5288
    %v5290 = vand.u32 %v138, 4294901760
    %5291 = vmatprep.subr.mxu0 %v5290
    %v5292 = vand.u32 %v137, 4294901760
    %5293 = vmatpush1.msra.mxu0 %v5292
    %v5294 = vand.u32 %v130, 4294901760
    %5295 = vmatprep.subr.mxu0 %v5294
    %v5296 = vand.u32 %v129, 4294901760
    %5297 = vmatpush1.msra.mxu0 %v5296
    %v5298 = vand.u32 %v122, 4294901760
    %5299 = vmatprep.subr.mxu0 %v5298
    %v5300 = vand.u32 %v121, 4294901760
    %5301 = vmatpush1.msra.mxu0 %v5300
    %v5302 = vand.u32 %v114, 4294901760
    %5303 = vmatprep.subr.mxu0 %v5302
    %v5304 = vand.u32 %v113, 4294901760
    %5305 = vmatpush1.msra.mxu0 %v5304
    %v5306 = vand.u32 %v106, 4294901760
    %5307 = vmatprep.subr.mxu0 %v5306
    %v5308 = vand.u32 %v105, 4294901760
    %5309 = vmatpush1.msra.mxu0 %v5308
    %v5310 = vand.u32 %v98, 4294901760
    %5311 = vmatprep.subr.mxu0 %v5310
    %v5312 = vand.u32 %v97, 4294901760
    %5313 = vmatpush1.msra.mxu0 %v5312
    %v5314 = vand.u32 %v90, 4294901760
    %5315 = vmatprep.subr.mxu0 %v5314
    %v5316 = vand.u32 %v89, 4294901760
    %5317 = vmatpush1.msra.mxu0 %v5316
    %v5318 = vand.u32 %v82, 4294901760
    %5319 = vmatprep.subr.mxu0 %v5318
    %v5320 = vand.u32 %v81, 4294901760
    %5321 = vmatpush1.msra.mxu0 %v5320
    %v5322 = vand.u32 %v74, 4294901760
    %5323 = vmatprep.subr.mxu0 %v5322
    %v5324 = vand.u32 %v73, 4294901760
    %5325 = vmatpush1.msra.mxu0 %v5324
    %v5326 = vand.u32 %v66, 4294901760
    %5327 = vmatprep.subr.mxu0 %v5326
    %v5328 = vand.u32 %v65, 4294901760
    %5329 = vmatpush1.msra.mxu0 %v5328
    %v5330 = vand.u32 %v58, 4294901760
    %5331 = vmatprep.subr.mxu0 %v5330
    %v5332 = vand.u32 %v57, 4294901760
    %5333 = vmatpush1.msra.mxu0 %v5332
    %v5334 = vand.u32 %v50, 4294901760
    %5335 = vmatprep.subr.mxu0 %v5334
    %v5336 = vand.u32 %v49, 4294901760
    %5337 = vmatpush1.msra.mxu0 %v5336
    %v5338 = vand.u32 %v42, 4294901760
    %5339 = vmatprep.subr.mxu0 %v5338
    %v5340 = vand.u32 %v41, 4294901760
    %5341 = vmatpush1.msra.mxu0 %v5340
    %v5342 = vand.u32 %v34, 4294901760
    %5343 = vmatprep.subr.mxu0 %v5342
    %v5344 = vand.u32 %v33, 4294901760
    %5345 = vmatpush1.msra.mxu0 %v5344
    %v5346 = vand.u32 %v282, 4294901760
    %5347 = vmatprep.subr.mxu0 %v5346
    %v5348 = vand.u32 %v281, 4294901760
    %5349 = vmatpush2.msra.mxu0 %v5348
    %v5350 = vand.u32 %v274, 4294901760
    %5351 = vmatprep.subr.mxu0 %v5350
    %v5352 = vand.u32 %v273, 4294901760
    %5353 = vmatpush2.msra.mxu0 %v5352
    %v5354 = vand.u32 %v266, 4294901760
    %5355 = vmatprep.subr.mxu0 %v5354
    %v5356 = vand.u32 %v265, 4294901760
    %5357 = vmatpush2.msra.mxu0 %v5356
    %v5358 = vand.u32 %v258, 4294901760
    %5359 = vmatprep.subr.mxu0 %v5358
    %v5360 = vand.u32 %v257, 4294901760
    %5361 = vmatpush2.msra.mxu0 %v5360
    %v5362 = vand.u32 %v250, 4294901760
    %5363 = vmatprep.subr.mxu0 %v5362
    %v5364 = vand.u32 %v249, 4294901760
    %5365 = vmatpush2.msra.mxu0 %v5364
    %v5366 = vand.u32 %v242, 4294901760
    %5367 = vmatprep.subr.mxu0 %v5366
    %v5368 = vand.u32 %v241, 4294901760
    %5369 = vmatpush2.msra.mxu0 %v5368
    %v5370 = vand.u32 %v234, 4294901760
    %5371 = vmatprep.subr.mxu0 %v5370
    %v5372 = vand.u32 %v233, 4294901760
    %5373 = vmatpush2.msra.mxu0 %v5372
    %v5374 = vand.u32 %v226, 4294901760
    %5375 = vmatprep.subr.mxu0 %v5374
    %v5376 = vand.u32 %v225, 4294901760
    %5377 = vmatpush2.msra.mxu0 %v5376
    %v5378 = vand.u32 %v218, 4294901760
    %5379 = vmatprep.subr.mxu0 %v5378
    %v5380 = vand.u32 %v217, 4294901760
    %5381 = vmatpush2.msra.mxu0 %v5380
    %v5382 = vand.u32 %v210, 4294901760
    %5383 = vmatprep.subr.mxu0 %v5382
    %v5384 = vand.u32 %v209, 4294901760
    %5385 = vmatpush2.msra.mxu0 %v5384
    %v5386 = vand.u32 %v202, 4294901760
    %5387 = vmatprep.subr.mxu0 %v5386
    %v5388 = vand.u32 %v201, 4294901760
    %5389 = vmatpush2.msra.mxu0 %v5388
    %v5390 = vand.u32 %v194, 4294901760
    %5391 = vmatprep.subr.mxu0 %v5390
    %v5392 = vand.u32 %v193, 4294901760
    %5393 = vmatpush2.msra.mxu0 %v5392
    %v5394 = vand.u32 %v186, 4294901760
    %5395 = vmatprep.subr.mxu0 %v5394
    %v5396 = vand.u32 %v185, 4294901760
    %5397 = vmatpush2.msra.mxu0 %v5396
    %v5398 = vand.u32 %v178, 4294901760
    %5399 = vmatprep.subr.mxu0 %v5398
    %v5400 = vand.u32 %v177, 4294901760
    %5401 = vmatpush2.msra.mxu0 %v5400
    %v5402 = vand.u32 %v170, 4294901760
    %5403 = vmatprep.subr.mxu0 %v5402
    %v5404 = vand.u32 %v169, 4294901760
    %5405 = vmatpush2.msra.mxu0 %v5404
    %v5406 = vand.u32 %v162, 4294901760
    %5407 = vmatprep.subr.mxu0 %v5406
    %v5408 = vand.u32 %v161, 4294901760
    %5409 = vmatpush2.msra.mxu0 %v5408
    %v5410 = vand.u32 %v26, 4294901760
    %5411 = vmatprep.mubr.f32.mxu0 %v5410
    %v5412 = vand.u32 %v25, 4294901760
    %5413 = vmatmul.mubr.f32.gmra.mxu0 %v5412
    %v5414 = vpop.f32.mrf.mxu0
    %v5415 = vadd.f32 %v5278, %v5414
    %v5416 = vpop.f32.mrf.mxu0
    %v5417 = vadd.f32 %v5280, %v5416
    %5418 = vdwg.mxu0
    %5419 = vst [vmem:[%s2] sm:$0xff] %v1563
    %5420 = vst [vmem:[%s2 + $0x8] sm:$0xff] %v1565
    %5421 = vst [vmem:[%s2 + $0x10] sm:$0xff] %v2847
    %5422 = vst [vmem:[%s2 + $0x18] sm:$0xff] %v2849
    %5423 = vst [vmem:[%s2 + $0x20] sm:$0xff] %v4131
    %5424 = vst [vmem:[%s2 + $0x28] sm:$0xff] %v4133
    %5425 = vst [vmem:[%s2 + $0x30] sm:$0xff] %v5415
    %5426 = vst [vmem:[%s2 + $0x38] sm:$0xff] %v5417
    // Predicated region
    $region14: #{_bicubic_upsample_impl.1} parent=1 // pred_check
      _
    $region15: #{_bicubic_upsample_impl.1} parent=1 // pred_check_branch
      %5428 = sbr.rel (0) target = $region17
    $region16: #{_bicubic_upsample_impl.1} parent=1 // pred_region
      _
    $region17: #{_bicubic_upsample_impl.1} parent=1 // pred_fallthru
      _
    // Predicated region
    $region18: #{_bicubic_upsample_impl.1} parent=1 // pred_check
      _
    $region19: #{_bicubic_upsample_impl.1} parent=1 // pred_check_branch
      %5430 = sbr.rel (0) target = $region21
    $region20: #{_bicubic_upsample_impl.1} parent=1 // pred_region
      _
    $region21: #{_bicubic_upsample_impl.1} parent=1 // pred_fallthru
      _
    %5431 = vsyncpa [#allocation3], 1

</llo_original>
